<compile_context>
chip_gen: v7x
topology: tpu7x:2x2x1
jax: 0.10.0
libtpu: 0.0.40
codegen_flags: <defaults>
</compile_context>

<pallas_src>
import jax
import jax.numpy as jnp
from jax.experimental import pallas as pl
from jax.experimental.pallas import tpu as pltpu

M = 1024        # self.m (ka in_features)
HIDDEN = 1024   # ka.out_features
EPS = 1e-6


def mlpm_kernel(x_ref, wka_ref, pvec_ref, bp_ref, o_ref):
    # ---- ka: Linear(1024 -> 1024) on the MXU (bf16 x bf16 -> f32 accumulate). ----
    x = x_ref[...].astype(jnp.bfloat16)                                    # (tb, M)
    h = jnp.dot(x, wka_ref[...], preferred_element_type=jnp.float32)       # (tb, H) f32
    h = jnp.maximum(h + pvec_ref[0:1, :], 0.0)                             # +b_ka, ReLU
    # Dropout(0.5) is identity in eval mode.
    # TODO(synk): training-mode dropout (pltpu.prng_* mask + 1/keep_prob scale) not emitted.

    # ---- LayerNorm statistics, two-pass / centered (more accurate than sum-of-squares).
    mean = jnp.sum(h, axis=-1, keepdims=True) * (1.0 / HIDDEN)             # (tb, 1)
    hc = h - mean                                                          # (tb, H)
    # torch.std: unbiased (ddof=1); eps is added to std, not to variance.
    var = jnp.sum(hc * hc, axis=-1, keepdims=True) * (1.0 / (HIDDEN - 1))  # (tb, 1)
    inv = 1.0 / (jnp.sqrt(var) + EPS)                                      # exact; tiny op

    # ---- kd: Linear(H -> 1) with gamma/beta folded in (eval-mode algebra):
    #   logit = sum_j wkd_j*(gamma_j*(h_j-mean)*inv + beta_j) + bkd
    #         = inv * sum_j wg_j*(h_j - mean) + b'          with  wg = wkd*gamma.
    # Lane-dense VPU multiply + XLU lane reduce; no degenerate (H, 1) MXU pass.
    hw = jnp.sum(hc * pvec_ref[1:2, :], axis=-1, keepdims=True)            # (tb, 1)
    logit = hw * inv + bp_ref[0]                                           # SMEM scalar b'

    o_ref[...] = jax.nn.sigmoid(logit)                                     # (tb, 1)


def _choose_tiling(batch, tb=None):
    """Pick rows-per-grid-step and the (possibly padded) batch size.

    - batch <= 128: one step with the full array (always a legal block).
    - otherwise: 128-aligned tiles capped at 512 rows (the ~10 MiB footprint at tb=512
      fits every generation once vmem_limit_bytes is 32 MiB), with >= 2 grid steps for
      mid-size batches so dimension_semantics=("parallel",) engages both v7x TensorCores.
    - batch not divisible by the tile: rows are padded in the wrapper (and sliced off),
      never a single giant block.
    """
    if tb is None:
        if batch <= 128:
            return batch, batch
        tb = min(512, max(128, ((batch // 2) // 128) * 128))
    padded = ((batch + tb - 1) // tb) * tb
    return tb, padded


def _const_spec(shape):
    # Grid-invariant parameter block: constant index_map, fetched once, single-buffered.
    return pl.BlockSpec(shape, lambda i: (0, 0), pipeline_mode=pl.Buffered(1))


def prepare_params(params):
    """One-time parameter prep: bf16 MXU weight + eval-mode gamma/beta/kd fold."""
    wka, bka, gamma, beta, wkd, bkd = params
    wg = (wkd * gamma).astype(jnp.float32)                                 # (H,)
    pvec = jnp.stack([bka.astype(jnp.float32), wg])                        # (2, H): [b_ka; wg]
    bp = (jnp.dot(wkd, beta) + bkd).reshape(1).astype(jnp.float32)         # (1,)  b' = wkd.beta + bkd
    return wka.astype(jnp.bfloat16), pvec, bp


def mlpm_forward(x, prepared, *, tb=None):
    """x: (B, 1024) float32 or bfloat16. Returns (1, B) float32 (== torch `y.view(1, -1)`)."""
    B = x.shape[0]
    tb, Bp = _choose_tiling(B, tb)
    if Bp != B:
        x = jnp.pad(x, ((0, Bp - B), (0, 0)))
    wka16, pvec, bp = prepared

    y = pl.pallas_call(
        mlpm_kernel,
        out_shape=jax.ShapeDtypeStruct((Bp, 1), jnp.float32),
        grid_spec=pltpu.PrefetchScalarGridSpec(
            num_scalar_prefetch=0,
            grid=(Bp // tb,),
            in_specs=[
                pl.BlockSpec((tb, M), lambda i: (i, 0)),           # x tile (double-buffered)
                _const_spec((M, HIDDEN)),                          # W_ka (bf16), single-buffered
                _const_spec((2, HIDDEN)),                          # [b_ka ; wg], single-buffered
                pl.BlockSpec(memory_space=pltpu.MemorySpace.SMEM), # b' scalar in SMEM
            ],
            out_specs=pl.BlockSpec((tb, 1), lambda i: (i, 0)),     # tiny per-row logit column
        ),
        compiler_params=pltpu.CompilerParams(
            dimension_semantics=("parallel",),
            vmem_limit_bytes=32 * 1024 * 1024),
    )(x, wka16, pvec, bp)

    # (Bp,1) -> drop padded rows -> (1, B).  Trivial relayout outside the kernel.
    return y[:B].reshape(1, B)


def init_params(key):
    """Deterministic synthetic parameters with MLPM.__init__ shapes."""
    k1, k2, k3, k4, k5, k6 = jax.random.split(key, 6)
    # ka.weight is (out=1024, in=1024) in torch; stored here transposed as (in, out).
    wka = jax.random.normal(k1, (M, HIDDEN), jnp.float32) * (1.0 / jnp.sqrt(M))
    bka = jax.random.normal(k2, (HIDDEN,), jnp.float32) * 0.01
    # LayerNorm params init to ones/zeros in the module; perturb so the eval-mode fold is exercised.
    gamma = 1.0 + 0.1 * jax.random.normal(k3, (HIDDEN,), jnp.float32)
    beta = 0.1 * jax.random.normal(k4, (HIDDEN,), jnp.float32)
    # kd.weight is (1, 1024) in torch; stored flat as (HIDDEN,).
    wkd = jax.random.normal(k5, (HIDDEN,), jnp.float32) * (1.0 / jnp.sqrt(HIDDEN))
    bkd = jax.random.normal(k6, (1,), jnp.float32) * 0.01
    return wka, bka, gamma, beta, wkd, bkd


if __name__ == "__main__":
    key = jax.random.PRNGKey(0)
    kp, kx1, kx2 = jax.random.split(key, 3)
    params = init_params(kp)
    prepared = prepare_params(params)

    wka, bka, gamma, beta, wkd, bkd = params

    def torch_ref(x, bf16_matmul=False):
        # Torch-faithful math: ReLU, hand-rolled LayerNorm (unbiased std, eps on std),
        # kd + sigmoid, y.view(1, -1).
        if bf16_matmul:
            h = jnp.dot(x.astype(jnp.bfloat16), wka.astype(jnp.bfloat16),
                        preferred_element_type=jnp.float32) + bka
        else:
            h = x @ wka + bka
        h = jnp.maximum(h, 0.0)
        mean = h.mean(-1, keepdims=True)
        std = jnp.sqrt(jnp.sum((h - mean) ** 2, -1, keepdims=True) / (HIDDEN - 1))
        hn = gamma * (h - mean) / (std + EPS) + beta
        return jax.nn.sigmoid(hn @ wkd + bkd).reshape(1, -1)

    # --- Small batch: single grid step. ---
    B1 = 8
    x1 = jax.random.normal(kx1, (B1, M), jnp.float32)
    y1 = jax.block_until_ready(mlpm_forward(x1, prepared))
    assert y1.shape == (1, B1)
    assert jnp.allclose(y1, torch_ref(x1, bf16_matmul=True), atol=1e-2, rtol=0.0), \
        float(jnp.max(jnp.abs(y1 - torch_ref(x1, bf16_matmul=True))))
    assert jnp.allclose(y1, torch_ref(x1), atol=3e-2, rtol=0.0), \
        float(jnp.max(jnp.abs(y1 - torch_ref(x1))))

    # --- Mid batch: exercises the multi-step grid (tb=128, 3 steps) + row-padding path. ---
    B2 = 260
    x2 = jax.random.normal(kx2, (B2, M), jnp.float32)
    y2 = jax.block_until_ready(mlpm_forward(x2, prepared))
    assert y2.shape == (1, B2)
    assert jnp.allclose(y2, torch_ref(x2, bf16_matmul=True), atol=1e-2, rtol=0.0), \
        float(jnp.max(jnp.abs(y2 - torch_ref(x2, bf16_matmul=True))))
    assert jnp.allclose(y2, torch_ref(x2), atol=3e-2, rtol=0.0), \
        float(jnp.max(jnp.abs(y2 - torch_ref(x2))))

    print("KERNEL_OK")
</pallas_src>

<mosaic_0001>
module attributes {stable_mosaic.version = 11 : i64} {
  func.func @mlpm_kernel(%arg0: i32, %arg1: memref<8x1024xf32, #tpu.memory_space<vmem>>, %arg2: memref<1024x1024xbf16, #tpu.memory_space<vmem>>, %arg3: memref<2x1024xf32, #tpu.memory_space<vmem>>, %arg4: memref<1xf32, #tpu.memory_space<smem>>, %arg5: memref<8x1xf32, #tpu.memory_space<vmem>>) attributes {dimension_semantics = [#tpu.dimension_semantics<parallel>], iteration_bounds = array<i64: 1>, scalar_prefetch = 0 : i64, scratch_operands = 0 : i64, tpu.core_type = #tpu.core_type<tc>, window_params = [{transform_indices = @transform_0, window_bounds = array<i64: 8, 1024>}, {pipeline_mode = #tpu.pipeline_mode<synchronous>, transform_indices = @transform_1, window_bounds = array<i64: 1024, 1024>}, {pipeline_mode = #tpu.pipeline_mode<synchronous>, transform_indices = @transform_2, window_bounds = array<i64: 2, 1024>}, {transform_indices = @transform_3, window_bounds = array<i64: 1>}, {transform_indices = @transform_4, window_bounds = array<i64: 8, 1>}]} {
    %c0 = arith.constant 0 : index
    %c0_0 = arith.constant 0 : index
    %0 = vector.load %arg1[%c0, %c0_0] : memref<8x1024xf32, #tpu.memory_space<vmem>>, vector<8x1024xf32>
    %1 = arith.truncf %0 : vector<8x1024xf32> to vector<8x1024xbf16>
    %c0_1 = arith.constant 0 : index
    %c0_2 = arith.constant 0 : index
    %2 = vector.load %arg2[%c0_1, %c0_2] : memref<1024x1024xbf16, #tpu.memory_space<vmem>>, vector<1024x1024xbf16>
    %cst = arith.constant dense<0.000000e+00> : vector<8x1024xf32>
    %3 = tpu.matmul %1, %2, %cst {dimension_numbers = #tpu.dot_dimension_numbers<[1], [0], [0], [1], [0, 0, 1, 1], [], []>} : vector<8x1024xbf16>, vector<1024x1024xbf16>, vector<8x1024xf32> -> vector<8x1024xf32>
    %c0_3 = arith.constant 0 : index
    %c0_4 = arith.constant 0 : index
    %4 = vector.load %arg3[%c0_3, %c0_4] : memref<2x1024xf32, #tpu.memory_space<vmem>>, vector<1x1024xf32>
    %5 = vector.broadcast %4 : vector<1x1024xf32> to vector<8x1024xf32>
    %6 = arith.addf %3, %5 : vector<8x1024xf32>
    %cst_5 = arith.constant 0.000000e+00 : f32
    %7 = vector.broadcast %cst_5 : f32 to vector<8x1024xf32>
    %8 = arith.maximumf %6, %7 : vector<8x1024xf32>
    %cst_6 = arith.constant dense<0.000000e+00> : vector<8xf32>
    %9 = vector.multi_reduction <add>, %8, %cst_6 [1] : vector<8x1024xf32> to vector<8xf32>
    %10 = vector.shape_cast %9 : vector<8xf32> to vector<8x1xf32>
    %cst_7 = arith.constant 9.765625E-4 : f32
    %11 = vector.broadcast %cst_7 : f32 to vector<8x1xf32>
    %12 = arith.mulf %10, %11 : vector<8x1xf32>
    %13 = vector.broadcast %12 : vector<8x1xf32> to vector<8x1024xf32>
    %14 = arith.subf %8, %13 : vector<8x1024xf32>
    %15 = arith.mulf %14, %14 : vector<8x1024xf32>
    %cst_8 = arith.constant dense<0.000000e+00> : vector<8xf32>
    %16 = vector.multi_reduction <add>, %15, %cst_8 [1] : vector<8x1024xf32> to vector<8xf32>
    %17 = vector.shape_cast %16 : vector<8xf32> to vector<8x1xf32>
    %cst_9 = arith.constant 9.77517105E-4 : f32
    %18 = vector.broadcast %cst_9 : f32 to vector<8x1xf32>
    %19 = arith.mulf %17, %18 : vector<8x1xf32>
    %20 = math.sqrt %19 : vector<8x1xf32>
    %cst_10 = arith.constant 9.99999997E-7 : f32
    %21 = vector.broadcast %cst_10 : f32 to vector<8x1xf32>
    %22 = arith.addf %20, %21 : vector<8x1xf32>
    %cst_11 = arith.constant 1.000000e+00 : f32
    %23 = vector.broadcast %cst_11 : f32 to vector<8x1xf32>
    %24 = arith.divf %23, %22 : vector<8x1xf32>
    %c1 = arith.constant 1 : index
    %c0_12 = arith.constant 0 : index
    %25 = vector.load %arg3[%c1, %c0_12] : memref<2x1024xf32, #tpu.memory_space<vmem>>, vector<1x1024xf32>
    %26 = vector.broadcast %25 : vector<1x1024xf32> to vector<8x1024xf32>
    %27 = arith.mulf %14, %26 : vector<8x1024xf32>
    %cst_13 = arith.constant dense<0.000000e+00> : vector<8xf32>
    %28 = vector.multi_reduction <add>, %27, %cst_13 [1] : vector<8x1024xf32> to vector<8xf32>
    %29 = vector.shape_cast %28 : vector<8xf32> to vector<8x1xf32>
    %30 = arith.mulf %29, %24 : vector<8x1xf32>
    %c0_14 = arith.constant 0 : index
    %31 = memref.load %arg4[%c0_14] : memref<1xf32, #tpu.memory_space<smem>>
    %32 = vector.broadcast %31 : f32 to vector<8x1xf32>
    %33 = arith.addf %30, %32 : vector<8x1xf32>
    %34 = arith.negf %33 : vector<8x1xf32>
    %35 = math.exp %34 : vector<8x1xf32>
    %cst_15 = arith.constant 1.000000e+00 : f32
    %36 = vector.broadcast %cst_15 : f32 to vector<8x1xf32>
    %37 = arith.addf %36, %35 : vector<8x1xf32>
    %38 = arith.divf %36, %37 : vector<8x1xf32>
    %c0_16 = arith.constant 0 : index
    %c0_17 = arith.constant 0 : index
    %39 = vector.load %arg5[%c0_16, %c0_17] : memref<8x1xf32, #tpu.memory_space<vmem>>, vector<8x1xf32>
    tpu.vector_store %arg5[%c0_16, %c0_17], %38 {strides = array<i32>} : memref<8x1xf32, #tpu.memory_space<vmem>>, vector<8x1xf32>,
    return
  }
  func.func @transform_0(%arg0: i32) -> (i32, i32) {
    %c0_i32 = arith.constant 0 : i32
    %c0_i32_0 = arith.constant 0 : i32
    return %arg0, %c0_i32 : i32, i32
  }
  func.func @transform_1(%arg0: i32) -> (i32, i32) {
    %c0_i32 = arith.constant 0 : i32
    %c0_i32_0 = arith.constant 0 : i32
    %c0_i32_1 = arith.constant 0 : i32
    return %c0_i32, %c0_i32_0 : i32, i32
  }
  func.func @transform_2(%arg0: i32) -> (i32, i32) {
    %c0_i32 = arith.constant 0 : i32
    %c0_i32_0 = arith.constant 0 : i32
    %c0_i32_1 = arith.constant 0 : i32
    return %c0_i32, %c0_i32_0 : i32, i32
  }
  func.func @transform_3(%arg0: i32) -> i32 {
    %c0_i32 = arith.constant 0 : i32
    %c0_i32_0 = arith.constant 0 : i32
    return %c0_i32 : i32
  }
  func.func @transform_4(%arg0: i32) -> (i32, i32) {
    %c0_i32 = arith.constant 0 : i32
    %c0_i32_0 = arith.constant 0 : i32
    return %arg0, %c0_i32 : i32, i32
  }
}

</mosaic_0001>

<llo_original>
// kernel: tpu_custom_call.1
$region0: #{tpu_custom_call.1}
  #allocation0 [shape = 'u32[]', space=smem, size = 0x4, offset = 0x4, fixed_abs, tag = 'smem constant byte address 0x4 - core index']
  #allocation1 [shape = 'u32[144,128]{1,0:T(1,128)}', space=vmem, size = 0x12000, scoped, tag = 'internal scratch']
  #allocation2 [shape = 'f32[1]{0:T(128)S(6)}', space=smem, size = 0x200, scoped, tag = 'scoped memory for tpu_custom_call.1']
  %s0 = inlined_call_operand.hbm [shape: f32[8,1024], index: 0, kind: input, shape index: {}]
  %s1 = inlined_call_operand.hbm [shape: bf16[1024,1024], index: 1, kind: input, shape index: {}]
  %s2 = inlined_call_operand.hbm [shape: f32[2,1024], index: 2, kind: input, shape index: {}]
  %s3 = inlined_call_operand.<no memory space> [shape: f32[1], index: 3, kind: input, shape index: {}]
  %s4 = inlined_call_operand.vmem [shape: f32[8,1], index: 4, kind: output, shape index: {}]
  %s5 = sld [smem:[#allocation0]]
  $region38: #{tpu_custom_call.1} parent=0
    _
  %s7 = ssub.s32 1, %s5
  %s8 = scalar_select 0, %s7, %s5
  %9 = sst [smem:[#allocation2]] %s3
  $region1: #{tpu_custom_call.1} parent=0
    #allocation3 [shape = 'u8[32768]{0}', space=vmem, size = 0x8000, scoped, tag = 'input window, operand 0, single buffered']
    #allocation4 [shape = 's32[1]{0}', space=sflag, size = 0x4, scoped, tag = 'scoped memory for tpu_custom_call.1']
    #allocation5 [shape = 'u8[2097152]{0}', space=vmem, size = 0x200000, scoped, tag = 'input window, operand 1, single buffered']
    #allocation6 [shape = 's32[1]{0}', space=sflag, size = 0x4, scoped, tag = 'scoped memory for tpu_custom_call.1']
    #allocation7 [shape = 'u8[8192]{0}', space=vmem, size = 0x2000, scoped, tag = 'input window, operand 2, single buffered']
    %10 = vsyncpa [#allocation4], 0
    %11 = vsyncpa [#allocation6], 0
    // Predicated region
    $region2: #{tpu_custom_call.1} parent=1 // pred_check
      _
    $region3: #{tpu_custom_call.1} parent=1 // pred_check_branch
      %13 = sbr.rel (0) target = $region5
    $region4: #{tpu_custom_call.1} parent=1 // pred_region
      %s15 = ssub.s32 1024, 1024
      %16 = vsyncadd [#allocation4], %s15
      %s18 = sshll.u32 [#allocation3], 4
      %s19 = int_to_ptr.vmem [resolvable:$true] %s18
      %21 = dma.hbm_to_vmem [thread:$0]  %s0, 1024, %s19, [#allocation4]
    $region5: #{tpu_custom_call.1} parent=1 // pred_fallthru
      _
    // Predicated region
    $region6: #{tpu_custom_call.1} parent=1 // pred_check
      _
    $region7: #{tpu_custom_call.1} parent=1 // pred_check_branch
      %23 = sbr.rel (0) target = $region9
    $region8: #{tpu_custom_call.1} parent=1 // pred_region
      %s25 = ssub.s32 65536, 65536
      %26 = vsyncadd [#allocation6], %s25
      %s27 = sshll.u32 [#allocation5], 4
      %s28 = int_to_ptr.vmem [resolvable:$true] %s27
      %33 = dma.hbm_to_vmem [thread:$0]  %s1, 65536, %s28, [#allocation6], 512, 512, 32
    $region9: #{tpu_custom_call.1} parent=1 // pred_fallthru
      _
    // Predicated region
    $region10: #{tpu_custom_call.1} parent=1 // pred_check
      _
    $region11: #{tpu_custom_call.1} parent=1 // pred_check_branch
      %35 = sbr.rel (0) target = $region13
    $region12: #{tpu_custom_call.1} parent=1 // pred_region
      %s37 = ssub.s32 256, 256
      %38 = vsyncadd [#allocation6], %s37
      %s40 = sshll.u32 [#allocation7], 4
      %s41 = int_to_ptr.vmem [resolvable:$true] %s40
      %43 = dma.hbm_to_vmem [thread:$0]  %s2, 256, %s41, [#allocation6]
    $region13: #{tpu_custom_call.1} parent=1 // pred_fallthru
      _
    // Predicated region
    $region14: #{tpu_custom_call.1} parent=1 // pred_check
      _
    $region15: #{tpu_custom_call.1} parent=1 // pred_check_branch
      %45 = sbr.rel (0) target = $region17
    $region16: #{tpu_custom_call.1} parent=1 // pred_region
      _
    $region17: #{tpu_custom_call.1} parent=1 // pred_fallthru
      _
    // Predicated region
    $region18: #{tpu_custom_call.1} parent=1 // pred_check
      _
    $region19: #{tpu_custom_call.1} parent=1 // pred_check_branch
      %47 = sbr.rel (0) target = $region21
    $region20: #{tpu_custom_call.1} parent=1 // pred_region
      %48 = dma.done [#allocation4], 1024
    $region21: #{tpu_custom_call.1} parent=1 // pred_fallthru
      _
    // Predicated region
    $region22: #{tpu_custom_call.1} parent=1 // pred_check
      _
    $region23: #{tpu_custom_call.1} parent=1 // pred_check_branch
      %50 = sbr.rel (0) target = $region25
    $region24: #{tpu_custom_call.1} parent=1 // pred_region
      %51 = dma.done [#allocation6], 65536
    $region25: #{tpu_custom_call.1} parent=1 // pred_fallthru
      _
    // Predicated region
    $region26: #{tpu_custom_call.1} parent=1 // pred_check
      _
    $region27: #{tpu_custom_call.1} parent=1 // pred_check_branch
      %53 = sbr.rel (0) target = $region29
    $region28: #{tpu_custom_call.1} parent=1 // pred_region
      %54 = dma.done [#allocation6], 256
    $region29: #{tpu_custom_call.1} parent=1 // pred_fallthru
      _
    %v55 = vld [vmem:[#allocation3] sm:$0xff]
    %v56 = vld [vmem:[#allocation3 + $0x8] sm:$0xff]
    %v57 = vld [vmem:[#allocation3 + $0x10] sm:$0xff]
    %v58 = vld [vmem:[#allocation3 + $0x18] sm:$0xff]
    %v59 = vld [vmem:[#allocation3 + $0x20] sm:$0xff]
    %v60 = vld [vmem:[#allocation3 + $0x28] sm:$0xff]
    %v61 = vld [vmem:[#allocation3 + $0x30] sm:$0xff]
    %v62 = vld [vmem:[#allocation3 + $0x38] sm:$0xff]
    %v63 = vpack.c.bf16 %v55, %v55
    %v64 = vpack.c.bf16 %v56, %v56
    %v65 = vpack.c.bf16 %v57, %v57
    %v66 = vpack.c.bf16 %v58, %v58
    %v67 = vpack.c.bf16 %v59, %v59
    %v68 = vpack.c.bf16 %v60, %v60
    %v69 = vpack.c.bf16 %v61, %v61
    %v70 = vpack.c.bf16 %v62, %v62
    %v71 = vld [vmem:[#allocation5] sm:$0xff]
    %v72 = vld [vmem:[#allocation5 + $0x8] sm:$0xff]
    %v73 = vld [vmem:[#allocation5 + $0x10] sm:$0xff]
    %v74 = vld [vmem:[#allocation5 + $0x18] sm:$0xff]
    %v75 = vld [vmem:[#allocation5 + $0x20] sm:$0xff]
    %v76 = vld [vmem:[#allocation5 + $0x28] sm:$0xff]
    %v77 = vld [vmem:[#allocation5 + $0x30] sm:$0xff]
    %v78 = vld [vmem:[#allocation5 + $0x38] sm:$0xff]
    %v79 = vld [vmem:[#allocation5 + $0x40] sm:$0xff]
    %v80 = vld [vmem:[#allocation5 + $0x48] sm:$0xff]
    %v81 = vld [vmem:[#allocation5 + $0x50] sm:$0xff]
    %v82 = vld [vmem:[#allocation5 + $0x58] sm:$0xff]
    %v83 = vld [vmem:[#allocation5 + $0x60] sm:$0xff]
    %v84 = vld [vmem:[#allocation5 + $0x68] sm:$0xff]
    %v85 = vld [vmem:[#allocation5 + $0x70] sm:$0xff]
    %v86 = vld [vmem:[#allocation5 + $0x78] sm:$0xff]
    %v87 = vld [vmem:[#allocation5 + $0x80] sm:$0xff]
    %v88 = vld [vmem:[#allocation5 + $0x88] sm:$0xff]
    %v89 = vld [vmem:[#allocation5 + $0x90] sm:$0xff]
    %v90 = vld [vmem:[#allocation5 + $0x98] sm:$0xff]
    %v91 = vld [vmem:[#allocation5 + $0xa0] sm:$0xff]
    %v92 = vld [vmem:[#allocation5 + $0xa8] sm:$0xff]
    %v93 = vld [vmem:[#allocation5 + $0xb0] sm:$0xff]
    %v94 = vld [vmem:[#allocation5 + $0xb8] sm:$0xff]
    %v95 = vld [vmem:[#allocation5 + $0xc0] sm:$0xff]
    %v96 = vld [vmem:[#allocation5 + $0xc8] sm:$0xff]
    %v97 = vld [vmem:[#allocation5 + $0xd0] sm:$0xff]
    %v98 = vld [vmem:[#allocation5 + $0xd8] sm:$0xff]
    %v99 = vld [vmem:[#allocation5 + $0xe0] sm:$0xff]
    %v100 = vld [vmem:[#allocation5 + $0xe8] sm:$0xff]
    %v101 = vld [vmem:[#allocation5 + $0xf0] sm:$0xff]
    %v102 = vld [vmem:[#allocation5 + $0xf8] sm:$0xff]
    %v103 = vld [vmem:[#allocation5 + $0x100] sm:$0xff]
    %v104 = vld [vmem:[#allocation5 + $0x108] sm:$0xff]
    %v105 = vld [vmem:[#allocation5 + $0x110] sm:$0xff]
    %v106 = vld [vmem:[#allocation5 + $0x118] sm:$0xff]
    %v107 = vld [vmem:[#allocation5 + $0x120] sm:$0xff]
    %v108 = vld [vmem:[#allocation5 + $0x128] sm:$0xff]
    %v109 = vld [vmem:[#allocation5 + $0x130] sm:$0xff]
    %v110 = vld [vmem:[#allocation5 + $0x138] sm:$0xff]
    %v111 = vld [vmem:[#allocation5 + $0x140] sm:$0xff]
    %v112 = vld [vmem:[#allocation5 + $0x148] sm:$0xff]
    %v113 = vld [vmem:[#allocation5 + $0x150] sm:$0xff]
    %v114 = vld [vmem:[#allocation5 + $0x158] sm:$0xff]
    %v115 = vld [vmem:[#allocation5 + $0x160] sm:$0xff]
    %v116 = vld [vmem:[#allocation5 + $0x168] sm:$0xff]
    %v117 = vld [vmem:[#allocation5 + $0x170] sm:$0xff]
    %v118 = vld [vmem:[#allocation5 + $0x178] sm:$0xff]
    %v119 = vld [vmem:[#allocation5 + $0x180] sm:$0xff]
    %v120 = vld [vmem:[#allocation5 + $0x188] sm:$0xff]
    %v121 = vld [vmem:[#allocation5 + $0x190] sm:$0xff]
    %v122 = vld [vmem:[#allocation5 + $0x198] sm:$0xff]
    %v123 = vld [vmem:[#allocation5 + $0x1a0] sm:$0xff]
    %v124 = vld [vmem:[#allocation5 + $0x1a8] sm:$0xff]
    %v125 = vld [vmem:[#allocation5 + $0x1b0] sm:$0xff]
    %v126 = vld [vmem:[#allocation5 + $0x1b8] sm:$0xff]
    %v127 = vld [vmem:[#allocation5 + $0x1c0] sm:$0xff]
    %v128 = vld [vmem:[#allocation5 + $0x1c8] sm:$0xff]
    %v129 = vld [vmem:[#allocation5 + $0x1d0] sm:$0xff]
    %v130 = vld [vmem:[#allocation5 + $0x1d8] sm:$0xff]
    %v131 = vld [vmem:[#allocation5 + $0x1e0] sm:$0xff]
    %v132 = vld [vmem:[#allocation5 + $0x1e8] sm:$0xff]
    %v133 = vld [vmem:[#allocation5 + $0x1f0] sm:$0xff]
    %v134 = vld [vmem:[#allocation5 + $0x1f8] sm:$0xff]
    %v135 = vld [vmem:[#allocation5 + $0x200] sm:$0xff]
    %v136 = vld [vmem:[#allocation5 + $0x208] sm:$0xff]
    %v137 = vld [vmem:[#allocation5 + $0x210] sm:$0xff]
    %v138 = vld [vmem:[#allocation5 + $0x218] sm:$0xff]
    %v139 = vld [vmem:[#allocation5 + $0x220] sm:$0xff]
    %v140 = vld [vmem:[#allocation5 + $0x228] sm:$0xff]
    %v141 = vld [vmem:[#allocation5 + $0x230] sm:$0xff]
    %v142 = vld [vmem:[#allocation5 + $0x238] sm:$0xff]
    %v143 = vld [vmem:[#allocation5 + $0x240] sm:$0xff]
    %v144 = vld [vmem:[#allocation5 + $0x248] sm:$0xff]
    %v145 = vld [vmem:[#allocation5 + $0x250] sm:$0xff]
    %v146 = vld [vmem:[#allocation5 + $0x258] sm:$0xff]
    %v147 = vld [vmem:[#allocation5 + $0x260] sm:$0xff]
    %v148 = vld [vmem:[#allocation5 + $0x268] sm:$0xff]
    %v149 = vld [vmem:[#allocation5 + $0x270] sm:$0xff]
    %v150 = vld [vmem:[#allocation5 + $0x278] sm:$0xff]
    %v151 = vld [vmem:[#allocation5 + $0x280] sm:$0xff]
    %v152 = vld [vmem:[#allocation5 + $0x288] sm:$0xff]
    %v153 = vld [vmem:[#allocation5 + $0x290] sm:$0xff]
    %v154 = vld [vmem:[#allocation5 + $0x298] sm:$0xff]
    %v155 = vld [vmem:[#allocation5 + $0x2a0] sm:$0xff]
    %v156 = vld [vmem:[#allocation5 + $0x2a8] sm:$0xff]
    %v157 = vld [vmem:[#allocation5 + $0x2b0] sm:$0xff]
    %v158 = vld [vmem:[#allocation5 + $0x2b8] sm:$0xff]
    %v159 = vld [vmem:[#allocation5 + $0x2c0] sm:$0xff]
    %v160 = vld [vmem:[#allocation5 + $0x2c8] sm:$0xff]
    %v161 = vld [vmem:[#allocation5 + $0x2d0] sm:$0xff]
    %v162 = vld [vmem:[#allocation5 + $0x2d8] sm:$0xff]
    %v163 = vld [vmem:[#allocation5 + $0x2e0] sm:$0xff]
    %v164 = vld [vmem:[#allocation5 + $0x2e8] sm:$0xff]
    %v165 = vld [vmem:[#allocation5 + $0x2f0] sm:$0xff]
    %v166 = vld [vmem:[#allocation5 + $0x2f8] sm:$0xff]
    %v167 = vld [vmem:[#allocation5 + $0x300] sm:$0xff]
    %v168 = vld [vmem:[#allocation5 + $0x308] sm:$0xff]
    %v169 = vld [vmem:[#allocation5 + $0x310] sm:$0xff]
    %v170 = vld [vmem:[#allocation5 + $0x318] sm:$0xff]
    %v171 = vld [vmem:[#allocation5 + $0x320] sm:$0xff]
    %v172 = vld [vmem:[#allocation5 + $0x328] sm:$0xff]
    %v173 = vld [vmem:[#allocation5 + $0x330] sm:$0xff]
    %v174 = vld [vmem:[#allocation5 + $0x338] sm:$0xff]
    %v175 = vld [vmem:[#allocation5 + $0x340] sm:$0xff]
    %v176 = vld [vmem:[#allocation5 + $0x348] sm:$0xff]
    %v177 = vld [vmem:[#allocation5 + $0x350] sm:$0xff]
    %v178 = vld [vmem:[#allocation5 + $0x358] sm:$0xff]
    %v179 = vld [vmem:[#allocation5 + $0x360] sm:$0xff]
    %v180 = vld [vmem:[#allocation5 + $0x368] sm:$0xff]
    %v181 = vld [vmem:[#allocation5 + $0x370] sm:$0xff]
    %v182 = vld [vmem:[#allocation5 + $0x378] sm:$0xff]
    %v183 = vld [vmem:[#allocation5 + $0x380] sm:$0xff]
    %v184 = vld [vmem:[#allocation5 + $0x388] sm:$0xff]
    %v185 = vld [vmem:[#allocation5 + $0x390] sm:$0xff]
    %v186 = vld [vmem:[#allocation5 + $0x398] sm:$0xff]
    %v187 = vld [vmem:[#allocation5 + $0x3a0] sm:$0xff]
    %v188 = vld [vmem:[#allocation5 + $0x3a8] sm:$0xff]
    %v189 = vld [vmem:[#allocation5 + $0x3b0] sm:$0xff]
    %v190 = vld [vmem:[#allocation5 + $0x3b8] sm:$0xff]
    %v191 = vld [vmem:[#allocation5 + $0x3c0] sm:$0xff]
    %v192 = vld [vmem:[#allocation5 + $0x3c8] sm:$0xff]
    %v193 = vld [vmem:[#allocation5 + $0x3d0] sm:$0xff]
    %v194 = vld [vmem:[#allocation5 + $0x3d8] sm:$0xff]
    %v195 = vld [vmem:[#allocation5 + $0x3e0] sm:$0xff]
    %v196 = vld [vmem:[#allocation5 + $0x3e8] sm:$0xff]
    %v197 = vld [vmem:[#allocation5 + $0x3f0] sm:$0xff]
    %v198 = vld [vmem:[#allocation5 + $0x3f8] sm:$0xff]
    %v199 = vld [vmem:[#allocation5 + $0x400] sm:$0xff]
    %v200 = vld [vmem:[#allocation5 + $0x408] sm:$0xff]
    %v201 = vld [vmem:[#allocation5 + $0x410] sm:$0xff]
    %v202 = vld [vmem:[#allocation5 + $0x418] sm:$0xff]
    %v203 = vld [vmem:[#allocation5 + $0x420] sm:$0xff]
    %v204 = vld [vmem:[#allocation5 + $0x428] sm:$0xff]
    %v205 = vld [vmem:[#allocation5 + $0x430] sm:$0xff]
    %v206 = vld [vmem:[#allocation5 + $0x438] sm:$0xff]
    %v207 = vld [vmem:[#allocation5 + $0x440] sm:$0xff]
    %v208 = vld [vmem:[#allocation5 + $0x448] sm:$0xff]
    %v209 = vld [vmem:[#allocation5 + $0x450] sm:$0xff]
    %v210 = vld [vmem:[#allocation5 + $0x458] sm:$0xff]
    %v211 = vld [vmem:[#allocation5 + $0x460] sm:$0xff]
    %v212 = vld [vmem:[#allocation5 + $0x468] sm:$0xff]
    %v213 = vld [vmem:[#allocation5 + $0x470] sm:$0xff]
    %v214 = vld [vmem:[#allocation5 + $0x478] sm:$0xff]
    %v215 = vld [vmem:[#allocation5 + $0x480] sm:$0xff]
    %v216 = vld [vmem:[#allocation5 + $0x488] sm:$0xff]
    %v217 = vld [vmem:[#allocation5 + $0x490] sm:$0xff]
    %v218 = vld [vmem:[#allocation5 + $0x498] sm:$0xff]
    %v219 = vld [vmem:[#allocation5 + $0x4a0] sm:$0xff]
    %v220 = vld [vmem:[#allocation5 + $0x4a8] sm:$0xff]
    %v221 = vld [vmem:[#allocation5 + $0x4b0] sm:$0xff]
    %v222 = vld [vmem:[#allocation5 + $0x4b8] sm:$0xff]
    %v223 = vld [vmem:[#allocation5 + $0x4c0] sm:$0xff]
    %v224 = vld [vmem:[#allocation5 + $0x4c8] sm:$0xff]
    %v225 = vld [vmem:[#allocation5 + $0x4d0] sm:$0xff]
    %v226 = vld [vmem:[#allocation5 + $0x4d8] sm:$0xff]
    %v227 = vld [vmem:[#allocation5 + $0x4e0] sm:$0xff]
    %v228 = vld [vmem:[#allocation5 + $0x4e8] sm:$0xff]
    %v229 = vld [vmem:[#allocation5 + $0x4f0] sm:$0xff]
    %v230 = vld [vmem:[#allocation5 + $0x4f8] sm:$0xff]
    %v231 = vld [vmem:[#allocation5 + $0x500] sm:$0xff]
    %v232 = vld [vmem:[#allocation5 + $0x508] sm:$0xff]
    %v233 = vld [vmem:[#allocation5 + $0x510] sm:$0xff]
    %v234 = vld [vmem:[#allocation5 + $0x518] sm:$0xff]
    %v235 = vld [vmem:[#allocation5 + $0x520] sm:$0xff]
    %v236 = vld [vmem:[#allocation5 + $0x528] sm:$0xff]
    %v237 = vld [vmem:[#allocation5 + $0x530] sm:$0xff]
    %v238 = vld [vmem:[#allocation5 + $0x538] sm:$0xff]
    %v239 = vld [vmem:[#allocation5 + $0x540] sm:$0xff]
    %v240 = vld [vmem:[#allocation5 + $0x548] sm:$0xff]
    %v241 = vld [vmem:[#allocation5 + $0x550] sm:$0xff]
    %v242 = vld [vmem:[#allocation5 + $0x558] sm:$0xff]
    %v243 = vld [vmem:[#allocation5 + $0x560] sm:$0xff]
    %v244 = vld [vmem:[#allocation5 + $0x568] sm:$0xff]
    %v245 = vld [vmem:[#allocation5 + $0x570] sm:$0xff]
    %v246 = vld [vmem:[#allocation5 + $0x578] sm:$0xff]
    %v247 = vld [vmem:[#allocation5 + $0x580] sm:$0xff]
    %v248 = vld [vmem:[#allocation5 + $0x588] sm:$0xff]
    %v249 = vld [vmem:[#allocation5 + $0x590] sm:$0xff]
    %v250 = vld [vmem:[#allocation5 + $0x598] sm:$0xff]
    %v251 = vld [vmem:[#allocation5 + $0x5a0] sm:$0xff]
    %v252 = vld [vmem:[#allocation5 + $0x5a8] sm:$0xff]
    %v253 = vld [vmem:[#allocation5 + $0x5b0] sm:$0xff]
    %v254 = vld [vmem:[#allocation5 + $0x5b8] sm:$0xff]
    %v255 = vld [vmem:[#allocation5 + $0x5c0] sm:$0xff]
    %v256 = vld [vmem:[#allocation5 + $0x5c8] sm:$0xff]
    %v257 = vld [vmem:[#allocation5 + $0x5d0] sm:$0xff]
    %v258 = vld [vmem:[#allocation5 + $0x5d8] sm:$0xff]
    %v259 = vld [vmem:[#allocation5 + $0x5e0] sm:$0xff]
    %v260 = vld [vmem:[#allocation5 + $0x5e8] sm:$0xff]
    %v261 = vld [vmem:[#allocation5 + $0x5f0] sm:$0xff]
    %v262 = vld [vmem:[#allocation5 + $0x5f8] sm:$0xff]
    %v263 = vld [vmem:[#allocation5 + $0x600] sm:$0xff]
    %v264 = vld [vmem:[#allocation5 + $0x608] sm:$0xff]
    %v265 = vld [vmem:[#allocation5 + $0x610] sm:$0xff]
    %v266 = vld [vmem:[#allocation5 + $0x618] sm:$0xff]
    %v267 = vld [vmem:[#allocation5 + $0x620] sm:$0xff]
    %v268 = vld [vmem:[#allocation5 + $0x628] sm:$0xff]
    %v269 = vld [vmem:[#allocation5 + $0x630] sm:$0xff]
    %v270 = vld [vmem:[#allocation5 + $0x638] sm:$0xff]
    %v271 = vld [vmem:[#allocation5 + $0x640] sm:$0xff]
    %v272 = vld [vmem:[#allocation5 + $0x648] sm:$0xff]
    %v273 = vld [vmem:[#allocation5 + $0x650] sm:$0xff]
    %v274 = vld [vmem:[#allocation5 + $0x658] sm:$0xff]
    %v275 = vld [vmem:[#allocation5 + $0x660] sm:$0xff]
    %v276 = vld [vmem:[#allocation5 + $0x668] sm:$0xff]
    %v277 = vld [vmem:[#allocation5 + $0x670] sm:$0xff]
    %v278 = vld [vmem:[#allocation5 + $0x678] sm:$0xff]
    %v279 = vld [vmem:[#allocation5 + $0x680] sm:$0xff]
    %v280 = vld [vmem:[#allocation5 + $0x688] sm:$0xff]
    %v281 = vld [vmem:[#allocation5 + $0x690] sm:$0xff]
    %v282 = vld [vmem:[#allocation5 + $0x698] sm:$0xff]
    %v283 = vld [vmem:[#allocation5 + $0x6a0] sm:$0xff]
    %v284 = vld [vmem:[#allocation5 + $0x6a8] sm:$0xff]
    %v285 = vld [vmem:[#allocation5 + $0x6b0] sm:$0xff]
    %v286 = vld [vmem:[#allocation5 + $0x6b8] sm:$0xff]
    %v287 = vld [vmem:[#allocation5 + $0x6c0] sm:$0xff]
    %v288 = vld [vmem:[#allocation5 + $0x6c8] sm:$0xff]
    %v289 = vld [vmem:[#allocation5 + $0x6d0] sm:$0xff]
    %v290 = vld [vmem:[#allocation5 + $0x6d8] sm:$0xff]
    %v291 = vld [vmem:[#allocation5 + $0x6e0] sm:$0xff]
    %v292 = vld [vmem:[#allocation5 + $0x6e8] sm:$0xff]
    %v293 = vld [vmem:[#allocation5 + $0x6f0] sm:$0xff]
    %v294 = vld [vmem:[#allocation5 + $0x6f8] sm:$0xff]
    %v295 = vld [vmem:[#allocation5 + $0x700] sm:$0xff]
    %v296 = vld [vmem:[#allocation5 + $0x708] sm:$0xff]
    %v297 = vld [vmem:[#allocation5 + $0x710] sm:$0xff]
    %v298 = vld [vmem:[#allocation5 + $0x718] sm:$0xff]
    %v299 = vld [vmem:[#allocation5 + $0x720] sm:$0xff]
    %v300 = vld [vmem:[#allocation5 + $0x728] sm:$0xff]
    %v301 = vld [vmem:[#allocation5 + $0x730] sm:$0xff]
    %v302 = vld [vmem:[#allocation5 + $0x738] sm:$0xff]
    %v303 = vld [vmem:[#allocation5 + $0x740] sm:$0xff]
    %v304 = vld [vmem:[#allocation5 + $0x748] sm:$0xff]
    %v305 = vld [vmem:[#allocation5 + $0x750] sm:$0xff]
    %v306 = vld [vmem:[#allocation5 + $0x758] sm:$0xff]
    %v307 = vld [vmem:[#allocation5 + $0x760] sm:$0xff]
    %v308 = vld [vmem:[#allocation5 + $0x768] sm:$0xff]
    %v309 = vld [vmem:[#allocation5 + $0x770] sm:$0xff]
    %v310 = vld [vmem:[#allocation5 + $0x778] sm:$0xff]
    %v311 = vld [vmem:[#allocation5 + $0x780] sm:$0xff]
    %v312 = vld [vmem:[#allocation5 + $0x788] sm:$0xff]
    %v313 = vld [vmem:[#allocation5 + $0x790] sm:$0xff]
    %v314 = vld [vmem:[#allocation5 + $0x798] sm:$0xff]
    %v315 = vld [vmem:[#allocation5 + $0x7a0] sm:$0xff]
    %v316 = vld [vmem:[#allocation5 + $0x7a8] sm:$0xff]
    %v317 = vld [vmem:[#allocation5 + $0x7b0] sm:$0xff]
    %v318 = vld [vmem:[#allocation5 + $0x7b8] sm:$0xff]
    %v319 = vld [vmem:[#allocation5 + $0x7c0] sm:$0xff]
    %v320 = vld [vmem:[#allocation5 + $0x7c8] sm:$0xff]
    %v321 = vld [vmem:[#allocation5 + $0x7d0] sm:$0xff]
    %v322 = vld [vmem:[#allocation5 + $0x7d8] sm:$0xff]
    %v323 = vld [vmem:[#allocation5 + $0x7e0] sm:$0xff]
    %v324 = vld [vmem:[#allocation5 + $0x7e8] sm:$0xff]
    %v325 = vld [vmem:[#allocation5 + $0x7f0] sm:$0xff]
    %v326 = vld [vmem:[#allocation5 + $0x7f8] sm:$0xff]
    %v327 = vld [vmem:[#allocation5 + $0x800] sm:$0xff]
    %v328 = vld [vmem:[#allocation5 + $0x808] sm:$0xff]
    %v329 = vld [vmem:[#allocation5 + $0x810] sm:$0xff]
    %v330 = vld [vmem:[#allocation5 + $0x818] sm:$0xff]
    %v331 = vld [vmem:[#allocation5 + $0x820] sm:$0xff]
    %v332 = vld [vmem:[#allocation5 + $0x828] sm:$0xff]
    %v333 = vld [vmem:[#allocation5 + $0x830] sm:$0xff]
    %v334 = vld [vmem:[#allocation5 + $0x838] sm:$0xff]
    %v335 = vld [vmem:[#allocation5 + $0x840] sm:$0xff]
    %v336 = vld [vmem:[#allocation5 + $0x848] sm:$0xff]
    %v337 = vld [vmem:[#allocation5 + $0x850] sm:$0xff]
    %v338 = vld [vmem:[#allocation5 + $0x858] sm:$0xff]
    %v339 = vld [vmem:[#allocation5 + $0x860] sm:$0xff]
    %v340 = vld [vmem:[#allocation5 + $0x868] sm:$0xff]
    %v341 = vld [vmem:[#allocation5 + $0x870] sm:$0xff]
    %v342 = vld [vmem:[#allocation5 + $0x878] sm:$0xff]
    %v343 = vld [vmem:[#allocation5 + $0x880] sm:$0xff]
    %v344 = vld [vmem:[#allocation5 + $0x888] sm:$0xff]
    %v345 = vld [vmem:[#allocation5 + $0x890] sm:$0xff]
    %v346 = vld [vmem:[#allocation5 + $0x898] sm:$0xff]
    %v347 = vld [vmem:[#allocation5 + $0x8a0] sm:$0xff]
    %v348 = vld [vmem:[#allocation5 + $0x8a8] sm:$0xff]
    %v349 = vld [vmem:[#allocation5 + $0x8b0] sm:$0xff]
    %v350 = vld [vmem:[#allocation5 + $0x8b8] sm:$0xff]
    %v351 = vld [vmem:[#allocation5 + $0x8c0] sm:$0xff]
    %v352 = vld [vmem:[#allocation5 + $0x8c8] sm:$0xff]
    %v353 = vld [vmem:[#allocation5 + $0x8d0] sm:$0xff]
    %v354 = vld [vmem:[#allocation5 + $0x8d8] sm:$0xff]
    %v355 = vld [vmem:[#allocation5 + $0x8e0] sm:$0xff]
    %v356 = vld [vmem:[#allocation5 + $0x8e8] sm:$0xff]
    %v357 = vld [vmem:[#allocation5 + $0x8f0] sm:$0xff]
    %v358 = vld [vmem:[#allocation5 + $0x8f8] sm:$0xff]
    %v359 = vld [vmem:[#allocation5 + $0x900] sm:$0xff]
    %v360 = vld [vmem:[#allocation5 + $0x908] sm:$0xff]
    %v361 = vld [vmem:[#allocation5 + $0x910] sm:$0xff]
    %v362 = vld [vmem:[#allocation5 + $0x918] sm:$0xff]
    %v363 = vld [vmem:[#allocation5 + $0x920] sm:$0xff]
    %v364 = vld [vmem:[#allocation5 + $0x928] sm:$0xff]
    %v365 = vld [vmem:[#allocation5 + $0x930] sm:$0xff]
    %v366 = vld [vmem:[#allocation5 + $0x938] sm:$0xff]
    %v367 = vld [vmem:[#allocation5 + $0x940] sm:$0xff]
    %v368 = vld [vmem:[#allocation5 + $0x948] sm:$0xff]
    %v369 = vld [vmem:[#allocation5 + $0x950] sm:$0xff]
    %v370 = vld [vmem:[#allocation5 + $0x958] sm:$0xff]
    %v371 = vld [vmem:[#allocation5 + $0x960] sm:$0xff]
    %v372 = vld [vmem:[#allocation5 + $0x968] sm:$0xff]
    %v373 = vld [vmem:[#allocation5 + $0x970] sm:$0xff]
    %v374 = vld [vmem:[#allocation5 + $0x978] sm:$0xff]
    %v375 = vld [vmem:[#allocation5 + $0x980] sm:$0xff]
    %v376 = vld [vmem:[#allocation5 + $0x988] sm:$0xff]
    %v377 = vld [vmem:[#allocation5 + $0x990] sm:$0xff]
    %v378 = vld [vmem:[#allocation5 + $0x998] sm:$0xff]
    %v379 = vld [vmem:[#allocation5 + $0x9a0] sm:$0xff]
    %v380 = vld [vmem:[#allocation5 + $0x9a8] sm:$0xff]
    %v381 = vld [vmem:[#allocation5 + $0x9b0] sm:$0xff]
    %v382 = vld [vmem:[#allocation5 + $0x9b8] sm:$0xff]
    %v383 = vld [vmem:[#allocation5 + $0x9c0] sm:$0xff]
    %v384 = vld [vmem:[#allocation5 + $0x9c8] sm:$0xff]
    %v385 = vld [vmem:[#allocation5 + $0x9d0] sm:$0xff]
    %v386 = vld [vmem:[#allocation5 + $0x9d8] sm:$0xff]
    %v387 = vld [vmem:[#allocation5 + $0x9e0] sm:$0xff]
    %v388 = vld [vmem:[#allocation5 + $0x9e8] sm:$0xff]
    %v389 = vld [vmem:[#allocation5 + $0x9f0] sm:$0xff]
    %v390 = vld [vmem:[#allocation5 + $0x9f8] sm:$0xff]
    %v391 = vld [vmem:[#allocation5 + $0xa00] sm:$0xff]
    %v392 = vld [vmem:[#allocation5 + $0xa08] sm:$0xff]
    %v393 = vld [vmem:[#allocation5 + $0xa10] sm:$0xff]
    %v394 = vld [vmem:[#allocation5 + $0xa18] sm:$0xff]
    %v395 = vld [vmem:[#allocation5 + $0xa20] sm:$0xff]
    %v396 = vld [vmem:[#allocation5 + $0xa28] sm:$0xff]
    %v397 = vld [vmem:[#allocation5 + $0xa30] sm:$0xff]
    %v398 = vld [vmem:[#allocation5 + $0xa38] sm:$0xff]
    %v399 = vld [vmem:[#allocation5 + $0xa40] sm:$0xff]
    %v400 = vld [vmem:[#allocation5 + $0xa48] sm:$0xff]
    %v401 = vld [vmem:[#allocation5 + $0xa50] sm:$0xff]
    %v402 = vld [vmem:[#allocation5 + $0xa58] sm:$0xff]
    %v403 = vld [vmem:[#allocation5 + $0xa60] sm:$0xff]
    %v404 = vld [vmem:[#allocation5 + $0xa68] sm:$0xff]
    %v405 = vld [vmem:[#allocation5 + $0xa70] sm:$0xff]
    %v406 = vld [vmem:[#allocation5 + $0xa78] sm:$0xff]
    %v407 = vld [vmem:[#allocation5 + $0xa80] sm:$0xff]
    %v408 = vld [vmem:[#allocation5 + $0xa88] sm:$0xff]
    %v409 = vld [vmem:[#allocation5 + $0xa90] sm:$0xff]
    %v410 = vld [vmem:[#allocation5 + $0xa98] sm:$0xff]
    %v411 = vld [vmem:[#allocation5 + $0xaa0] sm:$0xff]
    %v412 = vld [vmem:[#allocation5 + $0xaa8] sm:$0xff]
    %v413 = vld [vmem:[#allocation5 + $0xab0] sm:$0xff]
    %v414 = vld [vmem:[#allocation5 + $0xab8] sm:$0xff]
    %v415 = vld [vmem:[#allocation5 + $0xac0] sm:$0xff]
    %v416 = vld [vmem:[#allocation5 + $0xac8] sm:$0xff]
    %v417 = vld [vmem:[#allocation5 + $0xad0] sm:$0xff]
    %v418 = vld [vmem:[#allocation5 + $0xad8] sm:$0xff]
    %v419 = vld [vmem:[#allocation5 + $0xae0] sm:$0xff]
    %v420 = vld [vmem:[#allocation5 + $0xae8] sm:$0xff]
    %v421 = vld [vmem:[#allocation5 + $0xaf0] sm:$0xff]
    %v422 = vld [vmem:[#allocation5 + $0xaf8] sm:$0xff]
    %v423 = vld [vmem:[#allocation5 + $0xb00] sm:$0xff]
    %v424 = vld [vmem:[#allocation5 + $0xb08] sm:$0xff]
    %v425 = vld [vmem:[#allocation5 + $0xb10] sm:$0xff]
    %v426 = vld [vmem:[#allocation5 + $0xb18] sm:$0xff]
    %v427 = vld [vmem:[#allocation5 + $0xb20] sm:$0xff]
    %v428 = vld [vmem:[#allocation5 + $0xb28] sm:$0xff]
    %v429 = vld [vmem:[#allocation5 + $0xb30] sm:$0xff]
    %v430 = vld [vmem:[#allocation5 + $0xb38] sm:$0xff]
    %v431 = vld [vmem:[#allocation5 + $0xb40] sm:$0xff]
    %v432 = vld [vmem:[#allocation5 + $0xb48] sm:$0xff]
    %v433 = vld [vmem:[#allocation5 + $0xb50] sm:$0xff]
    %v434 = vld [vmem:[#allocation5 + $0xb58] sm:$0xff]
    %v435 = vld [vmem:[#allocation5 + $0xb60] sm:$0xff]
    %v436 = vld [vmem:[#allocation5 + $0xb68] sm:$0xff]
    %v437 = vld [vmem:[#allocation5 + $0xb70] sm:$0xff]
    %v438 = vld [vmem:[#allocation5 + $0xb78] sm:$0xff]
    %v439 = vld [vmem:[#allocation5 + $0xb80] sm:$0xff]
    %v440 = vld [vmem:[#allocation5 + $0xb88] sm:$0xff]
    %v441 = vld [vmem:[#allocation5 + $0xb90] sm:$0xff]
    %v442 = vld [vmem:[#allocation5 + $0xb98] sm:$0xff]
    %v443 = vld [vmem:[#allocation5 + $0xba0] sm:$0xff]
    %v444 = vld [vmem:[#allocation5 + $0xba8] sm:$0xff]
    %v445 = vld [vmem:[#allocation5 + $0xbb0] sm:$0xff]
    %v446 = vld [vmem:[#allocation5 + $0xbb8] sm:$0xff]
    %v447 = vld [vmem:[#allocation5 + $0xbc0] sm:$0xff]
    %v448 = vld [vmem:[#allocation5 + $0xbc8] sm:$0xff]
    %v449 = vld [vmem:[#allocation5 + $0xbd0] sm:$0xff]
    %v450 = vld [vmem:[#allocation5 + $0xbd8] sm:$0xff]
    %v451 = vld [vmem:[#allocation5 + $0xbe0] sm:$0xff]
    %v452 = vld [vmem:[#allocation5 + $0xbe8] sm:$0xff]
    %v453 = vld [vmem:[#allocation5 + $0xbf0] sm:$0xff]
    %v454 = vld [vmem:[#allocation5 + $0xbf8] sm:$0xff]
    %v455 = vld [vmem:[#allocation5 + $0xc00] sm:$0xff]
    %v456 = vld [vmem:[#allocation5 + $0xc08] sm:$0xff]
    %v457 = vld [vmem:[#allocation5 + $0xc10] sm:$0xff]
    %v458 = vld [vmem:[#allocation5 + $0xc18] sm:$0xff]
    %v459 = vld [vmem:[#allocation5 + $0xc20] sm:$0xff]
    %v460 = vld [vmem:[#allocation5 + $0xc28] sm:$0xff]
    %v461 = vld [vmem:[#allocation5 + $0xc30] sm:$0xff]
    %v462 = vld [vmem:[#allocation5 + $0xc38] sm:$0xff]
    %v463 = vld [vmem:[#allocation5 + $0xc40] sm:$0xff]
    %v464 = vld [vmem:[#allocation5 + $0xc48] sm:$0xff]
    %v465 = vld [vmem:[#allocation5 + $0xc50] sm:$0xff]
    %v466 = vld [vmem:[#allocation5 + $0xc58] sm:$0xff]
    %v467 = vld [vmem:[#allocation5 + $0xc60] sm:$0xff]
    %v468 = vld [vmem:[#allocation5 + $0xc68] sm:$0xff]
    %v469 = vld [vmem:[#allocation5 + $0xc70] sm:$0xff]
    %v470 = vld [vmem:[#allocation5 + $0xc78] sm:$0xff]
    %v471 = vld [vmem:[#allocation5 + $0xc80] sm:$0xff]
    %v472 = vld [vmem:[#allocation5 + $0xc88] sm:$0xff]
    %v473 = vld [vmem:[#allocation5 + $0xc90] sm:$0xff]
    %v474 = vld [vmem:[#allocation5 + $0xc98] sm:$0xff]
    %v475 = vld [vmem:[#allocation5 + $0xca0] sm:$0xff]
    %v476 = vld [vmem:[#allocation5 + $0xca8] sm:$0xff]
    %v477 = vld [vmem:[#allocation5 + $0xcb0] sm:$0xff]
    %v478 = vld [vmem:[#allocation5 + $0xcb8] sm:$0xff]
    %v479 = vld [vmem:[#allocation5 + $0xcc0] sm:$0xff]
    %v480 = vld [vmem:[#allocation5 + $0xcc8] sm:$0xff]
    %v481 = vld [vmem:[#allocation5 + $0xcd0] sm:$0xff]
    %v482 = vld [vmem:[#allocation5 + $0xcd8] sm:$0xff]
    %v483 = vld [vmem:[#allocation5 + $0xce0] sm:$0xff]
    %v484 = vld [vmem:[#allocation5 + $0xce8] sm:$0xff]
    %v485 = vld [vmem:[#allocation5 + $0xcf0] sm:$0xff]
    %v486 = vld [vmem:[#allocation5 + $0xcf8] sm:$0xff]
    %v487 = vld [vmem:[#allocation5 + $0xd00] sm:$0xff]
    %v488 = vld [vmem:[#allocation5 + $0xd08] sm:$0xff]
    %v489 = vld [vmem:[#allocation5 + $0xd10] sm:$0xff]
    %v490 = vld [vmem:[#allocation5 + $0xd18] sm:$0xff]
    %v491 = vld [vmem:[#allocation5 + $0xd20] sm:$0xff]
    %v492 = vld [vmem:[#allocation5 + $0xd28] sm:$0xff]
    %v493 = vld [vmem:[#allocation5 + $0xd30] sm:$0xff]
    %v494 = vld [vmem:[#allocation5 + $0xd38] sm:$0xff]
    %v495 = vld [vmem:[#allocation5 + $0xd40] sm:$0xff]
    %v496 = vld [vmem:[#allocation5 + $0xd48] sm:$0xff]
    %v497 = vld [vmem:[#allocation5 + $0xd50] sm:$0xff]
    %v498 = vld [vmem:[#allocation5 + $0xd58] sm:$0xff]
    %v499 = vld [vmem:[#allocation5 + $0xd60] sm:$0xff]
    %v500 = vld [vmem:[#allocation5 + $0xd68] sm:$0xff]
    %v501 = vld [vmem:[#allocation5 + $0xd70] sm:$0xff]
    %v502 = vld [vmem:[#allocation5 + $0xd78] sm:$0xff]
    %v503 = vld [vmem:[#allocation5 + $0xd80] sm:$0xff]
    %v504 = vld [vmem:[#allocation5 + $0xd88] sm:$0xff]
    %v505 = vld [vmem:[#allocation5 + $0xd90] sm:$0xff]
    %v506 = vld [vmem:[#allocation5 + $0xd98] sm:$0xff]
    %v507 = vld [vmem:[#allocation5 + $0xda0] sm:$0xff]
    %v508 = vld [vmem:[#allocation5 + $0xda8] sm:$0xff]
    %v509 = vld [vmem:[#allocation5 + $0xdb0] sm:$0xff]
    %v510 = vld [vmem:[#allocation5 + $0xdb8] sm:$0xff]
    %v511 = vld [vmem:[#allocation5 + $0xdc0] sm:$0xff]
    %v512 = vld [vmem:[#allocation5 + $0xdc8] sm:$0xff]
    %v513 = vld [vmem:[#allocation5 + $0xdd0] sm:$0xff]
    %v514 = vld [vmem:[#allocation5 + $0xdd8] sm:$0xff]
    %v515 = vld [vmem:[#allocation5 + $0xde0] sm:$0xff]
    %v516 = vld [vmem:[#allocation5 + $0xde8] sm:$0xff]
    %v517 = vld [vmem:[#allocation5 + $0xdf0] sm:$0xff]
    %v518 = vld [vmem:[#allocation5 + $0xdf8] sm:$0xff]
    %v519 = vld [vmem:[#allocation5 + $0xe00] sm:$0xff]
    %v520 = vld [vmem:[#allocation5 + $0xe08] sm:$0xff]
    %v521 = vld [vmem:[#allocation5 + $0xe10] sm:$0xff]
    %v522 = vld [vmem:[#allocation5 + $0xe18] sm:$0xff]
    %v523 = vld [vmem:[#allocation5 + $0xe20] sm:$0xff]
    %v524 = vld [vmem:[#allocation5 + $0xe28] sm:$0xff]
    %v525 = vld [vmem:[#allocation5 + $0xe30] sm:$0xff]
    %v526 = vld [vmem:[#allocation5 + $0xe38] sm:$0xff]
    %v527 = vld [vmem:[#allocation5 + $0xe40] sm:$0xff]
    %v528 = vld [vmem:[#allocation5 + $0xe48] sm:$0xff]
    %v529 = vld [vmem:[#allocation5 + $0xe50] sm:$0xff]
    %v530 = vld [vmem:[#allocation5 + $0xe58] sm:$0xff]
    %v531 = vld [vmem:[#allocation5 + $0xe60] sm:$0xff]
    %v532 = vld [vmem:[#allocation5 + $0xe68] sm:$0xff]
    %v533 = vld [vmem:[#allocation5 + $0xe70] sm:$0xff]
    %v534 = vld [vmem:[#allocation5 + $0xe78] sm:$0xff]
    %v535 = vld [vmem:[#allocation5 + $0xe80] sm:$0xff]
    %v536 = vld [vmem:[#allocation5 + $0xe88] sm:$0xff]
    %v537 = vld [vmem:[#allocation5 + $0xe90] sm:$0xff]
    %v538 = vld [vmem:[#allocation5 + $0xe98] sm:$0xff]
    %v539 = vld [vmem:[#allocation5 + $0xea0] sm:$0xff]
    %v540 = vld [vmem:[#allocation5 + $0xea8] sm:$0xff]
    %v541 = vld [vmem:[#allocation5 + $0xeb0] sm:$0xff]
    %v542 = vld [vmem:[#allocation5 + $0xeb8] sm:$0xff]
    %v543 = vld [vmem:[#allocation5 + $0xec0] sm:$0xff]
    %v544 = vld [vmem:[#allocation5 + $0xec8] sm:$0xff]
    %v545 = vld [vmem:[#allocation5 + $0xed0] sm:$0xff]
    %v546 = vld [vmem:[#allocation5 + $0xed8] sm:$0xff]
    %v547 = vld [vmem:[#allocation5 + $0xee0] sm:$0xff]
    %v548 = vld [vmem:[#allocation5 + $0xee8] sm:$0xff]
    %v549 = vld [vmem:[#allocation5 + $0xef0] sm:$0xff]
    %v550 = vld [vmem:[#allocation5 + $0xef8] sm:$0xff]
    %v551 = vld [vmem:[#allocation5 + $0xf00] sm:$0xff]
    %v552 = vld [vmem:[#allocation5 + $0xf08] sm:$0xff]
    %v553 = vld [vmem:[#allocation5 + $0xf10] sm:$0xff]
    %v554 = vld [vmem:[#allocation5 + $0xf18] sm:$0xff]
    %v555 = vld [vmem:[#allocation5 + $0xf20] sm:$0xff]
    %v556 = vld [vmem:[#allocation5 + $0xf28] sm:$0xff]
    %v557 = vld [vmem:[#allocation5 + $0xf30] sm:$0xff]
    %v558 = vld [vmem:[#allocation5 + $0xf38] sm:$0xff]
    %v559 = vld [vmem:[#allocation5 + $0xf40] sm:$0xff]
    %v560 = vld [vmem:[#allocation5 + $0xf48] sm:$0xff]
    %v561 = vld [vmem:[#allocation5 + $0xf50] sm:$0xff]
    %v562 = vld [vmem:[#allocation5 + $0xf58] sm:$0xff]
    %v563 = vld [vmem:[#allocation5 + $0xf60] sm:$0xff]
    %v564 = vld [vmem:[#allocation5 + $0xf68] sm:$0xff]
    %v565 = vld [vmem:[#allocation5 + $0xf70] sm:$0xff]
    %v566 = vld [vmem:[#allocation5 + $0xf78] sm:$0xff]
    %v567 = vld [vmem:[#allocation5 + $0xf80] sm:$0xff]
    %v568 = vld [vmem:[#allocation5 + $0xf88] sm:$0xff]
    %v569 = vld [vmem:[#allocation5 + $0xf90] sm:$0xff]
    %v570 = vld [vmem:[#allocation5 + $0xf98] sm:$0xff]
    %v571 = vld [vmem:[#allocation5 + $0xfa0] sm:$0xff]
    %v572 = vld [vmem:[#allocation5 + $0xfa8] sm:$0xff]
    %v573 = vld [vmem:[#allocation5 + $0xfb0] sm:$0xff]
    %v574 = vld [vmem:[#allocation5 + $0xfb8] sm:$0xff]
    %v575 = vld [vmem:[#allocation5 + $0xfc0] sm:$0xff]
    %v576 = vld [vmem:[#allocation5 + $0xfc8] sm:$0xff]
    %v577 = vld [vmem:[#allocation5 + $0xfd0] sm:$0xff]
    %v578 = vld [vmem:[#allocation5 + $0xfd8] sm:$0xff]
    %v579 = vld [vmem:[#allocation5 + $0xfe0] sm:$0xff]
    %v580 = vld [vmem:[#allocation5 + $0xfe8] sm:$0xff]
    %v581 = vld [vmem:[#allocation5 + $0xff0] sm:$0xff]
    %v582 = vld [vmem:[#allocation5 + $0xff8] sm:$0xff]
    %v583 = vld [vmem:[#allocation7] ss:$2 sm:$0xff]
    %v585 = vlaneseq
    %v586 = vshrl.u32 %v585, 7
    %v587 = vsub.s32 0, %v586
    %v588 = vrot.slane %v583, %v587
    %v589 = vlaneseq
    %v590 = vshrl.u32 %v589, 7
    %v591 = vsub.s32 1, %v590
    %v592 = vrot.slane %v583, %v591
    %v593 = vlaneseq
    %v594 = vshrl.u32 %v593, 7
    %v595 = vsub.s32 2, %v594
    %v596 = vrot.slane %v583, %v595
    %v597 = vlaneseq
    %v598 = vshrl.u32 %v597, 7
    %v599 = vsub.s32 3, %v598
    %v600 = vrot.slane %v583, %v599
    %v601 = vlaneseq
    %v602 = vshrl.u32 %v601, 7
    %v603 = vsub.s32 4, %v602
    %v604 = vrot.slane %v583, %v603
    %v605 = vlaneseq
    %v606 = vshrl.u32 %v605, 7
    %v607 = vsub.s32 5, %v606
    %v608 = vrot.slane %v583, %v607
    %v609 = vlaneseq
    %v610 = vshrl.u32 %v609, 7
    %v611 = vsub.s32 6, %v610
    %v612 = vrot.slane %v583, %v611
    %v613 = vlaneseq
    %v614 = vshrl.u32 %v613, 7
    %v615 = vsub.s32 7, %v614
    %v616 = vrot.slane %v583, %v615
    %v1137 = vunpack.c.l.b16 %v71
    %v1138 = vunpack.c.h.b16 %v71
    %v1139 = vunpack.c.l.b16 %v72
    %v1140 = vunpack.c.h.b16 %v72
    %v1141 = vunpack.c.l.b16 %v73
    %v1142 = vunpack.c.h.b16 %v73
    %v1143 = vunpack.c.l.b16 %v74
    %v1144 = vunpack.c.h.b16 %v74
    %v1145 = vunpack.c.l.b16 %v75
    %v1146 = vunpack.c.h.b16 %v75
    %v1147 = vunpack.c.l.b16 %v76
    %v1148 = vunpack.c.h.b16 %v76
    %v1149 = vunpack.c.l.b16 %v77
    %v1150 = vunpack.c.h.b16 %v77
    %v1151 = vunpack.c.l.b16 %v78
    %v1152 = vunpack.c.h.b16 %v78
    %v1153 = vunpack.c.l.b16 %v79
    %v1154 = vunpack.c.h.b16 %v79
    %v1155 = vunpack.c.l.b16 %v80
    %v1156 = vunpack.c.h.b16 %v80
    %v1157 = vunpack.c.l.b16 %v81
    %v1158 = vunpack.c.h.b16 %v81
    %v1159 = vunpack.c.l.b16 %v82
    %v1160 = vunpack.c.h.b16 %v82
    %v1161 = vunpack.c.l.b16 %v83
    %v1162 = vunpack.c.h.b16 %v83
    %v1163 = vunpack.c.l.b16 %v84
    %v1164 = vunpack.c.h.b16 %v84
    %v1165 = vunpack.c.l.b16 %v85
    %v1166 = vunpack.c.h.b16 %v85
    %v1167 = vunpack.c.l.b16 %v86
    %v1168 = vunpack.c.h.b16 %v86
    %v1169 = vunpack.c.l.b16 %v87
    %v1170 = vunpack.c.h.b16 %v87
    %v1171 = vunpack.c.l.b16 %v88
    %v1172 = vunpack.c.h.b16 %v88
    %v1173 = vunpack.c.l.b16 %v89
    %v1174 = vunpack.c.h.b16 %v89
    %v1175 = vunpack.c.l.b16 %v90
    %v1176 = vunpack.c.h.b16 %v90
    %v1177 = vunpack.c.l.b16 %v91
    %v1178 = vunpack.c.h.b16 %v91
    %v1179 = vunpack.c.l.b16 %v92
    %v1180 = vunpack.c.h.b16 %v92
    %v1181 = vunpack.c.l.b16 %v93
    %v1182 = vunpack.c.h.b16 %v93
    %v1183 = vunpack.c.l.b16 %v94
    %v1184 = vunpack.c.h.b16 %v94
    %v1185 = vunpack.c.l.b16 %v95
    %v1186 = vunpack.c.h.b16 %v95
    %v1187 = vunpack.c.l.b16 %v96
    %v1188 = vunpack.c.h.b16 %v96
    %v1189 = vunpack.c.l.b16 %v97
    %v1190 = vunpack.c.h.b16 %v97
    %v1191 = vunpack.c.l.b16 %v98
    %v1192 = vunpack.c.h.b16 %v98
    %v1193 = vunpack.c.l.b16 %v99
    %v1194 = vunpack.c.h.b16 %v99
    %v1195 = vunpack.c.l.b16 %v100
    %v1196 = vunpack.c.h.b16 %v100
    %v1197 = vunpack.c.l.b16 %v101
    %v1198 = vunpack.c.h.b16 %v101
    %v1199 = vunpack.c.l.b16 %v102
    %v1200 = vunpack.c.h.b16 %v102
    %v1201 = vunpack.c.l.b16 %v103
    %v1202 = vunpack.c.h.b16 %v103
    %v1203 = vunpack.c.l.b16 %v104
    %v1204 = vunpack.c.h.b16 %v104
    %v1205 = vunpack.c.l.b16 %v105
    %v1206 = vunpack.c.h.b16 %v105
    %v1207 = vunpack.c.l.b16 %v106
    %v1208 = vunpack.c.h.b16 %v106
    %v1209 = vunpack.c.l.b16 %v107
    %v1210 = vunpack.c.h.b16 %v107
    %v1211 = vunpack.c.l.b16 %v108
    %v1212 = vunpack.c.h.b16 %v108
    %v1213 = vunpack.c.l.b16 %v109
    %v1214 = vunpack.c.h.b16 %v109
    %v1215 = vunpack.c.l.b16 %v110
    %v1216 = vunpack.c.h.b16 %v110
    %v1217 = vunpack.c.l.b16 %v111
    %v1218 = vunpack.c.h.b16 %v111
    %v1219 = vunpack.c.l.b16 %v112
    %v1220 = vunpack.c.h.b16 %v112
    %v1221 = vunpack.c.l.b16 %v113
    %v1222 = vunpack.c.h.b16 %v113
    %v1223 = vunpack.c.l.b16 %v114
    %v1224 = vunpack.c.h.b16 %v114
    %v1225 = vunpack.c.l.b16 %v115
    %v1226 = vunpack.c.h.b16 %v115
    %v1227 = vunpack.c.l.b16 %v116
    %v1228 = vunpack.c.h.b16 %v116
    %v1229 = vunpack.c.l.b16 %v117
    %v1230 = vunpack.c.h.b16 %v117
    %v1231 = vunpack.c.l.b16 %v118
    %v1232 = vunpack.c.h.b16 %v118
    %v1233 = vunpack.c.l.b16 %v119
    %v1234 = vunpack.c.h.b16 %v119
    %v1235 = vunpack.c.l.b16 %v120
    %v1236 = vunpack.c.h.b16 %v120
    %v1237 = vunpack.c.l.b16 %v121
    %v1238 = vunpack.c.h.b16 %v121
    %v1239 = vunpack.c.l.b16 %v122
    %v1240 = vunpack.c.h.b16 %v122
    %v1241 = vunpack.c.l.b16 %v123
    %v1242 = vunpack.c.h.b16 %v123
    %v1243 = vunpack.c.l.b16 %v124
    %v1244 = vunpack.c.h.b16 %v124
    %v1245 = vunpack.c.l.b16 %v125
    %v1246 = vunpack.c.h.b16 %v125
    %v1247 = vunpack.c.l.b16 %v126
    %v1248 = vunpack.c.h.b16 %v126
    %v1249 = vunpack.c.l.b16 %v127
    %v1250 = vunpack.c.h.b16 %v127
    %v1251 = vunpack.c.l.b16 %v128
    %v1252 = vunpack.c.h.b16 %v128
    %v1253 = vunpack.c.l.b16 %v129
    %v1254 = vunpack.c.h.b16 %v129
    %v1255 = vunpack.c.l.b16 %v130
    %v1256 = vunpack.c.h.b16 %v130
    %v1257 = vunpack.c.l.b16 %v131
    %v1258 = vunpack.c.h.b16 %v131
    %v1259 = vunpack.c.l.b16 %v132
    %v1260 = vunpack.c.h.b16 %v132
    %v1261 = vunpack.c.l.b16 %v133
    %v1262 = vunpack.c.h.b16 %v133
    %v1263 = vunpack.c.l.b16 %v134
    %v1264 = vunpack.c.h.b16 %v134
    %v1265 = vunpack.c.l.b16 %v135
    %v1266 = vunpack.c.h.b16 %v135
    %v1267 = vunpack.c.l.b16 %v136
    %v1268 = vunpack.c.h.b16 %v136
    %v1269 = vunpack.c.l.b16 %v137
    %v1270 = vunpack.c.h.b16 %v137
    %v1271 = vunpack.c.l.b16 %v138
    %v1272 = vunpack.c.h.b16 %v138
    %v1273 = vunpack.c.l.b16 %v139
    %v1274 = vunpack.c.h.b16 %v139
    %v1275 = vunpack.c.l.b16 %v140
    %v1276 = vunpack.c.h.b16 %v140
    %v1277 = vunpack.c.l.b16 %v141
    %v1278 = vunpack.c.h.b16 %v141
    %v1279 = vunpack.c.l.b16 %v142
    %v1280 = vunpack.c.h.b16 %v142
    %v1281 = vunpack.c.l.b16 %v143
    %v1282 = vunpack.c.h.b16 %v143
    %v1283 = vunpack.c.l.b16 %v144
    %v1284 = vunpack.c.h.b16 %v144
    %v1285 = vunpack.c.l.b16 %v145
    %v1286 = vunpack.c.h.b16 %v145
    %v1287 = vunpack.c.l.b16 %v146
    %v1288 = vunpack.c.h.b16 %v146
    %v1289 = vunpack.c.l.b16 %v147
    %v1290 = vunpack.c.h.b16 %v147
    %v1291 = vunpack.c.l.b16 %v148
    %v1292 = vunpack.c.h.b16 %v148
    %v1293 = vunpack.c.l.b16 %v149
    %v1294 = vunpack.c.h.b16 %v149
    %v1295 = vunpack.c.l.b16 %v150
    %v1296 = vunpack.c.h.b16 %v150
    %v1297 = vunpack.c.l.b16 %v151
    %v1298 = vunpack.c.h.b16 %v151
    %v1299 = vunpack.c.l.b16 %v152
    %v1300 = vunpack.c.h.b16 %v152
    %v1301 = vunpack.c.l.b16 %v153
    %v1302 = vunpack.c.h.b16 %v153
    %v1303 = vunpack.c.l.b16 %v154
    %v1304 = vunpack.c.h.b16 %v154
    %v1305 = vunpack.c.l.b16 %v155
    %v1306 = vunpack.c.h.b16 %v155
    %v1307 = vunpack.c.l.b16 %v156
    %v1308 = vunpack.c.h.b16 %v156
    %v1309 = vunpack.c.l.b16 %v157
    %v1310 = vunpack.c.h.b16 %v157
    %v1311 = vunpack.c.l.b16 %v158
    %v1312 = vunpack.c.h.b16 %v158
    %v1313 = vunpack.c.l.b16 %v159
    %v1314 = vunpack.c.h.b16 %v159
    %v1315 = vunpack.c.l.b16 %v160
    %v1316 = vunpack.c.h.b16 %v160
    %v1317 = vunpack.c.l.b16 %v161
    %v1318 = vunpack.c.h.b16 %v161
    %v1319 = vunpack.c.l.b16 %v162
    %v1320 = vunpack.c.h.b16 %v162
    %v1321 = vunpack.c.l.b16 %v163
    %v1322 = vunpack.c.h.b16 %v163
    %v1323 = vunpack.c.l.b16 %v164
    %v1324 = vunpack.c.h.b16 %v164
    %v1325 = vunpack.c.l.b16 %v165
    %v1326 = vunpack.c.h.b16 %v165
    %v1327 = vunpack.c.l.b16 %v166
    %v1328 = vunpack.c.h.b16 %v166
    %v1329 = vunpack.c.l.b16 %v167
    %v1330 = vunpack.c.h.b16 %v167
    %v1331 = vunpack.c.l.b16 %v168
    %v1332 = vunpack.c.h.b16 %v168
    %v1333 = vunpack.c.l.b16 %v169
    %v1334 = vunpack.c.h.b16 %v169
    %v1335 = vunpack.c.l.b16 %v170
    %v1336 = vunpack.c.h.b16 %v170
    %v1337 = vunpack.c.l.b16 %v171
    %v1338 = vunpack.c.h.b16 %v171
    %v1339 = vunpack.c.l.b16 %v172
    %v1340 = vunpack.c.h.b16 %v172
    %v1341 = vunpack.c.l.b16 %v173
    %v1342 = vunpack.c.h.b16 %v173
    %v1343 = vunpack.c.l.b16 %v174
    %v1344 = vunpack.c.h.b16 %v174
    %v1345 = vunpack.c.l.b16 %v175
    %v1346 = vunpack.c.h.b16 %v175
    %v1347 = vunpack.c.l.b16 %v176
    %v1348 = vunpack.c.h.b16 %v176
    %v1349 = vunpack.c.l.b16 %v177
    %v1350 = vunpack.c.h.b16 %v177
    %v1351 = vunpack.c.l.b16 %v178
    %v1352 = vunpack.c.h.b16 %v178
    %v1353 = vunpack.c.l.b16 %v179
    %v1354 = vunpack.c.h.b16 %v179
    %v1355 = vunpack.c.l.b16 %v180
    %v1356 = vunpack.c.h.b16 %v180
    %v1357 = vunpack.c.l.b16 %v181
    %v1358 = vunpack.c.h.b16 %v181
    %v1359 = vunpack.c.l.b16 %v182
    %v1360 = vunpack.c.h.b16 %v182
    %v1361 = vunpack.c.l.b16 %v183
    %v1362 = vunpack.c.h.b16 %v183
    %v1363 = vunpack.c.l.b16 %v184
    %v1364 = vunpack.c.h.b16 %v184
    %v1365 = vunpack.c.l.b16 %v185
    %v1366 = vunpack.c.h.b16 %v185
    %v1367 = vunpack.c.l.b16 %v186
    %v1368 = vunpack.c.h.b16 %v186
    %v1369 = vunpack.c.l.b16 %v187
    %v1370 = vunpack.c.h.b16 %v187
    %v1371 = vunpack.c.l.b16 %v188
    %v1372 = vunpack.c.h.b16 %v188
    %v1373 = vunpack.c.l.b16 %v189
    %v1374 = vunpack.c.h.b16 %v189
    %v1375 = vunpack.c.l.b16 %v190
    %v1376 = vunpack.c.h.b16 %v190
    %v1377 = vunpack.c.l.b16 %v191
    %v1378 = vunpack.c.h.b16 %v191
    %v1379 = vunpack.c.l.b16 %v192
    %v1380 = vunpack.c.h.b16 %v192
    %v1381 = vunpack.c.l.b16 %v193
    %v1382 = vunpack.c.h.b16 %v193
    %v1383 = vunpack.c.l.b16 %v194
    %v1384 = vunpack.c.h.b16 %v194
    %v1385 = vunpack.c.l.b16 %v195
    %v1386 = vunpack.c.h.b16 %v195
    %v1387 = vunpack.c.l.b16 %v196
    %v1388 = vunpack.c.h.b16 %v196
    %v1389 = vunpack.c.l.b16 %v197
    %v1390 = vunpack.c.h.b16 %v197
    %v1391 = vunpack.c.l.b16 %v198
    %v1392 = vunpack.c.h.b16 %v198
    %v1393 = vunpack.c.l.b16 %v199
    %v1394 = vunpack.c.h.b16 %v199
    %v1395 = vunpack.c.l.b16 %v200
    %v1396 = vunpack.c.h.b16 %v200
    %v1397 = vunpack.c.l.b16 %v201
    %v1398 = vunpack.c.h.b16 %v201
    %v1399 = vunpack.c.l.b16 %v202
    %v1400 = vunpack.c.h.b16 %v202
    %v1401 = vunpack.c.l.b16 %v203
    %v1402 = vunpack.c.h.b16 %v203
    %v1403 = vunpack.c.l.b16 %v204
    %v1404 = vunpack.c.h.b16 %v204
    %v1405 = vunpack.c.l.b16 %v205
    %v1406 = vunpack.c.h.b16 %v205
    %v1407 = vunpack.c.l.b16 %v206
    %v1408 = vunpack.c.h.b16 %v206
    %v1409 = vunpack.c.l.b16 %v207
    %v1410 = vunpack.c.h.b16 %v207
    %v1411 = vunpack.c.l.b16 %v208
    %v1412 = vunpack.c.h.b16 %v208
    %v1413 = vunpack.c.l.b16 %v209
    %v1414 = vunpack.c.h.b16 %v209
    %v1415 = vunpack.c.l.b16 %v210
    %v1416 = vunpack.c.h.b16 %v210
    %v1417 = vunpack.c.l.b16 %v211
    %v1418 = vunpack.c.h.b16 %v211
    %v1419 = vunpack.c.l.b16 %v212
    %v1420 = vunpack.c.h.b16 %v212
    %v1421 = vunpack.c.l.b16 %v213
    %v1422 = vunpack.c.h.b16 %v213
    %v1423 = vunpack.c.l.b16 %v214
    %v1424 = vunpack.c.h.b16 %v214
    %v1425 = vunpack.c.l.b16 %v215
    %v1426 = vunpack.c.h.b16 %v215
    %v1427 = vunpack.c.l.b16 %v216
    %v1428 = vunpack.c.h.b16 %v216
    %v1429 = vunpack.c.l.b16 %v217
    %v1430 = vunpack.c.h.b16 %v217
    %v1431 = vunpack.c.l.b16 %v218
    %v1432 = vunpack.c.h.b16 %v218
    %v1433 = vunpack.c.l.b16 %v219
    %v1434 = vunpack.c.h.b16 %v219
    %v1435 = vunpack.c.l.b16 %v220
    %v1436 = vunpack.c.h.b16 %v220
    %v1437 = vunpack.c.l.b16 %v221
    %v1438 = vunpack.c.h.b16 %v221
    %v1439 = vunpack.c.l.b16 %v222
    %v1440 = vunpack.c.h.b16 %v222
    %v1441 = vunpack.c.l.b16 %v223
    %v1442 = vunpack.c.h.b16 %v223
    %v1443 = vunpack.c.l.b16 %v224
    %v1444 = vunpack.c.h.b16 %v224
    %v1445 = vunpack.c.l.b16 %v225
    %v1446 = vunpack.c.h.b16 %v225
    %v1447 = vunpack.c.l.b16 %v226
    %v1448 = vunpack.c.h.b16 %v226
    %v1449 = vunpack.c.l.b16 %v227
    %v1450 = vunpack.c.h.b16 %v227
    %v1451 = vunpack.c.l.b16 %v228
    %v1452 = vunpack.c.h.b16 %v228
    %v1453 = vunpack.c.l.b16 %v229
    %v1454 = vunpack.c.h.b16 %v229
    %v1455 = vunpack.c.l.b16 %v230
    %v1456 = vunpack.c.h.b16 %v230
    %v1457 = vunpack.c.l.b16 %v231
    %v1458 = vunpack.c.h.b16 %v231
    %v1459 = vunpack.c.l.b16 %v232
    %v1460 = vunpack.c.h.b16 %v232
    %v1461 = vunpack.c.l.b16 %v233
    %v1462 = vunpack.c.h.b16 %v233
    %v1463 = vunpack.c.l.b16 %v234
    %v1464 = vunpack.c.h.b16 %v234
    %v1465 = vunpack.c.l.b16 %v235
    %v1466 = vunpack.c.h.b16 %v235
    %v1467 = vunpack.c.l.b16 %v236
    %v1468 = vunpack.c.h.b16 %v236
    %v1469 = vunpack.c.l.b16 %v237
    %v1470 = vunpack.c.h.b16 %v237
    %v1471 = vunpack.c.l.b16 %v238
    %v1472 = vunpack.c.h.b16 %v238
    %v1473 = vunpack.c.l.b16 %v239
    %v1474 = vunpack.c.h.b16 %v239
    %v1475 = vunpack.c.l.b16 %v240
    %v1476 = vunpack.c.h.b16 %v240
    %v1477 = vunpack.c.l.b16 %v241
    %v1478 = vunpack.c.h.b16 %v241
    %v1479 = vunpack.c.l.b16 %v242
    %v1480 = vunpack.c.h.b16 %v242
    %v1481 = vunpack.c.l.b16 %v243
    %v1482 = vunpack.c.h.b16 %v243
    %v1483 = vunpack.c.l.b16 %v244
    %v1484 = vunpack.c.h.b16 %v244
    %v1485 = vunpack.c.l.b16 %v245
    %v1486 = vunpack.c.h.b16 %v245
    %v1487 = vunpack.c.l.b16 %v246
    %v1488 = vunpack.c.h.b16 %v246
    %v1489 = vunpack.c.l.b16 %v247
    %v1490 = vunpack.c.h.b16 %v247
    %v1491 = vunpack.c.l.b16 %v248
    %v1492 = vunpack.c.h.b16 %v248
    %v1493 = vunpack.c.l.b16 %v249
    %v1494 = vunpack.c.h.b16 %v249
    %v1495 = vunpack.c.l.b16 %v250
    %v1496 = vunpack.c.h.b16 %v250
    %v1497 = vunpack.c.l.b16 %v251
    %v1498 = vunpack.c.h.b16 %v251
    %v1499 = vunpack.c.l.b16 %v252
    %v1500 = vunpack.c.h.b16 %v252
    %v1501 = vunpack.c.l.b16 %v253
    %v1502 = vunpack.c.h.b16 %v253
    %v1503 = vunpack.c.l.b16 %v254
    %v1504 = vunpack.c.h.b16 %v254
    %v1505 = vunpack.c.l.b16 %v255
    %v1506 = vunpack.c.h.b16 %v255
    %v1507 = vunpack.c.l.b16 %v256
    %v1508 = vunpack.c.h.b16 %v256
    %v1509 = vunpack.c.l.b16 %v257
    %v1510 = vunpack.c.h.b16 %v257
    %v1511 = vunpack.c.l.b16 %v258
    %v1512 = vunpack.c.h.b16 %v258
    %v1513 = vunpack.c.l.b16 %v259
    %v1514 = vunpack.c.h.b16 %v259
    %v1515 = vunpack.c.l.b16 %v260
    %v1516 = vunpack.c.h.b16 %v260
    %v1517 = vunpack.c.l.b16 %v261
    %v1518 = vunpack.c.h.b16 %v261
    %v1519 = vunpack.c.l.b16 %v262
    %v1520 = vunpack.c.h.b16 %v262
    %v1521 = vunpack.c.l.b16 %v263
    %v1522 = vunpack.c.h.b16 %v263
    %v1523 = vunpack.c.l.b16 %v264
    %v1524 = vunpack.c.h.b16 %v264
    %v1525 = vunpack.c.l.b16 %v265
    %v1526 = vunpack.c.h.b16 %v265
    %v1527 = vunpack.c.l.b16 %v266
    %v1528 = vunpack.c.h.b16 %v266
    %v1529 = vunpack.c.l.b16 %v267
    %v1530 = vunpack.c.h.b16 %v267
    %v1531 = vunpack.c.l.b16 %v268
    %v1532 = vunpack.c.h.b16 %v268
    %v1533 = vunpack.c.l.b16 %v269
    %v1534 = vunpack.c.h.b16 %v269
    %v1535 = vunpack.c.l.b16 %v270
    %v1536 = vunpack.c.h.b16 %v270
    %v1537 = vunpack.c.l.b16 %v271
    %v1538 = vunpack.c.h.b16 %v271
    %v1539 = vunpack.c.l.b16 %v272
    %v1540 = vunpack.c.h.b16 %v272
    %v1541 = vunpack.c.l.b16 %v273
    %v1542 = vunpack.c.h.b16 %v273
    %v1543 = vunpack.c.l.b16 %v274
    %v1544 = vunpack.c.h.b16 %v274
    %v1545 = vunpack.c.l.b16 %v275
    %v1546 = vunpack.c.h.b16 %v275
    %v1547 = vunpack.c.l.b16 %v276
    %v1548 = vunpack.c.h.b16 %v276
    %v1549 = vunpack.c.l.b16 %v277
    %v1550 = vunpack.c.h.b16 %v277
    %v1551 = vunpack.c.l.b16 %v278
    %v1552 = vunpack.c.h.b16 %v278
    %v1553 = vunpack.c.l.b16 %v279
    %v1554 = vunpack.c.h.b16 %v279
    %v1555 = vunpack.c.l.b16 %v280
    %v1556 = vunpack.c.h.b16 %v280
    %v1557 = vunpack.c.l.b16 %v281
    %v1558 = vunpack.c.h.b16 %v281
    %v1559 = vunpack.c.l.b16 %v282
    %v1560 = vunpack.c.h.b16 %v282
    %v1561 = vunpack.c.l.b16 %v283
    %v1562 = vunpack.c.h.b16 %v283
    %v1563 = vunpack.c.l.b16 %v284
    %v1564 = vunpack.c.h.b16 %v284
    %v1565 = vunpack.c.l.b16 %v285
    %v1566 = vunpack.c.h.b16 %v285
    %v1567 = vunpack.c.l.b16 %v286
    %v1568 = vunpack.c.h.b16 %v286
    %v1569 = vunpack.c.l.b16 %v287
    %v1570 = vunpack.c.h.b16 %v287
    %v1571 = vunpack.c.l.b16 %v288
    %v1572 = vunpack.c.h.b16 %v288
    %v1573 = vunpack.c.l.b16 %v289
    %v1574 = vunpack.c.h.b16 %v289
    %v1575 = vunpack.c.l.b16 %v290
    %v1576 = vunpack.c.h.b16 %v290
    %v1577 = vunpack.c.l.b16 %v291
    %v1578 = vunpack.c.h.b16 %v291
    %v1579 = vunpack.c.l.b16 %v292
    %v1580 = vunpack.c.h.b16 %v292
    %v1581 = vunpack.c.l.b16 %v293
    %v1582 = vunpack.c.h.b16 %v293
    %v1583 = vunpack.c.l.b16 %v294
    %v1584 = vunpack.c.h.b16 %v294
    %v1585 = vunpack.c.l.b16 %v295
    %v1586 = vunpack.c.h.b16 %v295
    %v1587 = vunpack.c.l.b16 %v296
    %v1588 = vunpack.c.h.b16 %v296
    %v1589 = vunpack.c.l.b16 %v297
    %v1590 = vunpack.c.h.b16 %v297
    %v1591 = vunpack.c.l.b16 %v298
    %v1592 = vunpack.c.h.b16 %v298
    %v1593 = vunpack.c.l.b16 %v299
    %v1594 = vunpack.c.h.b16 %v299
    %v1595 = vunpack.c.l.b16 %v300
    %v1596 = vunpack.c.h.b16 %v300
    %v1597 = vunpack.c.l.b16 %v301
    %v1598 = vunpack.c.h.b16 %v301
    %v1599 = vunpack.c.l.b16 %v302
    %v1600 = vunpack.c.h.b16 %v302
    %v1601 = vunpack.c.l.b16 %v303
    %v1602 = vunpack.c.h.b16 %v303
    %v1603 = vunpack.c.l.b16 %v304
    %v1604 = vunpack.c.h.b16 %v304
    %v1605 = vunpack.c.l.b16 %v305
    %v1606 = vunpack.c.h.b16 %v305
    %v1607 = vunpack.c.l.b16 %v306
    %v1608 = vunpack.c.h.b16 %v306
    %v1609 = vunpack.c.l.b16 %v307
    %v1610 = vunpack.c.h.b16 %v307
    %v1611 = vunpack.c.l.b16 %v308
    %v1612 = vunpack.c.h.b16 %v308
    %v1613 = vunpack.c.l.b16 %v309
    %v1614 = vunpack.c.h.b16 %v309
    %v1615 = vunpack.c.l.b16 %v310
    %v1616 = vunpack.c.h.b16 %v310
    %v1617 = vunpack.c.l.b16 %v311
    %v1618 = vunpack.c.h.b16 %v311
    %v1619 = vunpack.c.l.b16 %v312
    %v1620 = vunpack.c.h.b16 %v312
    %v1621 = vunpack.c.l.b16 %v313
    %v1622 = vunpack.c.h.b16 %v313
    %v1623 = vunpack.c.l.b16 %v314
    %v1624 = vunpack.c.h.b16 %v314
    %v1625 = vunpack.c.l.b16 %v315
    %v1626 = vunpack.c.h.b16 %v315
    %v1627 = vunpack.c.l.b16 %v316
    %v1628 = vunpack.c.h.b16 %v316
    %v1629 = vunpack.c.l.b16 %v317
    %v1630 = vunpack.c.h.b16 %v317
    %v1631 = vunpack.c.l.b16 %v318
    %v1632 = vunpack.c.h.b16 %v318
    %v1633 = vunpack.c.l.b16 %v319
    %v1634 = vunpack.c.h.b16 %v319
    %v1635 = vunpack.c.l.b16 %v320
    %v1636 = vunpack.c.h.b16 %v320
    %v1637 = vunpack.c.l.b16 %v321
    %v1638 = vunpack.c.h.b16 %v321
    %v1639 = vunpack.c.l.b16 %v322
    %v1640 = vunpack.c.h.b16 %v322
    %v1641 = vunpack.c.l.b16 %v323
    %v1642 = vunpack.c.h.b16 %v323
    %v1643 = vunpack.c.l.b16 %v324
    %v1644 = vunpack.c.h.b16 %v324
    %v1645 = vunpack.c.l.b16 %v325
    %v1646 = vunpack.c.h.b16 %v325
    %v1647 = vunpack.c.l.b16 %v326
    %v1648 = vunpack.c.h.b16 %v326
    %v1649 = vunpack.c.l.b16 %v327
    %v1650 = vunpack.c.h.b16 %v327
    %v1651 = vunpack.c.l.b16 %v328
    %v1652 = vunpack.c.h.b16 %v328
    %v1653 = vunpack.c.l.b16 %v329
    %v1654 = vunpack.c.h.b16 %v329
    %v1655 = vunpack.c.l.b16 %v330
    %v1656 = vunpack.c.h.b16 %v330
    %v1657 = vunpack.c.l.b16 %v331
    %v1658 = vunpack.c.h.b16 %v331
    %v1659 = vunpack.c.l.b16 %v332
    %v1660 = vunpack.c.h.b16 %v332
    %v1661 = vunpack.c.l.b16 %v333
    %v1662 = vunpack.c.h.b16 %v333
    %v1663 = vunpack.c.l.b16 %v334
    %v1664 = vunpack.c.h.b16 %v334
    %v1665 = vunpack.c.l.b16 %v335
    %v1666 = vunpack.c.h.b16 %v335
    %v1667 = vunpack.c.l.b16 %v336
    %v1668 = vunpack.c.h.b16 %v336
    %v1669 = vunpack.c.l.b16 %v337
    %v1670 = vunpack.c.h.b16 %v337
    %v1671 = vunpack.c.l.b16 %v338
    %v1672 = vunpack.c.h.b16 %v338
    %v1673 = vunpack.c.l.b16 %v339
    %v1674 = vunpack.c.h.b16 %v339
    %v1675 = vunpack.c.l.b16 %v340
    %v1676 = vunpack.c.h.b16 %v340
    %v1677 = vunpack.c.l.b16 %v341
    %v1678 = vunpack.c.h.b16 %v341
    %v1679 = vunpack.c.l.b16 %v342
    %v1680 = vunpack.c.h.b16 %v342
    %v1681 = vunpack.c.l.b16 %v343
    %v1682 = vunpack.c.h.b16 %v343
    %v1683 = vunpack.c.l.b16 %v344
    %v1684 = vunpack.c.h.b16 %v344
    %v1685 = vunpack.c.l.b16 %v345
    %v1686 = vunpack.c.h.b16 %v345
    %v1687 = vunpack.c.l.b16 %v346
    %v1688 = vunpack.c.h.b16 %v346
    %v1689 = vunpack.c.l.b16 %v347
    %v1690 = vunpack.c.h.b16 %v347
    %v1691 = vunpack.c.l.b16 %v348
    %v1692 = vunpack.c.h.b16 %v348
    %v1693 = vunpack.c.l.b16 %v349
    %v1694 = vunpack.c.h.b16 %v349
    %v1695 = vunpack.c.l.b16 %v350
    %v1696 = vunpack.c.h.b16 %v350
    %v1697 = vunpack.c.l.b16 %v351
    %v1698 = vunpack.c.h.b16 %v351
    %v1699 = vunpack.c.l.b16 %v352
    %v1700 = vunpack.c.h.b16 %v352
    %v1701 = vunpack.c.l.b16 %v353
    %v1702 = vunpack.c.h.b16 %v353
    %v1703 = vunpack.c.l.b16 %v354
    %v1704 = vunpack.c.h.b16 %v354
    %v1705 = vunpack.c.l.b16 %v355
    %v1706 = vunpack.c.h.b16 %v355
    %v1707 = vunpack.c.l.b16 %v356
    %v1708 = vunpack.c.h.b16 %v356
    %v1709 = vunpack.c.l.b16 %v357
    %v1710 = vunpack.c.h.b16 %v357
    %v1711 = vunpack.c.l.b16 %v358
    %v1712 = vunpack.c.h.b16 %v358
    %v1713 = vunpack.c.l.b16 %v359
    %v1714 = vunpack.c.h.b16 %v359
    %v1715 = vunpack.c.l.b16 %v360
    %v1716 = vunpack.c.h.b16 %v360
    %v1717 = vunpack.c.l.b16 %v361
    %v1718 = vunpack.c.h.b16 %v361
    %v1719 = vunpack.c.l.b16 %v362
    %v1720 = vunpack.c.h.b16 %v362
    %v1721 = vunpack.c.l.b16 %v363
    %v1722 = vunpack.c.h.b16 %v363
    %v1723 = vunpack.c.l.b16 %v364
    %v1724 = vunpack.c.h.b16 %v364
    %v1725 = vunpack.c.l.b16 %v365
    %v1726 = vunpack.c.h.b16 %v365
    %v1727 = vunpack.c.l.b16 %v366
    %v1728 = vunpack.c.h.b16 %v366
    %v1729 = vunpack.c.l.b16 %v367
    %v1730 = vunpack.c.h.b16 %v367
    %v1731 = vunpack.c.l.b16 %v368
    %v1732 = vunpack.c.h.b16 %v368
    %v1733 = vunpack.c.l.b16 %v369
    %v1734 = vunpack.c.h.b16 %v369
    %v1735 = vunpack.c.l.b16 %v370
    %v1736 = vunpack.c.h.b16 %v370
    %v1737 = vunpack.c.l.b16 %v371
    %v1738 = vunpack.c.h.b16 %v371
    %v1739 = vunpack.c.l.b16 %v372
    %v1740 = vunpack.c.h.b16 %v372
    %v1741 = vunpack.c.l.b16 %v373
    %v1742 = vunpack.c.h.b16 %v373
    %v1743 = vunpack.c.l.b16 %v374
    %v1744 = vunpack.c.h.b16 %v374
    %v1745 = vunpack.c.l.b16 %v375
    %v1746 = vunpack.c.h.b16 %v375
    %v1747 = vunpack.c.l.b16 %v376
    %v1748 = vunpack.c.h.b16 %v376
    %v1749 = vunpack.c.l.b16 %v377
    %v1750 = vunpack.c.h.b16 %v377
    %v1751 = vunpack.c.l.b16 %v378
    %v1752 = vunpack.c.h.b16 %v378
    %v1753 = vunpack.c.l.b16 %v379
    %v1754 = vunpack.c.h.b16 %v379
    %v1755 = vunpack.c.l.b16 %v380
    %v1756 = vunpack.c.h.b16 %v380
    %v1757 = vunpack.c.l.b16 %v381
    %v1758 = vunpack.c.h.b16 %v381
    %v1759 = vunpack.c.l.b16 %v382
    %v1760 = vunpack.c.h.b16 %v382
    %v1761 = vunpack.c.l.b16 %v383
    %v1762 = vunpack.c.h.b16 %v383
    %v1763 = vunpack.c.l.b16 %v384
    %v1764 = vunpack.c.h.b16 %v384
    %v1765 = vunpack.c.l.b16 %v385
    %v1766 = vunpack.c.h.b16 %v385
    %v1767 = vunpack.c.l.b16 %v386
    %v1768 = vunpack.c.h.b16 %v386
    %v1769 = vunpack.c.l.b16 %v387
    %v1770 = vunpack.c.h.b16 %v387
    %v1771 = vunpack.c.l.b16 %v388
    %v1772 = vunpack.c.h.b16 %v388
    %v1773 = vunpack.c.l.b16 %v389
    %v1774 = vunpack.c.h.b16 %v389
    %v1775 = vunpack.c.l.b16 %v390
    %v1776 = vunpack.c.h.b16 %v390
    %v1777 = vunpack.c.l.b16 %v391
    %v1778 = vunpack.c.h.b16 %v391
    %v1779 = vunpack.c.l.b16 %v392
    %v1780 = vunpack.c.h.b16 %v392
    %v1781 = vunpack.c.l.b16 %v393
    %v1782 = vunpack.c.h.b16 %v393
    %v1783 = vunpack.c.l.b16 %v394
    %v1784 = vunpack.c.h.b16 %v394
    %v1785 = vunpack.c.l.b16 %v395
    %v1786 = vunpack.c.h.b16 %v395
    %v1787 = vunpack.c.l.b16 %v396
    %v1788 = vunpack.c.h.b16 %v396
    %v1789 = vunpack.c.l.b16 %v397
    %v1790 = vunpack.c.h.b16 %v397
    %v1791 = vunpack.c.l.b16 %v398
    %v1792 = vunpack.c.h.b16 %v398
    %v1793 = vunpack.c.l.b16 %v399
    %v1794 = vunpack.c.h.b16 %v399
    %v1795 = vunpack.c.l.b16 %v400
    %v1796 = vunpack.c.h.b16 %v400
    %v1797 = vunpack.c.l.b16 %v401
    %v1798 = vunpack.c.h.b16 %v401
    %v1799 = vunpack.c.l.b16 %v402
    %v1800 = vunpack.c.h.b16 %v402
    %v1801 = vunpack.c.l.b16 %v403
    %v1802 = vunpack.c.h.b16 %v403
    %v1803 = vunpack.c.l.b16 %v404
    %v1804 = vunpack.c.h.b16 %v404
    %v1805 = vunpack.c.l.b16 %v405
    %v1806 = vunpack.c.h.b16 %v405
    %v1807 = vunpack.c.l.b16 %v406
    %v1808 = vunpack.c.h.b16 %v406
    %v1809 = vunpack.c.l.b16 %v407
    %v1810 = vunpack.c.h.b16 %v407
    %v1811 = vunpack.c.l.b16 %v408
    %v1812 = vunpack.c.h.b16 %v408
    %v1813 = vunpack.c.l.b16 %v409
    %v1814 = vunpack.c.h.b16 %v409
    %v1815 = vunpack.c.l.b16 %v410
    %v1816 = vunpack.c.h.b16 %v410
    %v1817 = vunpack.c.l.b16 %v411
    %v1818 = vunpack.c.h.b16 %v411
    %v1819 = vunpack.c.l.b16 %v412
    %v1820 = vunpack.c.h.b16 %v412
    %v1821 = vunpack.c.l.b16 %v413
    %v1822 = vunpack.c.h.b16 %v413
    %v1823 = vunpack.c.l.b16 %v414
    %v1824 = vunpack.c.h.b16 %v414
    %v1825 = vunpack.c.l.b16 %v415
    %v1826 = vunpack.c.h.b16 %v415
    %v1827 = vunpack.c.l.b16 %v416
    %v1828 = vunpack.c.h.b16 %v416
    %v1829 = vunpack.c.l.b16 %v417
    %v1830 = vunpack.c.h.b16 %v417
    %v1831 = vunpack.c.l.b16 %v418
    %v1832 = vunpack.c.h.b16 %v418
    %v1833 = vunpack.c.l.b16 %v419
    %v1834 = vunpack.c.h.b16 %v419
    %v1835 = vunpack.c.l.b16 %v420
    %v1836 = vunpack.c.h.b16 %v420
    %v1837 = vunpack.c.l.b16 %v421
    %v1838 = vunpack.c.h.b16 %v421
    %v1839 = vunpack.c.l.b16 %v422
    %v1840 = vunpack.c.h.b16 %v422
    %v1841 = vunpack.c.l.b16 %v423
    %v1842 = vunpack.c.h.b16 %v423
    %v1843 = vunpack.c.l.b16 %v424
    %v1844 = vunpack.c.h.b16 %v424
    %v1845 = vunpack.c.l.b16 %v425
    %v1846 = vunpack.c.h.b16 %v425
    %v1847 = vunpack.c.l.b16 %v426
    %v1848 = vunpack.c.h.b16 %v426
    %v1849 = vunpack.c.l.b16 %v427
    %v1850 = vunpack.c.h.b16 %v427
    %v1851 = vunpack.c.l.b16 %v428
    %v1852 = vunpack.c.h.b16 %v428
    %v1853 = vunpack.c.l.b16 %v429
    %v1854 = vunpack.c.h.b16 %v429
    %v1855 = vunpack.c.l.b16 %v430
    %v1856 = vunpack.c.h.b16 %v430
    %v1857 = vunpack.c.l.b16 %v431
    %v1858 = vunpack.c.h.b16 %v431
    %v1859 = vunpack.c.l.b16 %v432
    %v1860 = vunpack.c.h.b16 %v432
    %v1861 = vunpack.c.l.b16 %v433
    %v1862 = vunpack.c.h.b16 %v433
    %v1863 = vunpack.c.l.b16 %v434
    %v1864 = vunpack.c.h.b16 %v434
    %v1865 = vunpack.c.l.b16 %v435
    %v1866 = vunpack.c.h.b16 %v435
    %v1867 = vunpack.c.l.b16 %v436
    %v1868 = vunpack.c.h.b16 %v436
    %v1869 = vunpack.c.l.b16 %v437
    %v1870 = vunpack.c.h.b16 %v437
    %v1871 = vunpack.c.l.b16 %v438
    %v1872 = vunpack.c.h.b16 %v438
    %v1873 = vunpack.c.l.b16 %v439
    %v1874 = vunpack.c.h.b16 %v439
    %v1875 = vunpack.c.l.b16 %v440
    %v1876 = vunpack.c.h.b16 %v440
    %v1877 = vunpack.c.l.b16 %v441
    %v1878 = vunpack.c.h.b16 %v441
    %v1879 = vunpack.c.l.b16 %v442
    %v1880 = vunpack.c.h.b16 %v442
    %v1881 = vunpack.c.l.b16 %v443
    %v1882 = vunpack.c.h.b16 %v443
    %v1883 = vunpack.c.l.b16 %v444
    %v1884 = vunpack.c.h.b16 %v444
    %v1885 = vunpack.c.l.b16 %v445
    %v1886 = vunpack.c.h.b16 %v445
    %v1887 = vunpack.c.l.b16 %v446
    %v1888 = vunpack.c.h.b16 %v446
    %v1889 = vunpack.c.l.b16 %v447
    %v1890 = vunpack.c.h.b16 %v447
    %v1891 = vunpack.c.l.b16 %v448
    %v1892 = vunpack.c.h.b16 %v448
    %v1893 = vunpack.c.l.b16 %v449
    %v1894 = vunpack.c.h.b16 %v449
    %v1895 = vunpack.c.l.b16 %v450
    %v1896 = vunpack.c.h.b16 %v450
    %v1897 = vunpack.c.l.b16 %v451
    %v1898 = vunpack.c.h.b16 %v451
    %v1899 = vunpack.c.l.b16 %v452
    %v1900 = vunpack.c.h.b16 %v452
    %v1901 = vunpack.c.l.b16 %v453
    %v1902 = vunpack.c.h.b16 %v453
    %v1903 = vunpack.c.l.b16 %v454
    %v1904 = vunpack.c.h.b16 %v454
    %v1905 = vunpack.c.l.b16 %v455
    %v1906 = vunpack.c.h.b16 %v455
    %v1907 = vunpack.c.l.b16 %v456
    %v1908 = vunpack.c.h.b16 %v456
    %v1909 = vunpack.c.l.b16 %v457
    %v1910 = vunpack.c.h.b16 %v457
    %v1911 = vunpack.c.l.b16 %v458
    %v1912 = vunpack.c.h.b16 %v458
    %v1913 = vunpack.c.l.b16 %v459
    %v1914 = vunpack.c.h.b16 %v459
    %v1915 = vunpack.c.l.b16 %v460
    %v1916 = vunpack.c.h.b16 %v460
    %v1917 = vunpack.c.l.b16 %v461
    %v1918 = vunpack.c.h.b16 %v461
    %v1919 = vunpack.c.l.b16 %v462
    %v1920 = vunpack.c.h.b16 %v462
    %v1921 = vunpack.c.l.b16 %v463
    %v1922 = vunpack.c.h.b16 %v463
    %v1923 = vunpack.c.l.b16 %v464
    %v1924 = vunpack.c.h.b16 %v464
    %v1925 = vunpack.c.l.b16 %v465
    %v1926 = vunpack.c.h.b16 %v465
    %v1927 = vunpack.c.l.b16 %v466
    %v1928 = vunpack.c.h.b16 %v466
    %v1929 = vunpack.c.l.b16 %v467
    %v1930 = vunpack.c.h.b16 %v467
    %v1931 = vunpack.c.l.b16 %v468
    %v1932 = vunpack.c.h.b16 %v468
    %v1933 = vunpack.c.l.b16 %v469
    %v1934 = vunpack.c.h.b16 %v469
    %v1935 = vunpack.c.l.b16 %v470
    %v1936 = vunpack.c.h.b16 %v470
    %v1937 = vunpack.c.l.b16 %v471
    %v1938 = vunpack.c.h.b16 %v471
    %v1939 = vunpack.c.l.b16 %v472
    %v1940 = vunpack.c.h.b16 %v472
    %v1941 = vunpack.c.l.b16 %v473
    %v1942 = vunpack.c.h.b16 %v473
    %v1943 = vunpack.c.l.b16 %v474
    %v1944 = vunpack.c.h.b16 %v474
    %v1945 = vunpack.c.l.b16 %v475
    %v1946 = vunpack.c.h.b16 %v475
    %v1947 = vunpack.c.l.b16 %v476
    %v1948 = vunpack.c.h.b16 %v476
    %v1949 = vunpack.c.l.b16 %v477
    %v1950 = vunpack.c.h.b16 %v477
    %v1951 = vunpack.c.l.b16 %v478
    %v1952 = vunpack.c.h.b16 %v478
    %v1953 = vunpack.c.l.b16 %v479
    %v1954 = vunpack.c.h.b16 %v479
    %v1955 = vunpack.c.l.b16 %v480
    %v1956 = vunpack.c.h.b16 %v480
    %v1957 = vunpack.c.l.b16 %v481
    %v1958 = vunpack.c.h.b16 %v481
    %v1959 = vunpack.c.l.b16 %v482
    %v1960 = vunpack.c.h.b16 %v482
    %v1961 = vunpack.c.l.b16 %v483
    %v1962 = vunpack.c.h.b16 %v483
    %v1963 = vunpack.c.l.b16 %v484
    %v1964 = vunpack.c.h.b16 %v484
    %v1965 = vunpack.c.l.b16 %v485
    %v1966 = vunpack.c.h.b16 %v485
    %v1967 = vunpack.c.l.b16 %v486
    %v1968 = vunpack.c.h.b16 %v486
    %v1969 = vunpack.c.l.b16 %v487
    %v1970 = vunpack.c.h.b16 %v487
    %v1971 = vunpack.c.l.b16 %v488
    %v1972 = vunpack.c.h.b16 %v488
    %v1973 = vunpack.c.l.b16 %v489
    %v1974 = vunpack.c.h.b16 %v489
    %v1975 = vunpack.c.l.b16 %v490
    %v1976 = vunpack.c.h.b16 %v490
    %v1977 = vunpack.c.l.b16 %v491
    %v1978 = vunpack.c.h.b16 %v491
    %v1979 = vunpack.c.l.b16 %v492
    %v1980 = vunpack.c.h.b16 %v492
    %v1981 = vunpack.c.l.b16 %v493
    %v1982 = vunpack.c.h.b16 %v493
    %v1983 = vunpack.c.l.b16 %v494
    %v1984 = vunpack.c.h.b16 %v494
    %v1985 = vunpack.c.l.b16 %v495
    %v1986 = vunpack.c.h.b16 %v495
    %v1987 = vunpack.c.l.b16 %v496
    %v1988 = vunpack.c.h.b16 %v496
    %v1989 = vunpack.c.l.b16 %v497
    %v1990 = vunpack.c.h.b16 %v497
    %v1991 = vunpack.c.l.b16 %v498
    %v1992 = vunpack.c.h.b16 %v498
    %v1993 = vunpack.c.l.b16 %v499
    %v1994 = vunpack.c.h.b16 %v499
    %v1995 = vunpack.c.l.b16 %v500
    %v1996 = vunpack.c.h.b16 %v500
    %v1997 = vunpack.c.l.b16 %v501
    %v1998 = vunpack.c.h.b16 %v501
    %v1999 = vunpack.c.l.b16 %v502
    %v2000 = vunpack.c.h.b16 %v502
    %v2001 = vunpack.c.l.b16 %v503
    %v2002 = vunpack.c.h.b16 %v503
    %v2003 = vunpack.c.l.b16 %v504
    %v2004 = vunpack.c.h.b16 %v504
    %v2005 = vunpack.c.l.b16 %v505
    %v2006 = vunpack.c.h.b16 %v505
    %v2007 = vunpack.c.l.b16 %v506
    %v2008 = vunpack.c.h.b16 %v506
    %v2009 = vunpack.c.l.b16 %v507
    %v2010 = vunpack.c.h.b16 %v507
    %v2011 = vunpack.c.l.b16 %v508
    %v2012 = vunpack.c.h.b16 %v508
    %v2013 = vunpack.c.l.b16 %v509
    %v2014 = vunpack.c.h.b16 %v509
    %v2015 = vunpack.c.l.b16 %v510
    %v2016 = vunpack.c.h.b16 %v510
    %v2017 = vunpack.c.l.b16 %v511
    %v2018 = vunpack.c.h.b16 %v511
    %v2019 = vunpack.c.l.b16 %v512
    %v2020 = vunpack.c.h.b16 %v512
    %v2021 = vunpack.c.l.b16 %v513
    %v2022 = vunpack.c.h.b16 %v513
    %v2023 = vunpack.c.l.b16 %v514
    %v2024 = vunpack.c.h.b16 %v514
    %v2025 = vunpack.c.l.b16 %v515
    %v2026 = vunpack.c.h.b16 %v515
    %v2027 = vunpack.c.l.b16 %v516
    %v2028 = vunpack.c.h.b16 %v516
    %v2029 = vunpack.c.l.b16 %v517
    %v2030 = vunpack.c.h.b16 %v517
    %v2031 = vunpack.c.l.b16 %v518
    %v2032 = vunpack.c.h.b16 %v518
    %v2033 = vunpack.c.l.b16 %v519
    %v2034 = vunpack.c.h.b16 %v519
    %v2035 = vunpack.c.l.b16 %v520
    %v2036 = vunpack.c.h.b16 %v520
    %v2037 = vunpack.c.l.b16 %v521
    %v2038 = vunpack.c.h.b16 %v521
    %v2039 = vunpack.c.l.b16 %v522
    %v2040 = vunpack.c.h.b16 %v522
    %v2041 = vunpack.c.l.b16 %v523
    %v2042 = vunpack.c.h.b16 %v523
    %v2043 = vunpack.c.l.b16 %v524
    %v2044 = vunpack.c.h.b16 %v524
    %v2045 = vunpack.c.l.b16 %v525
    %v2046 = vunpack.c.h.b16 %v525
    %v2047 = vunpack.c.l.b16 %v526
    %v2048 = vunpack.c.h.b16 %v526
    %v2049 = vunpack.c.l.b16 %v527
    %v2050 = vunpack.c.h.b16 %v527
    %v2051 = vunpack.c.l.b16 %v528
    %v2052 = vunpack.c.h.b16 %v528
    %v2053 = vunpack.c.l.b16 %v529
    %v2054 = vunpack.c.h.b16 %v529
    %v2055 = vunpack.c.l.b16 %v530
    %v2056 = vunpack.c.h.b16 %v530
    %v2057 = vunpack.c.l.b16 %v531
    %v2058 = vunpack.c.h.b16 %v531
    %v2059 = vunpack.c.l.b16 %v532
    %v2060 = vunpack.c.h.b16 %v532
    %v2061 = vunpack.c.l.b16 %v533
    %v2062 = vunpack.c.h.b16 %v533
    %v2063 = vunpack.c.l.b16 %v534
    %v2064 = vunpack.c.h.b16 %v534
    %v2065 = vunpack.c.l.b16 %v535
    %v2066 = vunpack.c.h.b16 %v535
    %v2067 = vunpack.c.l.b16 %v536
    %v2068 = vunpack.c.h.b16 %v536
    %v2069 = vunpack.c.l.b16 %v537
    %v2070 = vunpack.c.h.b16 %v537
    %v2071 = vunpack.c.l.b16 %v538
    %v2072 = vunpack.c.h.b16 %v538
    %v2073 = vunpack.c.l.b16 %v539
    %v2074 = vunpack.c.h.b16 %v539
    %v2075 = vunpack.c.l.b16 %v540
    %v2076 = vunpack.c.h.b16 %v540
    %v2077 = vunpack.c.l.b16 %v541
    %v2078 = vunpack.c.h.b16 %v541
    %v2079 = vunpack.c.l.b16 %v542
    %v2080 = vunpack.c.h.b16 %v542
    %v2081 = vunpack.c.l.b16 %v543
    %v2082 = vunpack.c.h.b16 %v543
    %v2083 = vunpack.c.l.b16 %v544
    %v2084 = vunpack.c.h.b16 %v544
    %v2085 = vunpack.c.l.b16 %v545
    %v2086 = vunpack.c.h.b16 %v545
    %v2087 = vunpack.c.l.b16 %v546
    %v2088 = vunpack.c.h.b16 %v546
    %v2089 = vunpack.c.l.b16 %v547
    %v2090 = vunpack.c.h.b16 %v547
    %v2091 = vunpack.c.l.b16 %v548
    %v2092 = vunpack.c.h.b16 %v548
    %v2093 = vunpack.c.l.b16 %v549
    %v2094 = vunpack.c.h.b16 %v549
    %v2095 = vunpack.c.l.b16 %v550
    %v2096 = vunpack.c.h.b16 %v550
    %v2097 = vunpack.c.l.b16 %v551
    %v2098 = vunpack.c.h.b16 %v551
    %v2099 = vunpack.c.l.b16 %v552
    %v2100 = vunpack.c.h.b16 %v552
    %v2101 = vunpack.c.l.b16 %v553
    %v2102 = vunpack.c.h.b16 %v553
    %v2103 = vunpack.c.l.b16 %v554
    %v2104 = vunpack.c.h.b16 %v554
    %v2105 = vunpack.c.l.b16 %v555
    %v2106 = vunpack.c.h.b16 %v555
    %v2107 = vunpack.c.l.b16 %v556
    %v2108 = vunpack.c.h.b16 %v556
    %v2109 = vunpack.c.l.b16 %v557
    %v2110 = vunpack.c.h.b16 %v557
    %v2111 = vunpack.c.l.b16 %v558
    %v2112 = vunpack.c.h.b16 %v558
    %v2113 = vunpack.c.l.b16 %v559
    %v2114 = vunpack.c.h.b16 %v559
    %v2115 = vunpack.c.l.b16 %v560
    %v2116 = vunpack.c.h.b16 %v560
    %v2117 = vunpack.c.l.b16 %v561
    %v2118 = vunpack.c.h.b16 %v561
    %v2119 = vunpack.c.l.b16 %v562
    %v2120 = vunpack.c.h.b16 %v562
    %v2121 = vunpack.c.l.b16 %v563
    %v2122 = vunpack.c.h.b16 %v563
    %v2123 = vunpack.c.l.b16 %v564
    %v2124 = vunpack.c.h.b16 %v564
    %v2125 = vunpack.c.l.b16 %v565
    %v2126 = vunpack.c.h.b16 %v565
    %v2127 = vunpack.c.l.b16 %v566
    %v2128 = vunpack.c.h.b16 %v566
    %v2129 = vunpack.c.l.b16 %v567
    %v2130 = vunpack.c.h.b16 %v567
    %v2131 = vunpack.c.l.b16 %v568
    %v2132 = vunpack.c.h.b16 %v568
    %v2133 = vunpack.c.l.b16 %v569
    %v2134 = vunpack.c.h.b16 %v569
    %v2135 = vunpack.c.l.b16 %v570
    %v2136 = vunpack.c.h.b16 %v570
    %v2137 = vunpack.c.l.b16 %v571
    %v2138 = vunpack.c.h.b16 %v571
    %v2139 = vunpack.c.l.b16 %v572
    %v2140 = vunpack.c.h.b16 %v572
    %v2141 = vunpack.c.l.b16 %v573
    %v2142 = vunpack.c.h.b16 %v573
    %v2143 = vunpack.c.l.b16 %v574
    %v2144 = vunpack.c.h.b16 %v574
    %v2145 = vunpack.c.l.b16 %v575
    %v2146 = vunpack.c.h.b16 %v575
    %v2147 = vunpack.c.l.b16 %v576
    %v2148 = vunpack.c.h.b16 %v576
    %v2149 = vunpack.c.l.b16 %v577
    %v2150 = vunpack.c.h.b16 %v577
    %v2151 = vunpack.c.l.b16 %v578
    %v2152 = vunpack.c.h.b16 %v578
    %v2153 = vunpack.c.l.b16 %v579
    %v2154 = vunpack.c.h.b16 %v579
    %v2155 = vunpack.c.l.b16 %v580
    %v2156 = vunpack.c.h.b16 %v580
    %v2157 = vunpack.c.l.b16 %v581
    %v2158 = vunpack.c.h.b16 %v581
    %v2159 = vunpack.c.l.b16 %v582
    %v2160 = vunpack.c.h.b16 %v582
    %v2161 = vpack.c.b16 %v1145, %v1137
    %v2162 = vpack.c.b16 %v1146, %v1138
    %v2163 = vpack.c.b16 %v1147, %v1139
    %v2164 = vpack.c.b16 %v1148, %v1140
    %v2165 = vpack.c.b16 %v1149, %v1141
    %v2166 = vpack.c.b16 %v1150, %v1142
    %v2167 = vpack.c.b16 %v1151, %v1143
    %v2168 = vpack.c.b16 %v1152, %v1144
    %v2169 = vpack.c.b16 %v1161, %v1153
    %v2170 = vpack.c.b16 %v1162, %v1154
    %v2171 = vpack.c.b16 %v1163, %v1155
    %v2172 = vpack.c.b16 %v1164, %v1156
    %v2173 = vpack.c.b16 %v1165, %v1157
    %v2174 = vpack.c.b16 %v1166, %v1158
    %v2175 = vpack.c.b16 %v1167, %v1159
    %v2176 = vpack.c.b16 %v1168, %v1160
    %v2177 = vpack.c.b16 %v1177, %v1169
    %v2178 = vpack.c.b16 %v1178, %v1170
    %v2179 = vpack.c.b16 %v1179, %v1171
    %v2180 = vpack.c.b16 %v1180, %v1172
    %v2181 = vpack.c.b16 %v1181, %v1173
    %v2182 = vpack.c.b16 %v1182, %v1174
    %v2183 = vpack.c.b16 %v1183, %v1175
    %v2184 = vpack.c.b16 %v1184, %v1176
    %v2185 = vpack.c.b16 %v1193, %v1185
    %v2186 = vpack.c.b16 %v1194, %v1186
    %v2187 = vpack.c.b16 %v1195, %v1187
    %v2188 = vpack.c.b16 %v1196, %v1188
    %v2189 = vpack.c.b16 %v1197, %v1189
    %v2190 = vpack.c.b16 %v1198, %v1190
    %v2191 = vpack.c.b16 %v1199, %v1191
    %v2192 = vpack.c.b16 %v1200, %v1192
    %v2193 = vpack.c.b16 %v1209, %v1201
    %v2194 = vpack.c.b16 %v1210, %v1202
    %v2195 = vpack.c.b16 %v1211, %v1203
    %v2196 = vpack.c.b16 %v1212, %v1204
    %v2197 = vpack.c.b16 %v1213, %v1205
    %v2198 = vpack.c.b16 %v1214, %v1206
    %v2199 = vpack.c.b16 %v1215, %v1207
    %v2200 = vpack.c.b16 %v1216, %v1208
    %v2201 = vpack.c.b16 %v1225, %v1217
    %v2202 = vpack.c.b16 %v1226, %v1218
    %v2203 = vpack.c.b16 %v1227, %v1219
    %v2204 = vpack.c.b16 %v1228, %v1220
    %v2205 = vpack.c.b16 %v1229, %v1221
    %v2206 = vpack.c.b16 %v1230, %v1222
    %v2207 = vpack.c.b16 %v1231, %v1223
    %v2208 = vpack.c.b16 %v1232, %v1224
    %v2209 = vpack.c.b16 %v1241, %v1233
    %v2210 = vpack.c.b16 %v1242, %v1234
    %v2211 = vpack.c.b16 %v1243, %v1235
    %v2212 = vpack.c.b16 %v1244, %v1236
    %v2213 = vpack.c.b16 %v1245, %v1237
    %v2214 = vpack.c.b16 %v1246, %v1238
    %v2215 = vpack.c.b16 %v1247, %v1239
    %v2216 = vpack.c.b16 %v1248, %v1240
    %v2217 = vpack.c.b16 %v1257, %v1249
    %v2218 = vpack.c.b16 %v1258, %v1250
    %v2219 = vpack.c.b16 %v1259, %v1251
    %v2220 = vpack.c.b16 %v1260, %v1252
    %v2221 = vpack.c.b16 %v1261, %v1253
    %v2222 = vpack.c.b16 %v1262, %v1254
    %v2223 = vpack.c.b16 %v1263, %v1255
    %v2224 = vpack.c.b16 %v1264, %v1256
    %v2225 = vpack.c.b16 %v1273, %v1265
    %v2226 = vpack.c.b16 %v1274, %v1266
    %v2227 = vpack.c.b16 %v1275, %v1267
    %v2228 = vpack.c.b16 %v1276, %v1268
    %v2229 = vpack.c.b16 %v1277, %v1269
    %v2230 = vpack.c.b16 %v1278, %v1270
    %v2231 = vpack.c.b16 %v1279, %v1271
    %v2232 = vpack.c.b16 %v1280, %v1272
    %v2233 = vpack.c.b16 %v1289, %v1281
    %v2234 = vpack.c.b16 %v1290, %v1282
    %v2235 = vpack.c.b16 %v1291, %v1283
    %v2236 = vpack.c.b16 %v1292, %v1284
    %v2237 = vpack.c.b16 %v1293, %v1285
    %v2238 = vpack.c.b16 %v1294, %v1286
    %v2239 = vpack.c.b16 %v1295, %v1287
    %v2240 = vpack.c.b16 %v1296, %v1288
    %v2241 = vpack.c.b16 %v1305, %v1297
    %v2242 = vpack.c.b16 %v1306, %v1298
    %v2243 = vpack.c.b16 %v1307, %v1299
    %v2244 = vpack.c.b16 %v1308, %v1300
    %v2245 = vpack.c.b16 %v1309, %v1301
    %v2246 = vpack.c.b16 %v1310, %v1302
    %v2247 = vpack.c.b16 %v1311, %v1303
    %v2248 = vpack.c.b16 %v1312, %v1304
    %v2249 = vpack.c.b16 %v1321, %v1313
    %v2250 = vpack.c.b16 %v1322, %v1314
    %v2251 = vpack.c.b16 %v1323, %v1315
    %v2252 = vpack.c.b16 %v1324, %v1316
    %v2253 = vpack.c.b16 %v1325, %v1317
    %v2254 = vpack.c.b16 %v1326, %v1318
    %v2255 = vpack.c.b16 %v1327, %v1319
    %v2256 = vpack.c.b16 %v1328, %v1320
    %v2257 = vpack.c.b16 %v1337, %v1329
    %v2258 = vpack.c.b16 %v1338, %v1330
    %v2259 = vpack.c.b16 %v1339, %v1331
    %v2260 = vpack.c.b16 %v1340, %v1332
    %v2261 = vpack.c.b16 %v1341, %v1333
    %v2262 = vpack.c.b16 %v1342, %v1334
    %v2263 = vpack.c.b16 %v1343, %v1335
    %v2264 = vpack.c.b16 %v1344, %v1336
    %v2265 = vpack.c.b16 %v1353, %v1345
    %v2266 = vpack.c.b16 %v1354, %v1346
    %v2267 = vpack.c.b16 %v1355, %v1347
    %v2268 = vpack.c.b16 %v1356, %v1348
    %v2269 = vpack.c.b16 %v1357, %v1349
    %v2270 = vpack.c.b16 %v1358, %v1350
    %v2271 = vpack.c.b16 %v1359, %v1351
    %v2272 = vpack.c.b16 %v1360, %v1352
    %v2273 = vpack.c.b16 %v1369, %v1361
    %v2274 = vpack.c.b16 %v1370, %v1362
    %v2275 = vpack.c.b16 %v1371, %v1363
    %v2276 = vpack.c.b16 %v1372, %v1364
    %v2277 = vpack.c.b16 %v1373, %v1365
    %v2278 = vpack.c.b16 %v1374, %v1366
    %v2279 = vpack.c.b16 %v1375, %v1367
    %v2280 = vpack.c.b16 %v1376, %v1368
    %v2281 = vpack.c.b16 %v1385, %v1377
    %v2282 = vpack.c.b16 %v1386, %v1378
    %v2283 = vpack.c.b16 %v1387, %v1379
    %v2284 = vpack.c.b16 %v1388, %v1380
    %v2285 = vpack.c.b16 %v1389, %v1381
    %v2286 = vpack.c.b16 %v1390, %v1382
    %v2287 = vpack.c.b16 %v1391, %v1383
    %v2288 = vpack.c.b16 %v1392, %v1384
    %v2289 = vpack.c.b16 %v1401, %v1393
    %v2290 = vpack.c.b16 %v1402, %v1394
    %v2291 = vpack.c.b16 %v1403, %v1395
    %v2292 = vpack.c.b16 %v1404, %v1396
    %v2293 = vpack.c.b16 %v1405, %v1397
    %v2294 = vpack.c.b16 %v1406, %v1398
    %v2295 = vpack.c.b16 %v1407, %v1399
    %v2296 = vpack.c.b16 %v1408, %v1400
    %v2297 = vpack.c.b16 %v1417, %v1409
    %v2298 = vpack.c.b16 %v1418, %v1410
    %v2299 = vpack.c.b16 %v1419, %v1411
    %v2300 = vpack.c.b16 %v1420, %v1412
    %v2301 = vpack.c.b16 %v1421, %v1413
    %v2302 = vpack.c.b16 %v1422, %v1414
    %v2303 = vpack.c.b16 %v1423, %v1415
    %v2304 = vpack.c.b16 %v1424, %v1416
    %v2305 = vpack.c.b16 %v1433, %v1425
    %v2306 = vpack.c.b16 %v1434, %v1426
    %v2307 = vpack.c.b16 %v1435, %v1427
    %v2308 = vpack.c.b16 %v1436, %v1428
    %v2309 = vpack.c.b16 %v1437, %v1429
    %v2310 = vpack.c.b16 %v1438, %v1430
    %v2311 = vpack.c.b16 %v1439, %v1431
    %v2312 = vpack.c.b16 %v1440, %v1432
    %v2313 = vpack.c.b16 %v1449, %v1441
    %v2314 = vpack.c.b16 %v1450, %v1442
    %v2315 = vpack.c.b16 %v1451, %v1443
    %v2316 = vpack.c.b16 %v1452, %v1444
    %v2317 = vpack.c.b16 %v1453, %v1445
    %v2318 = vpack.c.b16 %v1454, %v1446
    %v2319 = vpack.c.b16 %v1455, %v1447
    %v2320 = vpack.c.b16 %v1456, %v1448
    %v2321 = vpack.c.b16 %v1465, %v1457
    %v2322 = vpack.c.b16 %v1466, %v1458
    %v2323 = vpack.c.b16 %v1467, %v1459
    %v2324 = vpack.c.b16 %v1468, %v1460
    %v2325 = vpack.c.b16 %v1469, %v1461
    %v2326 = vpack.c.b16 %v1470, %v1462
    %v2327 = vpack.c.b16 %v1471, %v1463
    %v2328 = vpack.c.b16 %v1472, %v1464
    %v2329 = vpack.c.b16 %v1481, %v1473
    %v2330 = vpack.c.b16 %v1482, %v1474
    %v2331 = vpack.c.b16 %v1483, %v1475
    %v2332 = vpack.c.b16 %v1484, %v1476
    %v2333 = vpack.c.b16 %v1485, %v1477
    %v2334 = vpack.c.b16 %v1486, %v1478
    %v2335 = vpack.c.b16 %v1487, %v1479
    %v2336 = vpack.c.b16 %v1488, %v1480
    %v2337 = vpack.c.b16 %v1497, %v1489
    %v2338 = vpack.c.b16 %v1498, %v1490
    %v2339 = vpack.c.b16 %v1499, %v1491
    %v2340 = vpack.c.b16 %v1500, %v1492
    %v2341 = vpack.c.b16 %v1501, %v1493
    %v2342 = vpack.c.b16 %v1502, %v1494
    %v2343 = vpack.c.b16 %v1503, %v1495
    %v2344 = vpack.c.b16 %v1504, %v1496
    %v2345 = vpack.c.b16 %v1513, %v1505
    %v2346 = vpack.c.b16 %v1514, %v1506
    %v2347 = vpack.c.b16 %v1515, %v1507
    %v2348 = vpack.c.b16 %v1516, %v1508
    %v2349 = vpack.c.b16 %v1517, %v1509
    %v2350 = vpack.c.b16 %v1518, %v1510
    %v2351 = vpack.c.b16 %v1519, %v1511
    %v2352 = vpack.c.b16 %v1520, %v1512
    %v2353 = vpack.c.b16 %v1529, %v1521
    %v2354 = vpack.c.b16 %v1530, %v1522
    %v2355 = vpack.c.b16 %v1531, %v1523
    %v2356 = vpack.c.b16 %v1532, %v1524
    %v2357 = vpack.c.b16 %v1533, %v1525
    %v2358 = vpack.c.b16 %v1534, %v1526
    %v2359 = vpack.c.b16 %v1535, %v1527
    %v2360 = vpack.c.b16 %v1536, %v1528
    %v2361 = vpack.c.b16 %v1545, %v1537
    %v2362 = vpack.c.b16 %v1546, %v1538
    %v2363 = vpack.c.b16 %v1547, %v1539
    %v2364 = vpack.c.b16 %v1548, %v1540
    %v2365 = vpack.c.b16 %v1549, %v1541
    %v2366 = vpack.c.b16 %v1550, %v1542
    %v2367 = vpack.c.b16 %v1551, %v1543
    %v2368 = vpack.c.b16 %v1552, %v1544
    %v2369 = vpack.c.b16 %v1561, %v1553
    %v2370 = vpack.c.b16 %v1562, %v1554
    %v2371 = vpack.c.b16 %v1563, %v1555
    %v2372 = vpack.c.b16 %v1564, %v1556
    %v2373 = vpack.c.b16 %v1565, %v1557
    %v2374 = vpack.c.b16 %v1566, %v1558
    %v2375 = vpack.c.b16 %v1567, %v1559
    %v2376 = vpack.c.b16 %v1568, %v1560
    %v2377 = vpack.c.b16 %v1577, %v1569
    %v2378 = vpack.c.b16 %v1578, %v1570
    %v2379 = vpack.c.b16 %v1579, %v1571
    %v2380 = vpack.c.b16 %v1580, %v1572
    %v2381 = vpack.c.b16 %v1581, %v1573
    %v2382 = vpack.c.b16 %v1582, %v1574
    %v2383 = vpack.c.b16 %v1583, %v1575
    %v2384 = vpack.c.b16 %v1584, %v1576
    %v2385 = vpack.c.b16 %v1593, %v1585
    %v2386 = vpack.c.b16 %v1594, %v1586
    %v2387 = vpack.c.b16 %v1595, %v1587
    %v2388 = vpack.c.b16 %v1596, %v1588
    %v2389 = vpack.c.b16 %v1597, %v1589
    %v2390 = vpack.c.b16 %v1598, %v1590
    %v2391 = vpack.c.b16 %v1599, %v1591
    %v2392 = vpack.c.b16 %v1600, %v1592
    %v2393 = vpack.c.b16 %v1609, %v1601
    %v2394 = vpack.c.b16 %v1610, %v1602
    %v2395 = vpack.c.b16 %v1611, %v1603
    %v2396 = vpack.c.b16 %v1612, %v1604
    %v2397 = vpack.c.b16 %v1613, %v1605
    %v2398 = vpack.c.b16 %v1614, %v1606
    %v2399 = vpack.c.b16 %v1615, %v1607
    %v2400 = vpack.c.b16 %v1616, %v1608
    %v2401 = vpack.c.b16 %v1625, %v1617
    %v2402 = vpack.c.b16 %v1626, %v1618
    %v2403 = vpack.c.b16 %v1627, %v1619
    %v2404 = vpack.c.b16 %v1628, %v1620
    %v2405 = vpack.c.b16 %v1629, %v1621
    %v2406 = vpack.c.b16 %v1630, %v1622
    %v2407 = vpack.c.b16 %v1631, %v1623
    %v2408 = vpack.c.b16 %v1632, %v1624
    %v2409 = vpack.c.b16 %v1641, %v1633
    %v2410 = vpack.c.b16 %v1642, %v1634
    %v2411 = vpack.c.b16 %v1643, %v1635
    %v2412 = vpack.c.b16 %v1644, %v1636
    %v2413 = vpack.c.b16 %v1645, %v1637
    %v2414 = vpack.c.b16 %v1646, %v1638
    %v2415 = vpack.c.b16 %v1647, %v1639
    %v2416 = vpack.c.b16 %v1648, %v1640
    %v2417 = vpack.c.b16 %v1657, %v1649
    %v2418 = vpack.c.b16 %v1658, %v1650
    %v2419 = vpack.c.b16 %v1659, %v1651
    %v2420 = vpack.c.b16 %v1660, %v1652
    %v2421 = vpack.c.b16 %v1661, %v1653
    %v2422 = vpack.c.b16 %v1662, %v1654
    %v2423 = vpack.c.b16 %v1663, %v1655
    %v2424 = vpack.c.b16 %v1664, %v1656
    %v2425 = vpack.c.b16 %v1673, %v1665
    %v2426 = vpack.c.b16 %v1674, %v1666
    %v2427 = vpack.c.b16 %v1675, %v1667
    %v2428 = vpack.c.b16 %v1676, %v1668
    %v2429 = vpack.c.b16 %v1677, %v1669
    %v2430 = vpack.c.b16 %v1678, %v1670
    %v2431 = vpack.c.b16 %v1679, %v1671
    %v2432 = vpack.c.b16 %v1680, %v1672
    %v2433 = vpack.c.b16 %v1689, %v1681
    %v2434 = vpack.c.b16 %v1690, %v1682
    %v2435 = vpack.c.b16 %v1691, %v1683
    %v2436 = vpack.c.b16 %v1692, %v1684
    %v2437 = vpack.c.b16 %v1693, %v1685
    %v2438 = vpack.c.b16 %v1694, %v1686
    %v2439 = vpack.c.b16 %v1695, %v1687
    %v2440 = vpack.c.b16 %v1696, %v1688
    %v2441 = vpack.c.b16 %v1705, %v1697
    %v2442 = vpack.c.b16 %v1706, %v1698
    %v2443 = vpack.c.b16 %v1707, %v1699
    %v2444 = vpack.c.b16 %v1708, %v1700
    %v2445 = vpack.c.b16 %v1709, %v1701
    %v2446 = vpack.c.b16 %v1710, %v1702
    %v2447 = vpack.c.b16 %v1711, %v1703
    %v2448 = vpack.c.b16 %v1712, %v1704
    %v2449 = vpack.c.b16 %v1721, %v1713
    %v2450 = vpack.c.b16 %v1722, %v1714
    %v2451 = vpack.c.b16 %v1723, %v1715
    %v2452 = vpack.c.b16 %v1724, %v1716
    %v2453 = vpack.c.b16 %v1725, %v1717
    %v2454 = vpack.c.b16 %v1726, %v1718
    %v2455 = vpack.c.b16 %v1727, %v1719
    %v2456 = vpack.c.b16 %v1728, %v1720
    %v2457 = vpack.c.b16 %v1737, %v1729
    %v2458 = vpack.c.b16 %v1738, %v1730
    %v2459 = vpack.c.b16 %v1739, %v1731
    %v2460 = vpack.c.b16 %v1740, %v1732
    %v2461 = vpack.c.b16 %v1741, %v1733
    %v2462 = vpack.c.b16 %v1742, %v1734
    %v2463 = vpack.c.b16 %v1743, %v1735
    %v2464 = vpack.c.b16 %v1744, %v1736
    %v2465 = vpack.c.b16 %v1753, %v1745
    %v2466 = vpack.c.b16 %v1754, %v1746
    %v2467 = vpack.c.b16 %v1755, %v1747
    %v2468 = vpack.c.b16 %v1756, %v1748
    %v2469 = vpack.c.b16 %v1757, %v1749
    %v2470 = vpack.c.b16 %v1758, %v1750
    %v2471 = vpack.c.b16 %v1759, %v1751
    %v2472 = vpack.c.b16 %v1760, %v1752
    %v2473 = vpack.c.b16 %v1769, %v1761
    %v2474 = vpack.c.b16 %v1770, %v1762
    %v2475 = vpack.c.b16 %v1771, %v1763
    %v2476 = vpack.c.b16 %v1772, %v1764
    %v2477 = vpack.c.b16 %v1773, %v1765
    %v2478 = vpack.c.b16 %v1774, %v1766
    %v2479 = vpack.c.b16 %v1775, %v1767
    %v2480 = vpack.c.b16 %v1776, %v1768
    %v2481 = vpack.c.b16 %v1785, %v1777
    %v2482 = vpack.c.b16 %v1786, %v1778
    %v2483 = vpack.c.b16 %v1787, %v1779
    %v2484 = vpack.c.b16 %v1788, %v1780
    %v2485 = vpack.c.b16 %v1789, %v1781
    %v2486 = vpack.c.b16 %v1790, %v1782
    %v2487 = vpack.c.b16 %v1791, %v1783
    %v2488 = vpack.c.b16 %v1792, %v1784
    %v2489 = vpack.c.b16 %v1801, %v1793
    %v2490 = vpack.c.b16 %v1802, %v1794
    %v2491 = vpack.c.b16 %v1803, %v1795
    %v2492 = vpack.c.b16 %v1804, %v1796
    %v2493 = vpack.c.b16 %v1805, %v1797
    %v2494 = vpack.c.b16 %v1806, %v1798
    %v2495 = vpack.c.b16 %v1807, %v1799
    %v2496 = vpack.c.b16 %v1808, %v1800
    %v2497 = vpack.c.b16 %v1817, %v1809
    %v2498 = vpack.c.b16 %v1818, %v1810
    %v2499 = vpack.c.b16 %v1819, %v1811
    %v2500 = vpack.c.b16 %v1820, %v1812
    %v2501 = vpack.c.b16 %v1821, %v1813
    %v2502 = vpack.c.b16 %v1822, %v1814
    %v2503 = vpack.c.b16 %v1823, %v1815
    %v2504 = vpack.c.b16 %v1824, %v1816
    %v2505 = vpack.c.b16 %v1833, %v1825
    %v2506 = vpack.c.b16 %v1834, %v1826
    %v2507 = vpack.c.b16 %v1835, %v1827
    %v2508 = vpack.c.b16 %v1836, %v1828
    %v2509 = vpack.c.b16 %v1837, %v1829
    %v2510 = vpack.c.b16 %v1838, %v1830
    %v2511 = vpack.c.b16 %v1839, %v1831
    %v2512 = vpack.c.b16 %v1840, %v1832
    %v2513 = vpack.c.b16 %v1849, %v1841
    %v2514 = vpack.c.b16 %v1850, %v1842
    %v2515 = vpack.c.b16 %v1851, %v1843
    %v2516 = vpack.c.b16 %v1852, %v1844
    %v2517 = vpack.c.b16 %v1853, %v1845
    %v2518 = vpack.c.b16 %v1854, %v1846
    %v2519 = vpack.c.b16 %v1855, %v1847
    %v2520 = vpack.c.b16 %v1856, %v1848
    %v2521 = vpack.c.b16 %v1865, %v1857
    %v2522 = vpack.c.b16 %v1866, %v1858
    %v2523 = vpack.c.b16 %v1867, %v1859
    %v2524 = vpack.c.b16 %v1868, %v1860
    %v2525 = vpack.c.b16 %v1869, %v1861
    %v2526 = vpack.c.b16 %v1870, %v1862
    %v2527 = vpack.c.b16 %v1871, %v1863
    %v2528 = vpack.c.b16 %v1872, %v1864
    %v2529 = vpack.c.b16 %v1881, %v1873
    %v2530 = vpack.c.b16 %v1882, %v1874
    %v2531 = vpack.c.b16 %v1883, %v1875
    %v2532 = vpack.c.b16 %v1884, %v1876
    %v2533 = vpack.c.b16 %v1885, %v1877
    %v2534 = vpack.c.b16 %v1886, %v1878
    %v2535 = vpack.c.b16 %v1887, %v1879
    %v2536 = vpack.c.b16 %v1888, %v1880
    %v2537 = vpack.c.b16 %v1897, %v1889
    %v2538 = vpack.c.b16 %v1898, %v1890
    %v2539 = vpack.c.b16 %v1899, %v1891
    %v2540 = vpack.c.b16 %v1900, %v1892
    %v2541 = vpack.c.b16 %v1901, %v1893
    %v2542 = vpack.c.b16 %v1902, %v1894
    %v2543 = vpack.c.b16 %v1903, %v1895
    %v2544 = vpack.c.b16 %v1904, %v1896
    %v2545 = vpack.c.b16 %v1913, %v1905
    %v2546 = vpack.c.b16 %v1914, %v1906
    %v2547 = vpack.c.b16 %v1915, %v1907
    %v2548 = vpack.c.b16 %v1916, %v1908
    %v2549 = vpack.c.b16 %v1917, %v1909
    %v2550 = vpack.c.b16 %v1918, %v1910
    %v2551 = vpack.c.b16 %v1919, %v1911
    %v2552 = vpack.c.b16 %v1920, %v1912
    %v2553 = vpack.c.b16 %v1929, %v1921
    %v2554 = vpack.c.b16 %v1930, %v1922
    %v2555 = vpack.c.b16 %v1931, %v1923
    %v2556 = vpack.c.b16 %v1932, %v1924
    %v2557 = vpack.c.b16 %v1933, %v1925
    %v2558 = vpack.c.b16 %v1934, %v1926
    %v2559 = vpack.c.b16 %v1935, %v1927
    %v2560 = vpack.c.b16 %v1936, %v1928
    %v2561 = vpack.c.b16 %v1945, %v1937
    %v2562 = vpack.c.b16 %v1946, %v1938
    %v2563 = vpack.c.b16 %v1947, %v1939
    %v2564 = vpack.c.b16 %v1948, %v1940
    %v2565 = vpack.c.b16 %v1949, %v1941
    %v2566 = vpack.c.b16 %v1950, %v1942
    %v2567 = vpack.c.b16 %v1951, %v1943
    %v2568 = vpack.c.b16 %v1952, %v1944
    %v2569 = vpack.c.b16 %v1961, %v1953
    %v2570 = vpack.c.b16 %v1962, %v1954
    %v2571 = vpack.c.b16 %v1963, %v1955
    %v2572 = vpack.c.b16 %v1964, %v1956
    %v2573 = vpack.c.b16 %v1965, %v1957
    %v2574 = vpack.c.b16 %v1966, %v1958
    %v2575 = vpack.c.b16 %v1967, %v1959
    %v2576 = vpack.c.b16 %v1968, %v1960
    %v2577 = vpack.c.b16 %v1977, %v1969
    %v2578 = vpack.c.b16 %v1978, %v1970
    %v2579 = vpack.c.b16 %v1979, %v1971
    %v2580 = vpack.c.b16 %v1980, %v1972
    %v2581 = vpack.c.b16 %v1981, %v1973
    %v2582 = vpack.c.b16 %v1982, %v1974
    %v2583 = vpack.c.b16 %v1983, %v1975
    %v2584 = vpack.c.b16 %v1984, %v1976
    %v2585 = vpack.c.b16 %v1993, %v1985
    %v2586 = vpack.c.b16 %v1994, %v1986
    %v2587 = vpack.c.b16 %v1995, %v1987
    %v2588 = vpack.c.b16 %v1996, %v1988
    %v2589 = vpack.c.b16 %v1997, %v1989
    %v2590 = vpack.c.b16 %v1998, %v1990
    %v2591 = vpack.c.b16 %v1999, %v1991
    %v2592 = vpack.c.b16 %v2000, %v1992
    %v2593 = vpack.c.b16 %v2009, %v2001
    %v2594 = vpack.c.b16 %v2010, %v2002
    %v2595 = vpack.c.b16 %v2011, %v2003
    %v2596 = vpack.c.b16 %v2012, %v2004
    %v2597 = vpack.c.b16 %v2013, %v2005
    %v2598 = vpack.c.b16 %v2014, %v2006
    %v2599 = vpack.c.b16 %v2015, %v2007
    %v2600 = vpack.c.b16 %v2016, %v2008
    %v2601 = vpack.c.b16 %v2025, %v2017
    %v2602 = vpack.c.b16 %v2026, %v2018
    %v2603 = vpack.c.b16 %v2027, %v2019
    %v2604 = vpack.c.b16 %v2028, %v2020
    %v2605 = vpack.c.b16 %v2029, %v2021
    %v2606 = vpack.c.b16 %v2030, %v2022
    %v2607 = vpack.c.b16 %v2031, %v2023
    %v2608 = vpack.c.b16 %v2032, %v2024
    %v2609 = vpack.c.b16 %v2041, %v2033
    %v2610 = vpack.c.b16 %v2042, %v2034
    %v2611 = vpack.c.b16 %v2043, %v2035
    %v2612 = vpack.c.b16 %v2044, %v2036
    %v2613 = vpack.c.b16 %v2045, %v2037
    %v2614 = vpack.c.b16 %v2046, %v2038
    %v2615 = vpack.c.b16 %v2047, %v2039
    %v2616 = vpack.c.b16 %v2048, %v2040
    %v2617 = vpack.c.b16 %v2057, %v2049
    %v2618 = vpack.c.b16 %v2058, %v2050
    %v2619 = vpack.c.b16 %v2059, %v2051
    %v2620 = vpack.c.b16 %v2060, %v2052
    %v2621 = vpack.c.b16 %v2061, %v2053
    %v2622 = vpack.c.b16 %v2062, %v2054
    %v2623 = vpack.c.b16 %v2063, %v2055
    %v2624 = vpack.c.b16 %v2064, %v2056
    %v2625 = vpack.c.b16 %v2073, %v2065
    %v2626 = vpack.c.b16 %v2074, %v2066
    %v2627 = vpack.c.b16 %v2075, %v2067
    %v2628 = vpack.c.b16 %v2076, %v2068
    %v2629 = vpack.c.b16 %v2077, %v2069
    %v2630 = vpack.c.b16 %v2078, %v2070
    %v2631 = vpack.c.b16 %v2079, %v2071
    %v2632 = vpack.c.b16 %v2080, %v2072
    %v2633 = vpack.c.b16 %v2089, %v2081
    %v2634 = vpack.c.b16 %v2090, %v2082
    %v2635 = vpack.c.b16 %v2091, %v2083
    %v2636 = vpack.c.b16 %v2092, %v2084
    %v2637 = vpack.c.b16 %v2093, %v2085
    %v2638 = vpack.c.b16 %v2094, %v2086
    %v2639 = vpack.c.b16 %v2095, %v2087
    %v2640 = vpack.c.b16 %v2096, %v2088
    %v2641 = vpack.c.b16 %v2105, %v2097
    %v2642 = vpack.c.b16 %v2106, %v2098
    %v2643 = vpack.c.b16 %v2107, %v2099
    %v2644 = vpack.c.b16 %v2108, %v2100
    %v2645 = vpack.c.b16 %v2109, %v2101
    %v2646 = vpack.c.b16 %v2110, %v2102
    %v2647 = vpack.c.b16 %v2111, %v2103
    %v2648 = vpack.c.b16 %v2112, %v2104
    %v2649 = vpack.c.b16 %v2121, %v2113
    %v2650 = vpack.c.b16 %v2122, %v2114
    %v2651 = vpack.c.b16 %v2123, %v2115
    %v2652 = vpack.c.b16 %v2124, %v2116
    %v2653 = vpack.c.b16 %v2125, %v2117
    %v2654 = vpack.c.b16 %v2126, %v2118
    %v2655 = vpack.c.b16 %v2127, %v2119
    %v2656 = vpack.c.b16 %v2128, %v2120
    %v2657 = vpack.c.b16 %v2137, %v2129
    %v2658 = vpack.c.b16 %v2138, %v2130
    %v2659 = vpack.c.b16 %v2139, %v2131
    %v2660 = vpack.c.b16 %v2140, %v2132
    %v2661 = vpack.c.b16 %v2141, %v2133
    %v2662 = vpack.c.b16 %v2142, %v2134
    %v2663 = vpack.c.b16 %v2143, %v2135
    %v2664 = vpack.c.b16 %v2144, %v2136
    %v2665 = vpack.c.b16 %v2153, %v2145
    %v2666 = vpack.c.b16 %v2154, %v2146
    %v2667 = vpack.c.b16 %v2155, %v2147
    %v2668 = vpack.c.b16 %v2156, %v2148
    %v2669 = vpack.c.b16 %v2157, %v2149
    %v2670 = vpack.c.b16 %v2158, %v2150
    %v2671 = vpack.c.b16 %v2159, %v2151
    %v2672 = vpack.c.b16 %v2160, %v2152
    %3185 = vmatprep.subr.bf16.mxu0 %v2162
    %3186 = vmatpush1.bf16.msra.mxu0 %v2161
    %3187 = vmatprep.subr.bf16.mxu0 %v2170
    %3188 = vmatpush1.bf16.msra.mxu0 %v2169
    %3189 = vmatprep.subr.bf16.mxu0 %v2178
    %3190 = vmatpush1.bf16.msra.mxu0 %v2177
    %3191 = vmatprep.subr.bf16.mxu0 %v2186
    %3192 = vmatpush1.bf16.msra.mxu0 %v2185
    %3193 = vmatprep.subr.bf16.mxu0 %v2194
    %3194 = vmatpush1.bf16.msra.mxu0 %v2193
    %3195 = vmatprep.subr.bf16.mxu0 %v2202
    %3196 = vmatpush1.bf16.msra.mxu0 %v2201
    %3197 = vmatprep.subr.bf16.mxu0 %v2210
    %3198 = vmatpush1.bf16.msra.mxu0 %v2209
    %3199 = vmatprep.subr.bf16.mxu0 %v2218
    %3200 = vmatpush1.bf16.msra.mxu0 %v2217
    %3201 = vmatprep.subr.bf16.mxu0 %v2226
    %3202 = vmatpush1.bf16.msra.mxu0 %v2225
    %3203 = vmatprep.subr.bf16.mxu0 %v2234
    %3204 = vmatpush1.bf16.msra.mxu0 %v2233
    %3205 = vmatprep.subr.bf16.mxu0 %v2242
    %3206 = vmatpush1.bf16.msra.mxu0 %v2241
    %3207 = vmatprep.subr.bf16.mxu0 %v2250
    %3208 = vmatpush1.bf16.msra.mxu0 %v2249
    %3209 = vmatprep.subr.bf16.mxu0 %v2258
    %3210 = vmatpush1.bf16.msra.mxu0 %v2257
    %3211 = vmatprep.subr.bf16.mxu0 %v2266
    %3212 = vmatpush1.bf16.msra.mxu0 %v2265
    %3213 = vmatprep.subr.bf16.mxu0 %v2274
    %3214 = vmatpush1.bf16.msra.mxu0 %v2273
    %3215 = vmatprep.subr.bf16.mxu0 %v2282
    %3216 = vmatpush1.bf16.msra.mxu0 %v2281
    %3217 = vmatprep.mubr.bf16.mxu0 %v64
    %3218 = vmatmul.mubr.bf16.gmra.mrb[0].mxu0 %v63
    %v3219 = vpop.f32.mrb[0].mxu0
    %v3220 = vadd.f32 %v588, %v3219
    %v3221 = vpop.f32.mrb[0].mxu0
    %v3222 = vadd.f32 %v592, %v3221
    %v3223 = vpop.f32.mrb[0].mxu0
    %v3224 = vpop.f32.mrb[0].mxu0
    %3225 = vdwg.mxu0
    %3226 = vmatprep.subr.bf16.mxu0 %v2290
    %3227 = vmatpush1.bf16.msra.mxu0 %v2289
    %3228 = vmatprep.subr.bf16.mxu0 %v2298
    %3229 = vmatpush1.bf16.msra.mxu0 %v2297
    %3230 = vmatprep.subr.bf16.mxu0 %v2306
    %3231 = vmatpush1.bf16.msra.mxu0 %v2305
    %3232 = vmatprep.subr.bf16.mxu0 %v2314
    %3233 = vmatpush1.bf16.msra.mxu0 %v2313
    %3234 = vmatprep.subr.bf16.mxu0 %v2322
    %3235 = vmatpush1.bf16.msra.mxu0 %v2321
    %3236 = vmatprep.subr.bf16.mxu0 %v2330
    %3237 = vmatpush1.bf16.msra.mxu0 %v2329
    %3238 = vmatprep.subr.bf16.mxu0 %v2338
    %3239 = vmatpush1.bf16.msra.mxu0 %v2337
    %3240 = vmatprep.subr.bf16.mxu0 %v2346
    %3241 = vmatpush1.bf16.msra.mxu0 %v2345
    %3242 = vmatprep.subr.bf16.mxu0 %v2354
    %3243 = vmatpush1.bf16.msra.mxu0 %v2353
    %3244 = vmatprep.subr.bf16.mxu0 %v2362
    %3245 = vmatpush1.bf16.msra.mxu0 %v2361
    %3246 = vmatprep.subr.bf16.mxu0 %v2370
    %3247 = vmatpush1.bf16.msra.mxu0 %v2369
    %3248 = vmatprep.subr.bf16.mxu0 %v2378
    %3249 = vmatpush1.bf16.msra.mxu0 %v2377
    %3250 = vmatprep.subr.bf16.mxu0 %v2386
    %3251 = vmatpush1.bf16.msra.mxu0 %v2385
    %3252 = vmatprep.subr.bf16.mxu0 %v2394
    %3253 = vmatpush1.bf16.msra.mxu0 %v2393
    %3254 = vmatprep.subr.bf16.mxu0 %v2402
    %3255 = vmatpush1.bf16.msra.mxu0 %v2401
    %3256 = vmatprep.subr.bf16.mxu0 %v2410
    %3257 = vmatpush1.bf16.msra.mxu0 %v2409
    %3258 = vmatprep.mubr.bf16.mxu0 %v66
    %3259 = vmatmul.mubr.bf16.gmra.mrb[0].mxu0 %v65
    %v3260 = vpop.f32.mrb[0].mxu0
    %v3261 = vadd.f32 %v3220, %v3260
    %v3262 = vpop.f32.mrb[0].mxu0
    %v3263 = vadd.f32 %v3222, %v3262
    %v3264 = vpop.f32.mrb[0].mxu0
    %v3265 = vpop.f32.mrb[0].mxu0
    %3266 = vdwg.mxu0
    %3267 = vmatprep.subr.bf16.mxu0 %v2418
    %3268 = vmatpush1.bf16.msra.mxu0 %v2417
    %3269 = vmatprep.subr.bf16.mxu0 %v2426
    %3270 = vmatpush1.bf16.msra.mxu0 %v2425
    %3271 = vmatprep.subr.bf16.mxu0 %v2434
    %3272 = vmatpush1.bf16.msra.mxu0 %v2433
    %3273 = vmatprep.subr.bf16.mxu0 %v2442
    %3274 = vmatpush1.bf16.msra.mxu0 %v2441
    %3275 = vmatprep.subr.bf16.mxu0 %v2450
    %3276 = vmatpush1.bf16.msra.mxu0 %v2449
    %3277 = vmatprep.subr.bf16.mxu0 %v2458
    %3278 = vmatpush1.bf16.msra.mxu0 %v2457
    %3279 = vmatprep.subr.bf16.mxu0 %v2466
    %3280 = vmatpush1.bf16.msra.mxu0 %v2465
    %3281 = vmatprep.subr.bf16.mxu0 %v2474
    %3282 = vmatpush1.bf16.msra.mxu0 %v2473
    %3283 = vmatprep.subr.bf16.mxu0 %v2482
    %3284 = vmatpush1.bf16.msra.mxu0 %v2481
    %3285 = vmatprep.subr.bf16.mxu0 %v2490
    %3286 = vmatpush1.bf16.msra.mxu0 %v2489
    %3287 = vmatprep.subr.bf16.mxu0 %v2498
    %3288 = vmatpush1.bf16.msra.mxu0 %v2497
    %3289 = vmatprep.subr.bf16.mxu0 %v2506
    %3290 = vmatpush1.bf16.msra.mxu0 %v2505
    %3291 = vmatprep.subr.bf16.mxu0 %v2514
    %3292 = vmatpush1.bf16.msra.mxu0 %v2513
    %3293 = vmatprep.subr.bf16.mxu0 %v2522
    %3294 = vmatpush1.bf16.msra.mxu0 %v2521
    %3295 = vmatprep.subr.bf16.mxu0 %v2530
    %3296 = vmatpush1.bf16.msra.mxu0 %v2529
    %3297 = vmatprep.subr.bf16.mxu0 %v2538
    %3298 = vmatpush1.bf16.msra.mxu0 %v2537
    %3299 = vmatprep.mubr.bf16.mxu0 %v68
    %3300 = vmatmul.mubr.bf16.gmra.mrb[0].mxu0 %v67
    %v3301 = vpop.f32.mrb[0].mxu0
    %v3302 = vadd.f32 %v3261, %v3301
    %v3303 = vpop.f32.mrb[0].mxu0
    %v3304 = vadd.f32 %v3263, %v3303
    %v3305 = vpop.f32.mrb[0].mxu0
    %v3306 = vpop.f32.mrb[0].mxu0
    %3307 = vdwg.mxu0
    %3308 = vmatprep.subr.bf16.mxu0 %v2546
    %3309 = vmatpush1.bf16.msra.mxu0 %v2545
    %3310 = vmatprep.subr.bf16.mxu0 %v2554
    %3311 = vmatpush1.bf16.msra.mxu0 %v2553
    %3312 = vmatprep.subr.bf16.mxu0 %v2562
    %3313 = vmatpush1.bf16.msra.mxu0 %v2561
    %3314 = vmatprep.subr.bf16.mxu0 %v2570
    %3315 = vmatpush1.bf16.msra.mxu0 %v2569
    %3316 = vmatprep.subr.bf16.mxu0 %v2578
    %3317 = vmatpush1.bf16.msra.mxu0 %v2577
    %3318 = vmatprep.subr.bf16.mxu0 %v2586
    %3319 = vmatpush1.bf16.msra.mxu0 %v2585
    %3320 = vmatprep.subr.bf16.mxu0 %v2594
    %3321 = vmatpush1.bf16.msra.mxu0 %v2593
    %3322 = vmatprep.subr.bf16.mxu0 %v2602
    %3323 = vmatpush1.bf16.msra.mxu0 %v2601
    %3324 = vmatprep.subr.bf16.mxu0 %v2610
    %3325 = vmatpush1.bf16.msra.mxu0 %v2609
    %3326 = vmatprep.subr.bf16.mxu0 %v2618
    %3327 = vmatpush1.bf16.msra.mxu0 %v2617
    %3328 = vmatprep.subr.bf16.mxu0 %v2626
    %3329 = vmatpush1.bf16.msra.mxu0 %v2625
    %3330 = vmatprep.subr.bf16.mxu0 %v2634
    %3331 = vmatpush1.bf16.msra.mxu0 %v2633
    %3332 = vmatprep.subr.bf16.mxu0 %v2642
    %3333 = vmatpush1.bf16.msra.mxu0 %v2641
    %3334 = vmatprep.subr.bf16.mxu0 %v2650
    %3335 = vmatpush1.bf16.msra.mxu0 %v2649
    %3336 = vmatprep.subr.bf16.mxu0 %v2658
    %3337 = vmatpush1.bf16.msra.mxu0 %v2657
    %3338 = vmatprep.subr.bf16.mxu0 %v2666
    %3339 = vmatpush1.bf16.msra.mxu0 %v2665
    %3340 = vmatprep.mubr.bf16.mxu0 %v70
    %3341 = vmatmul.mubr.bf16.gmra.mrb[0].mxu0 %v69
    %v3342 = vpop.f32.mrb[0].mxu0
    %v3343 = vadd.f32 %v3302, %v3342
    %v3344 = vpop.f32.mrb[0].mxu0
    %v3345 = vadd.f32 %v3304, %v3344
    %v3346 = vpop.f32.mrb[0].mxu0
    %v3347 = vpop.f32.mrb[0].mxu0
    %3348 = vdwg.mxu0
    %3349 = vmatprep.subr.bf16.mxu0 %v2164
    %3350 = vmatpush1.bf16.msra.mxu0 %v2163
    %3351 = vmatprep.subr.bf16.mxu0 %v2172
    %3352 = vmatpush1.bf16.msra.mxu0 %v2171
    %3353 = vmatprep.subr.bf16.mxu0 %v2180
    %3354 = vmatpush1.bf16.msra.mxu0 %v2179
    %3355 = vmatprep.subr.bf16.mxu0 %v2188
    %3356 = vmatpush1.bf16.msra.mxu0 %v2187
    %3357 = vmatprep.subr.bf16.mxu0 %v2196
    %3358 = vmatpush1.bf16.msra.mxu0 %v2195
    %3359 = vmatprep.subr.bf16.mxu0 %v2204
    %3360 = vmatpush1.bf16.msra.mxu0 %v2203
    %3361 = vmatprep.subr.bf16.mxu0 %v2212
    %3362 = vmatpush1.bf16.msra.mxu0 %v2211
    %3363 = vmatprep.subr.bf16.mxu0 %v2220
    %3364 = vmatpush1.bf16.msra.mxu0 %v2219
    %3365 = vmatprep.subr.bf16.mxu0 %v2228
    %3366 = vmatpush1.bf16.msra.mxu0 %v2227
    %3367 = vmatprep.subr.bf16.mxu0 %v2236
    %3368 = vmatpush1.bf16.msra.mxu0 %v2235
    %3369 = vmatprep.subr.bf16.mxu0 %v2244
    %3370 = vmatpush1.bf16.msra.mxu0 %v2243
    %3371 = vmatprep.subr.bf16.mxu0 %v2252
    %3372 = vmatpush1.bf16.msra.mxu0 %v2251
    %3373 = vmatprep.subr.bf16.mxu0 %v2260
    %3374 = vmatpush1.bf16.msra.mxu0 %v2259
    %3375 = vmatprep.subr.bf16.mxu0 %v2268
    %3376 = vmatpush1.bf16.msra.mxu0 %v2267
    %3377 = vmatprep.subr.bf16.mxu0 %v2276
    %3378 = vmatpush1.bf16.msra.mxu0 %v2275
    %3379 = vmatprep.subr.bf16.mxu0 %v2284
    %3380 = vmatpush1.bf16.msra.mxu0 %v2283
    %3381 = vmatprep.mubr.bf16.mxu0 %v64
    %3382 = vmatmul.mubr.bf16.gmra.mrb[0].mxu0 %v63
    %v3383 = vpop.f32.mrb[0].mxu0
    %v3384 = vadd.f32 %v596, %v3383
    %v3385 = vpop.f32.mrb[0].mxu0
    %v3386 = vadd.f32 %v600, %v3385
    %v3387 = vpop.f32.mrb[0].mxu0
    %v3388 = vpop.f32.mrb[0].mxu0
    %3389 = vdwg.mxu0
    %3390 = vmatprep.subr.bf16.mxu0 %v2292
    %3391 = vmatpush1.bf16.msra.mxu0 %v2291
    %3392 = vmatprep.subr.bf16.mxu0 %v2300
    %3393 = vmatpush1.bf16.msra.mxu0 %v2299
    %3394 = vmatprep.subr.bf16.mxu0 %v2308
    %3395 = vmatpush1.bf16.msra.mxu0 %v2307
    %3396 = vmatprep.subr.bf16.mxu0 %v2316
    %3397 = vmatpush1.bf16.msra.mxu0 %v2315
    %3398 = vmatprep.subr.bf16.mxu0 %v2324
    %3399 = vmatpush1.bf16.msra.mxu0 %v2323
    %3400 = vmatprep.subr.bf16.mxu0 %v2332
    %3401 = vmatpush1.bf16.msra.mxu0 %v2331
    %3402 = vmatprep.subr.bf16.mxu0 %v2340
    %3403 = vmatpush1.bf16.msra.mxu0 %v2339
    %3404 = vmatprep.subr.bf16.mxu0 %v2348
    %3405 = vmatpush1.bf16.msra.mxu0 %v2347
    %3406 = vmatprep.subr.bf16.mxu0 %v2356
    %3407 = vmatpush1.bf16.msra.mxu0 %v2355
    %3408 = vmatprep.subr.bf16.mxu0 %v2364
    %3409 = vmatpush1.bf16.msra.mxu0 %v2363
    %3410 = vmatprep.subr.bf16.mxu0 %v2372
    %3411 = vmatpush1.bf16.msra.mxu0 %v2371
    %3412 = vmatprep.subr.bf16.mxu0 %v2380
    %3413 = vmatpush1.bf16.msra.mxu0 %v2379
    %3414 = vmatprep.subr.bf16.mxu0 %v2388
    %3415 = vmatpush1.bf16.msra.mxu0 %v2387
    %3416 = vmatprep.subr.bf16.mxu0 %v2396
    %3417 = vmatpush1.bf16.msra.mxu0 %v2395
    %3418 = vmatprep.subr.bf16.mxu0 %v2404
    %3419 = vmatpush1.bf16.msra.mxu0 %v2403
    %3420 = vmatprep.subr.bf16.mxu0 %v2412
    %3421 = vmatpush1.bf16.msra.mxu0 %v2411
    %3422 = vmatprep.mubr.bf16.mxu0 %v66
    %3423 = vmatmul.mubr.bf16.gmra.mrb[0].mxu0 %v65
    %v3424 = vpop.f32.mrb[0].mxu0
    %v3425 = vadd.f32 %v3384, %v3424
    %v3426 = vpop.f32.mrb[0].mxu0
    %v3427 = vadd.f32 %v3386, %v3426
    %v3428 = vpop.f32.mrb[0].mxu0
    %v3429 = vpop.f32.mrb[0].mxu0
    %3430 = vdwg.mxu0
    %3431 = vmatprep.subr.bf16.mxu0 %v2420
    %3432 = vmatpush1.bf16.msra.mxu0 %v2419
    %3433 = vmatprep.subr.bf16.mxu0 %v2428
    %3434 = vmatpush1.bf16.msra.mxu0 %v2427
    %3435 = vmatprep.subr.bf16.mxu0 %v2436
    %3436 = vmatpush1.bf16.msra.mxu0 %v2435
    %3437 = vmatprep.subr.bf16.mxu0 %v2444
    %3438 = vmatpush1.bf16.msra.mxu0 %v2443
    %3439 = vmatprep.subr.bf16.mxu0 %v2452
    %3440 = vmatpush1.bf16.msra.mxu0 %v2451
    %3441 = vmatprep.subr.bf16.mxu0 %v2460
    %3442 = vmatpush1.bf16.msra.mxu0 %v2459
    %3443 = vmatprep.subr.bf16.mxu0 %v2468
    %3444 = vmatpush1.bf16.msra.mxu0 %v2467
    %3445 = vmatprep.subr.bf16.mxu0 %v2476
    %3446 = vmatpush1.bf16.msra.mxu0 %v2475
    %3447 = vmatprep.subr.bf16.mxu0 %v2484
    %3448 = vmatpush1.bf16.msra.mxu0 %v2483
    %3449 = vmatprep.subr.bf16.mxu0 %v2492
    %3450 = vmatpush1.bf16.msra.mxu0 %v2491
    %3451 = vmatprep.subr.bf16.mxu0 %v2500
    %3452 = vmatpush1.bf16.msra.mxu0 %v2499
    %3453 = vmatprep.subr.bf16.mxu0 %v2508
    %3454 = vmatpush1.bf16.msra.mxu0 %v2507
    %3455 = vmatprep.subr.bf16.mxu0 %v2516
    %3456 = vmatpush1.bf16.msra.mxu0 %v2515
    %3457 = vmatprep.subr.bf16.mxu0 %v2524
    %3458 = vmatpush1.bf16.msra.mxu0 %v2523
    %3459 = vmatprep.subr.bf16.mxu0 %v2532
    %3460 = vmatpush1.bf16.msra.mxu0 %v2531
    %3461 = vmatprep.subr.bf16.mxu0 %v2540
    %3462 = vmatpush1.bf16.msra.mxu0 %v2539
    %3463 = vmatprep.mubr.bf16.mxu0 %v68
    %3464 = vmatmul.mubr.bf16.gmra.mrb[0].mxu0 %v67
    %v3465 = vpop.f32.mrb[0].mxu0
    %v3466 = vadd.f32 %v3425, %v3465
    %v3467 = vpop.f32.mrb[0].mxu0
    %v3468 = vadd.f32 %v3427, %v3467
    %v3469 = vpop.f32.mrb[0].mxu0
    %v3470 = vpop.f32.mrb[0].mxu0
    %3471 = vdwg.mxu0
    %3472 = vmatprep.subr.bf16.mxu0 %v2548
    %3473 = vmatpush1.bf16.msra.mxu0 %v2547
    %3474 = vmatprep.subr.bf16.mxu0 %v2556
    %3475 = vmatpush1.bf16.msra.mxu0 %v2555
    %3476 = vmatprep.subr.bf16.mxu0 %v2564
    %3477 = vmatpush1.bf16.msra.mxu0 %v2563
    %3478 = vmatprep.subr.bf16.mxu0 %v2572
    %3479 = vmatpush1.bf16.msra.mxu0 %v2571
    %3480 = vmatprep.subr.bf16.mxu0 %v2580
    %3481 = vmatpush1.bf16.msra.mxu0 %v2579
    %3482 = vmatprep.subr.bf16.mxu0 %v2588
    %3483 = vmatpush1.bf16.msra.mxu0 %v2587
    %3484 = vmatprep.subr.bf16.mxu0 %v2596
    %3485 = vmatpush1.bf16.msra.mxu0 %v2595
    %3486 = vmatprep.subr.bf16.mxu0 %v2604
    %3487 = vmatpush1.bf16.msra.mxu0 %v2603
    %3488 = vmatprep.subr.bf16.mxu0 %v2612
    %3489 = vmatpush1.bf16.msra.mxu0 %v2611
    %3490 = vmatprep.subr.bf16.mxu0 %v2620
    %3491 = vmatpush1.bf16.msra.mxu0 %v2619
    %3492 = vmatprep.subr.bf16.mxu0 %v2628
    %3493 = vmatpush1.bf16.msra.mxu0 %v2627
    %3494 = vmatprep.subr.bf16.mxu0 %v2636
    %3495 = vmatpush1.bf16.msra.mxu0 %v2635
    %3496 = vmatprep.subr.bf16.mxu0 %v2644
    %3497 = vmatpush1.bf16.msra.mxu0 %v2643
    %3498 = vmatprep.subr.bf16.mxu0 %v2652
    %3499 = vmatpush1.bf16.msra.mxu0 %v2651
    %3500 = vmatprep.subr.bf16.mxu0 %v2660
    %3501 = vmatpush1.bf16.msra.mxu0 %v2659
    %3502 = vmatprep.subr.bf16.mxu0 %v2668
    %3503 = vmatpush1.bf16.msra.mxu0 %v2667
    %3504 = vmatprep.mubr.bf16.mxu0 %v70
    %3505 = vmatmul.mubr.bf16.gmra.mrb[0].mxu0 %v69
    %v3506 = vpop.f32.mrb[0].mxu0
    %v3507 = vadd.f32 %v3466, %v3506
    %v3508 = vpop.f32.mrb[0].mxu0
    %v3509 = vadd.f32 %v3468, %v3508
    %v3510 = vpop.f32.mrb[0].mxu0
    %v3511 = vpop.f32.mrb[0].mxu0
    %3512 = vdwg.mxu0
    %3513 = vmatprep.subr.bf16.mxu0 %v2166
    %3514 = vmatpush1.bf16.msra.mxu0 %v2165
    %3515 = vmatprep.subr.bf16.mxu0 %v2174
    %3516 = vmatpush1.bf16.msra.mxu0 %v2173
    %3517 = vmatprep.subr.bf16.mxu0 %v2182
    %3518 = vmatpush1.bf16.msra.mxu0 %v2181
    %3519 = vmatprep.subr.bf16.mxu0 %v2190
    %3520 = vmatpush1.bf16.msra.mxu0 %v2189
    %3521 = vmatprep.subr.bf16.mxu0 %v2198
    %3522 = vmatpush1.bf16.msra.mxu0 %v2197
    %3523 = vmatprep.subr.bf16.mxu0 %v2206
    %3524 = vmatpush1.bf16.msra.mxu0 %v2205
    %3525 = vmatprep.subr.bf16.mxu0 %v2214
    %3526 = vmatpush1.bf16.msra.mxu0 %v2213
    %3527 = vmatprep.subr.bf16.mxu0 %v2222
    %3528 = vmatpush1.bf16.msra.mxu0 %v2221
    %3529 = vmatprep.subr.bf16.mxu0 %v2230
    %3530 = vmatpush1.bf16.msra.mxu0 %v2229
    %3531 = vmatprep.subr.bf16.mxu0 %v2238
    %3532 = vmatpush1.bf16.msra.mxu0 %v2237
    %3533 = vmatprep.subr.bf16.mxu0 %v2246
    %3534 = vmatpush1.bf16.msra.mxu0 %v2245
    %3535 = vmatprep.subr.bf16.mxu0 %v2254
    %3536 = vmatpush1.bf16.msra.mxu0 %v2253
    %3537 = vmatprep.subr.bf16.mxu0 %v2262
    %3538 = vmatpush1.bf16.msra.mxu0 %v2261
    %3539 = vmatprep.subr.bf16.mxu0 %v2270
    %3540 = vmatpush1.bf16.msra.mxu0 %v2269
    %3541 = vmatprep.subr.bf16.mxu0 %v2278
    %3542 = vmatpush1.bf16.msra.mxu0 %v2277
    %3543 = vmatprep.subr.bf16.mxu0 %v2286
    %3544 = vmatpush1.bf16.msra.mxu0 %v2285
    %3545 = vmatprep.mubr.bf16.mxu0 %v64
    %3546 = vmatmul.mubr.bf16.gmra.mrb[0].mxu0 %v63
    %v3547 = vpop.f32.mrb[0].mxu0
    %v3548 = vadd.f32 %v604, %v3547
    %v3549 = vpop.f32.mrb[0].mxu0
    %v3550 = vadd.f32 %v608, %v3549
    %v3551 = vpop.f32.mrb[0].mxu0
    %v3552 = vpop.f32.mrb[0].mxu0
    %3553 = vdwg.mxu0
    %3554 = vmatprep.subr.bf16.mxu0 %v2294
    %3555 = vmatpush1.bf16.msra.mxu0 %v2293
    %3556 = vmatprep.subr.bf16.mxu0 %v2302
    %3557 = vmatpush1.bf16.msra.mxu0 %v2301
    %3558 = vmatprep.subr.bf16.mxu0 %v2310
    %3559 = vmatpush1.bf16.msra.mxu0 %v2309
    %3560 = vmatprep.subr.bf16.mxu0 %v2318
    %3561 = vmatpush1.bf16.msra.mxu0 %v2317
    %3562 = vmatprep.subr.bf16.mxu0 %v2326
    %3563 = vmatpush1.bf16.msra.mxu0 %v2325
    %3564 = vmatprep.subr.bf16.mxu0 %v2334
    %3565 = vmatpush1.bf16.msra.mxu0 %v2333
    %3566 = vmatprep.subr.bf16.mxu0 %v2342
    %3567 = vmatpush1.bf16.msra.mxu0 %v2341
    %3568 = vmatprep.subr.bf16.mxu0 %v2350
    %3569 = vmatpush1.bf16.msra.mxu0 %v2349
    %3570 = vmatprep.subr.bf16.mxu0 %v2358
    %3571 = vmatpush1.bf16.msra.mxu0 %v2357
    %3572 = vmatprep.subr.bf16.mxu0 %v2366
    %3573 = vmatpush1.bf16.msra.mxu0 %v2365
    %3574 = vmatprep.subr.bf16.mxu0 %v2374
    %3575 = vmatpush1.bf16.msra.mxu0 %v2373
    %3576 = vmatprep.subr.bf16.mxu0 %v2382
    %3577 = vmatpush1.bf16.msra.mxu0 %v2381
    %3578 = vmatprep.subr.bf16.mxu0 %v2390
    %3579 = vmatpush1.bf16.msra.mxu0 %v2389
    %3580 = vmatprep.subr.bf16.mxu0 %v2398
    %3581 = vmatpush1.bf16.msra.mxu0 %v2397
    %3582 = vmatprep.subr.bf16.mxu0 %v2406
    %3583 = vmatpush1.bf16.msra.mxu0 %v2405
    %3584 = vmatprep.subr.bf16.mxu0 %v2414
    %3585 = vmatpush1.bf16.msra.mxu0 %v2413
    %3586 = vmatprep.mubr.bf16.mxu0 %v66
    %3587 = vmatmul.mubr.bf16.gmra.mrb[0].mxu0 %v65
    %v3588 = vpop.f32.mrb[0].mxu0
    %v3589 = vadd.f32 %v3548, %v3588
    %v3590 = vpop.f32.mrb[0].mxu0
    %v3591 = vadd.f32 %v3550, %v3590
    %v3592 = vpop.f32.mrb[0].mxu0
    %v3593 = vpop.f32.mrb[0].mxu0
    %3594 = vdwg.mxu0
    %3595 = vmatprep.subr.bf16.mxu0 %v2422
    %3596 = vmatpush1.bf16.msra.mxu0 %v2421
    %3597 = vmatprep.subr.bf16.mxu0 %v2430
    %3598 = vmatpush1.bf16.msra.mxu0 %v2429
    %3599 = vmatprep.subr.bf16.mxu0 %v2438
    %3600 = vmatpush1.bf16.msra.mxu0 %v2437
    %3601 = vmatprep.subr.bf16.mxu0 %v2446
    %3602 = vmatpush1.bf16.msra.mxu0 %v2445
    %3603 = vmatprep.subr.bf16.mxu0 %v2454
    %3604 = vmatpush1.bf16.msra.mxu0 %v2453
    %3605 = vmatprep.subr.bf16.mxu0 %v2462
    %3606 = vmatpush1.bf16.msra.mxu0 %v2461
    %3607 = vmatprep.subr.bf16.mxu0 %v2470
    %3608 = vmatpush1.bf16.msra.mxu0 %v2469
    %3609 = vmatprep.subr.bf16.mxu0 %v2478
    %3610 = vmatpush1.bf16.msra.mxu0 %v2477
    %3611 = vmatprep.subr.bf16.mxu0 %v2486
    %3612 = vmatpush1.bf16.msra.mxu0 %v2485
    %3613 = vmatprep.subr.bf16.mxu0 %v2494
    %3614 = vmatpush1.bf16.msra.mxu0 %v2493
    %3615 = vmatprep.subr.bf16.mxu0 %v2502
    %3616 = vmatpush1.bf16.msra.mxu0 %v2501
    %3617 = vmatprep.subr.bf16.mxu0 %v2510
    %3618 = vmatpush1.bf16.msra.mxu0 %v2509
    %3619 = vmatprep.subr.bf16.mxu0 %v2518
    %3620 = vmatpush1.bf16.msra.mxu0 %v2517
    %3621 = vmatprep.subr.bf16.mxu0 %v2526
    %3622 = vmatpush1.bf16.msra.mxu0 %v2525
    %3623 = vmatprep.subr.bf16.mxu0 %v2534
    %3624 = vmatpush1.bf16.msra.mxu0 %v2533
    %3625 = vmatprep.subr.bf16.mxu0 %v2542
    %3626 = vmatpush1.bf16.msra.mxu0 %v2541
    %3627 = vmatprep.mubr.bf16.mxu0 %v68
    %3628 = vmatmul.mubr.bf16.gmra.mrb[0].mxu0 %v67
    %v3629 = vpop.f32.mrb[0].mxu0
    %v3630 = vadd.f32 %v3589, %v3629
    %v3631 = vpop.f32.mrb[0].mxu0
    %v3632 = vadd.f32 %v3591, %v3631
    %v3633 = vpop.f32.mrb[0].mxu0
    %v3634 = vpop.f32.mrb[0].mxu0
    %3635 = vdwg.mxu0
    %3636 = vmatprep.subr.bf16.mxu0 %v2550
    %3637 = vmatpush1.bf16.msra.mxu0 %v2549
    %3638 = vmatprep.subr.bf16.mxu0 %v2558
    %3639 = vmatpush1.bf16.msra.mxu0 %v2557
    %3640 = vmatprep.subr.bf16.mxu0 %v2566
    %3641 = vmatpush1.bf16.msra.mxu0 %v2565
    %3642 = vmatprep.subr.bf16.mxu0 %v2574
    %3643 = vmatpush1.bf16.msra.mxu0 %v2573
    %3644 = vmatprep.subr.bf16.mxu0 %v2582
    %3645 = vmatpush1.bf16.msra.mxu0 %v2581
    %3646 = vmatprep.subr.bf16.mxu0 %v2590
    %3647 = vmatpush1.bf16.msra.mxu0 %v2589
    %3648 = vmatprep.subr.bf16.mxu0 %v2598
    %3649 = vmatpush1.bf16.msra.mxu0 %v2597
    %3650 = vmatprep.subr.bf16.mxu0 %v2606
    %3651 = vmatpush1.bf16.msra.mxu0 %v2605
    %3652 = vmatprep.subr.bf16.mxu0 %v2614
    %3653 = vmatpush1.bf16.msra.mxu0 %v2613
    %3654 = vmatprep.subr.bf16.mxu0 %v2622
    %3655 = vmatpush1.bf16.msra.mxu0 %v2621
    %3656 = vmatprep.subr.bf16.mxu0 %v2630
    %3657 = vmatpush1.bf16.msra.mxu0 %v2629
    %3658 = vmatprep.subr.bf16.mxu0 %v2638
    %3659 = vmatpush1.bf16.msra.mxu0 %v2637
    %3660 = vmatprep.subr.bf16.mxu0 %v2646
    %3661 = vmatpush1.bf16.msra.mxu0 %v2645
    %3662 = vmatprep.subr.bf16.mxu0 %v2654
    %3663 = vmatpush1.bf16.msra.mxu0 %v2653
    %3664 = vmatprep.subr.bf16.mxu0 %v2662
    %3665 = vmatpush1.bf16.msra.mxu0 %v2661
    %3666 = vmatprep.subr.bf16.mxu0 %v2670
    %3667 = vmatpush1.bf16.msra.mxu0 %v2669
    %3668 = vmatprep.mubr.bf16.mxu0 %v70
    %3669 = vmatmul.mubr.bf16.gmra.mrb[0].mxu0 %v69
    %v3670 = vpop.f32.mrb[0].mxu0
    %v3671 = vadd.f32 %v3630, %v3670
    %v3672 = vpop.f32.mrb[0].mxu0
    %v3673 = vadd.f32 %v3632, %v3672
    %v3674 = vpop.f32.mrb[0].mxu0
    %v3675 = vpop.f32.mrb[0].mxu0
    %3676 = vdwg.mxu0
    %3677 = vmatprep.subr.bf16.mxu0 %v2168
    %3678 = vmatpush1.bf16.msra.mxu0 %v2167
    %3679 = vmatprep.subr.bf16.mxu0 %v2176
    %3680 = vmatpush1.bf16.msra.mxu0 %v2175
    %3681 = vmatprep.subr.bf16.mxu0 %v2184
    %3682 = vmatpush1.bf16.msra.mxu0 %v2183
    %3683 = vmatprep.subr.bf16.mxu0 %v2192
    %3684 = vmatpush1.bf16.msra.mxu0 %v2191
    %3685 = vmatprep.subr.bf16.mxu0 %v2200
    %3686 = vmatpush1.bf16.msra.mxu0 %v2199
    %3687 = vmatprep.subr.bf16.mxu0 %v2208
    %3688 = vmatpush1.bf16.msra.mxu0 %v2207
    %3689 = vmatprep.subr.bf16.mxu0 %v2216
    %3690 = vmatpush1.bf16.msra.mxu0 %v2215
    %3691 = vmatprep.subr.bf16.mxu0 %v2224
    %3692 = vmatpush1.bf16.msra.mxu0 %v2223
    %3693 = vmatprep.subr.bf16.mxu0 %v2232
    %3694 = vmatpush1.bf16.msra.mxu0 %v2231
    %3695 = vmatprep.subr.bf16.mxu0 %v2240
    %3696 = vmatpush1.bf16.msra.mxu0 %v2239
    %3697 = vmatprep.subr.bf16.mxu0 %v2248
    %3698 = vmatpush1.bf16.msra.mxu0 %v2247
    %3699 = vmatprep.subr.bf16.mxu0 %v2256
    %3700 = vmatpush1.bf16.msra.mxu0 %v2255
    %3701 = vmatprep.subr.bf16.mxu0 %v2264
    %3702 = vmatpush1.bf16.msra.mxu0 %v2263
    %3703 = vmatprep.subr.bf16.mxu0 %v2272
    %3704 = vmatpush1.bf16.msra.mxu0 %v2271
    %3705 = vmatprep.subr.bf16.mxu0 %v2280
    %3706 = vmatpush1.bf16.msra.mxu0 %v2279
    %3707 = vmatprep.subr.bf16.mxu0 %v2288
    %3708 = vmatpush1.bf16.msra.mxu0 %v2287
    %3709 = vmatprep.mubr.bf16.mxu0 %v64
    %3710 = vmatmul.mubr.bf16.gmra.mrb[0].mxu0 %v63
    %v3711 = vpop.f32.mrb[0].mxu0
    %v3712 = vadd.f32 %v612, %v3711
    %v3713 = vpop.f32.mrb[0].mxu0
    %v3714 = vadd.f32 %v616, %v3713
    %v3715 = vpop.f32.mrb[0].mxu0
    %v3716 = vpop.f32.mrb[0].mxu0
    %3717 = vdwg.mxu0
    %3718 = vmatprep.subr.bf16.mxu0 %v2296
    %3719 = vmatpush1.bf16.msra.mxu0 %v2295
    %3720 = vmatprep.subr.bf16.mxu0 %v2304
    %3721 = vmatpush1.bf16.msra.mxu0 %v2303
    %3722 = vmatprep.subr.bf16.mxu0 %v2312
    %3723 = vmatpush1.bf16.msra.mxu0 %v2311
    %3724 = vmatprep.subr.bf16.mxu0 %v2320
    %3725 = vmatpush1.bf16.msra.mxu0 %v2319
    %3726 = vmatprep.subr.bf16.mxu0 %v2328
    %3727 = vmatpush1.bf16.msra.mxu0 %v2327
    %3728 = vmatprep.subr.bf16.mxu0 %v2336
    %3729 = vmatpush1.bf16.msra.mxu0 %v2335
    %3730 = vmatprep.subr.bf16.mxu0 %v2344
    %3731 = vmatpush1.bf16.msra.mxu0 %v2343
    %3732 = vmatprep.subr.bf16.mxu0 %v2352
    %3733 = vmatpush1.bf16.msra.mxu0 %v2351
    %3734 = vmatprep.subr.bf16.mxu0 %v2360
    %3735 = vmatpush1.bf16.msra.mxu0 %v2359
    %3736 = vmatprep.subr.bf16.mxu0 %v2368
    %3737 = vmatpush1.bf16.msra.mxu0 %v2367
    %3738 = vmatprep.subr.bf16.mxu0 %v2376
    %3739 = vmatpush1.bf16.msra.mxu0 %v2375
    %3740 = vmatprep.subr.bf16.mxu0 %v2384
    %3741 = vmatpush1.bf16.msra.mxu0 %v2383
    %3742 = vmatprep.subr.bf16.mxu0 %v2392
    %3743 = vmatpush1.bf16.msra.mxu0 %v2391
    %3744 = vmatprep.subr.bf16.mxu0 %v2400
    %3745 = vmatpush1.bf16.msra.mxu0 %v2399
    %3746 = vmatprep.subr.bf16.mxu0 %v2408
    %3747 = vmatpush1.bf16.msra.mxu0 %v2407
    %3748 = vmatprep.subr.bf16.mxu0 %v2416
    %3749 = vmatpush1.bf16.msra.mxu0 %v2415
    %3750 = vmatprep.mubr.bf16.mxu0 %v66
    %3751 = vmatmul.mubr.bf16.gmra.mrb[0].mxu0 %v65
    %v3752 = vpop.f32.mrb[0].mxu0
    %v3753 = vadd.f32 %v3712, %v3752
    %v3754 = vpop.f32.mrb[0].mxu0
    %v3755 = vadd.f32 %v3714, %v3754
    %v3756 = vpop.f32.mrb[0].mxu0
    %v3757 = vpop.f32.mrb[0].mxu0
    %3758 = vdwg.mxu0
    %3759 = vmatprep.subr.bf16.mxu0 %v2424
    %3760 = vmatpush1.bf16.msra.mxu0 %v2423
    %3761 = vmatprep.subr.bf16.mxu0 %v2432
    %3762 = vmatpush1.bf16.msra.mxu0 %v2431
    %3763 = vmatprep.subr.bf16.mxu0 %v2440
    %3764 = vmatpush1.bf16.msra.mxu0 %v2439
    %3765 = vmatprep.subr.bf16.mxu0 %v2448
    %3766 = vmatpush1.bf16.msra.mxu0 %v2447
    %3767 = vmatprep.subr.bf16.mxu0 %v2456
    %3768 = vmatpush1.bf16.msra.mxu0 %v2455
    %3769 = vmatprep.subr.bf16.mxu0 %v2464
    %3770 = vmatpush1.bf16.msra.mxu0 %v2463
    %3771 = vmatprep.subr.bf16.mxu0 %v2472
    %3772 = vmatpush1.bf16.msra.mxu0 %v2471
    %3773 = vmatprep.subr.bf16.mxu0 %v2480
    %3774 = vmatpush1.bf16.msra.mxu0 %v2479
    %3775 = vmatprep.subr.bf16.mxu0 %v2488
    %3776 = vmatpush1.bf16.msra.mxu0 %v2487
    %3777 = vmatprep.subr.bf16.mxu0 %v2496
    %3778 = vmatpush1.bf16.msra.mxu0 %v2495
    %3779 = vmatprep.subr.bf16.mxu0 %v2504
    %3780 = vmatpush1.bf16.msra.mxu0 %v2503
    %3781 = vmatprep.subr.bf16.mxu0 %v2512
    %3782 = vmatpush1.bf16.msra.mxu0 %v2511
    %3783 = vmatprep.subr.bf16.mxu0 %v2520
    %3784 = vmatpush1.bf16.msra.mxu0 %v2519
    %3785 = vmatprep.subr.bf16.mxu0 %v2528
    %3786 = vmatpush1.bf16.msra.mxu0 %v2527
    %3787 = vmatprep.subr.bf16.mxu0 %v2536
    %3788 = vmatpush1.bf16.msra.mxu0 %v2535
    %3789 = vmatprep.subr.bf16.mxu0 %v2544
    %3790 = vmatpush1.bf16.msra.mxu0 %v2543
    %3791 = vmatprep.mubr.bf16.mxu0 %v68
    %3792 = vmatmul.mubr.bf16.gmra.mrb[0].mxu0 %v67
    %v3793 = vpop.f32.mrb[0].mxu0
    %v3794 = vadd.f32 %v3753, %v3793
    %v3795 = vpop.f32.mrb[0].mxu0
    %v3796 = vadd.f32 %v3755, %v3795
    %v3797 = vpop.f32.mrb[0].mxu0
    %v3798 = vpop.f32.mrb[0].mxu0
    %3799 = vdwg.mxu0
    %3800 = vmatprep.subr.bf16.mxu0 %v2552
    %3801 = vmatpush1.bf16.msra.mxu0 %v2551
    %3802 = vmatprep.subr.bf16.mxu0 %v2560
    %3803 = vmatpush1.bf16.msra.mxu0 %v2559
    %3804 = vmatprep.subr.bf16.mxu0 %v2568
    %3805 = vmatpush1.bf16.msra.mxu0 %v2567
    %3806 = vmatprep.subr.bf16.mxu0 %v2576
    %3807 = vmatpush1.bf16.msra.mxu0 %v2575
    %3808 = vmatprep.subr.bf16.mxu0 %v2584
    %3809 = vmatpush1.bf16.msra.mxu0 %v2583
    %3810 = vmatprep.subr.bf16.mxu0 %v2592
    %3811 = vmatpush1.bf16.msra.mxu0 %v2591
    %3812 = vmatprep.subr.bf16.mxu0 %v2600
    %3813 = vmatpush1.bf16.msra.mxu0 %v2599
    %3814 = vmatprep.subr.bf16.mxu0 %v2608
    %3815 = vmatpush1.bf16.msra.mxu0 %v2607
    %3816 = vmatprep.subr.bf16.mxu0 %v2616
    %3817 = vmatpush1.bf16.msra.mxu0 %v2615
    %3818 = vmatprep.subr.bf16.mxu0 %v2624
    %3819 = vmatpush1.bf16.msra.mxu0 %v2623
    %3820 = vmatprep.subr.bf16.mxu0 %v2632
    %3821 = vmatpush1.bf16.msra.mxu0 %v2631
    %3822 = vmatprep.subr.bf16.mxu0 %v2640
    %3823 = vmatpush1.bf16.msra.mxu0 %v2639
    %3824 = vmatprep.subr.bf16.mxu0 %v2648
    %3825 = vmatpush1.bf16.msra.mxu0 %v2647
    %3826 = vmatprep.subr.bf16.mxu0 %v2656
    %3827 = vmatpush1.bf16.msra.mxu0 %v2655
    %3828 = vmatprep.subr.bf16.mxu0 %v2664
    %3829 = vmatpush1.bf16.msra.mxu0 %v2663
    %3830 = vmatprep.subr.bf16.mxu0 %v2672
    %3831 = vmatpush1.bf16.msra.mxu0 %v2671
    %3832 = vmatprep.mubr.bf16.mxu0 %v70
    %3833 = vmatmul.mubr.bf16.gmra.mrb[0].mxu0 %v69
    %v3834 = vpop.f32.mrb[0].mxu0
    %v3835 = vadd.f32 %v3794, %v3834
    %v3836 = vpop.f32.mrb[0].mxu0
    %v3837 = vadd.f32 %v3796, %v3836
    %v3838 = vpop.f32.mrb[0].mxu0
    %v3839 = vpop.f32.mrb[0].mxu0
    %3840 = vdwg.mxu0
    %v3841 = vmax.f32 %v3343, 0.0
    %v3842 = vmax.f32 %v3345, 0.0
    %v3843 = vmax.f32 %v3507, 0.0
    %v3844 = vmax.f32 %v3509, 0.0
    %v3845 = vmax.f32 %v3671, 0.0
    %v3846 = vmax.f32 %v3673, 0.0
    %v3847 = vmax.f32 %v3835, 0.0
    %v3848 = vmax.f32 %v3837, 0.0
    %v3849 = vadd.f32 %v3841, %v3842
    %v3850 = vadd.f32 %v3849, %v3843
    %v3851 = vadd.f32 %v3850, %v3844
    %v3852 = vadd.f32 %v3851, %v3845
    %v3853 = vadd.f32 %v3852, %v3846
    %v3854 = vadd.f32 %v3853, %v3847
    %v3855 = vadd.f32 %v3854, %v3848
    %3856 = vadd.xlane.f32.xlu0 %v3855
    %v3857 = vpop.xlane.xlu0 %3856
    %v3858 = vmul.f32 %v3857, 0.0009765625
    %v3859 = vsub.f32 %v3841, %v3858
    %v3860 = vsub.f32 %v3842, %v3858
    %v3861 = vsub.f32 %v3843, %v3858
    %v3862 = vsub.f32 %v3844, %v3858
    %v3863 = vsub.f32 %v3845, %v3858
    %v3864 = vsub.f32 %v3846, %v3858
    %v3865 = vsub.f32 %v3847, %v3858
    %v3866 = vsub.f32 %v3848, %v3858
    %v3867 = vmul.f32 %v3859, %v3859
    %v3868 = vmul.f32 %v3860, %v3860
    %v3869 = vmul.f32 %v3861, %v3861
    %v3870 = vmul.f32 %v3862, %v3862
    %v3871 = vmul.f32 %v3863, %v3863
    %v3872 = vmul.f32 %v3864, %v3864
    %v3873 = vmul.f32 %v3865, %v3865
    %v3874 = vmul.f32 %v3866, %v3866
    %v3875 = vadd.f32 %v3867, %v3868
    %v3876 = vadd.f32 %v3875, %v3869
    %v3877 = vadd.f32 %v3876, %v3870
    %v3878 = vadd.f32 %v3877, %v3871
    %v3879 = vadd.f32 %v3878, %v3872
    %v3880 = vadd.f32 %v3879, %v3873
    %v3881 = vadd.f32 %v3880, %v3874
    %3882 = vadd.xlane.f32.xlu0 %v3881
    %v3883 = vpop.xlane.xlu0 %3882
    %v3884 = vmul.f32 %v3883, 0.0009775171
    %v3885 = vrsqrt.pop %v3884
    %v3886 = vmul.f32 %v3884, %v3885
    %vm3887 = vcmp.eq.f32.partialorder %v3884, inf
    %v3888 = vsel %vm3887, %v3884, %v3886
    %vm3889 = vcmp.eq.f32.partialorder %v3884, 0.0
    %v3890 = vand.u32 %v3884, 2147483648
    %v3891 = vsel %vm3889, %v3890, %v3888
    %v3892 = vadd.f32 %v3891, 1e-06
    %v3893 = vrcp.pop %v3892
    %v3894 = vmul.f32 1.0, %v3893
    %s3895 = scalar_lea.vmem [#allocation7], 1
    %v3896 = vld [vmem:[%s3895] ss:$2 sm:$0xff]
    %v3898 = vlaneseq
    %v3899 = vshrl.u32 %v3898, 7
    %v3900 = vsub.s32 0, %v3899
    %v3901 = vrot.slane %v3896, %v3900
    %v3902 = vlaneseq
    %v3903 = vshrl.u32 %v3902, 7
    %v3904 = vsub.s32 1, %v3903
    %v3905 = vrot.slane %v3896, %v3904
    %v3906 = vlaneseq
    %v3907 = vshrl.u32 %v3906, 7
    %v3908 = vsub.s32 2, %v3907
    %v3909 = vrot.slane %v3896, %v3908
    %v3910 = vlaneseq
    %v3911 = vshrl.u32 %v3910, 7
    %v3912 = vsub.s32 3, %v3911
    %v3913 = vrot.slane %v3896, %v3912
    %v3914 = vlaneseq
    %v3915 = vshrl.u32 %v3914, 7
    %v3916 = vsub.s32 4, %v3915
    %v3917 = vrot.slane %v3896, %v3916
    %v3918 = vlaneseq
    %v3919 = vshrl.u32 %v3918, 7
    %v3920 = vsub.s32 5, %v3919
    %v3921 = vrot.slane %v3896, %v3920
    %v3922 = vlaneseq
    %v3923 = vshrl.u32 %v3922, 7
    %v3924 = vsub.s32 6, %v3923
    %v3925 = vrot.slane %v3896, %v3924
    %v3926 = vlaneseq
    %v3927 = vshrl.u32 %v3926, 7
    %v3928 = vsub.s32 7, %v3927
    %v3929 = vrot.slane %v3896, %v3928
    %v3938 = vmul.f32 %v3859, %v3901
    %v3939 = vmul.f32 %v3860, %v3905
    %v3940 = vmul.f32 %v3861, %v3909
    %v3941 = vmul.f32 %v3862, %v3913
    %v3942 = vmul.f32 %v3863, %v3917
    %v3943 = vmul.f32 %v3864, %v3921
    %v3944 = vmul.f32 %v3865, %v3925
    %v3945 = vmul.f32 %v3866, %v3929
    %v3946 = vadd.f32 %v3938, %v3939
    %v3947 = vadd.f32 %v3946, %v3940
    %v3948 = vadd.f32 %v3947, %v3941
    %v3949 = vadd.f32 %v3948, %v3942
    %v3950 = vadd.f32 %v3949, %v3943
    %v3951 = vadd.f32 %v3950, %v3944
    %v3952 = vadd.f32 %v3951, %v3945
    %3953 = vadd.xlane.f32.xlu0 %v3952
    %v3954 = vpop.xlane.xlu0 %3953
    %v3955 = vmul.f32 %v3954, %v3894
    %s3956 = sld [smem:[#allocation2]]
    %v3957 = vstv %s3956
    %v3958 = vadd.f32 %v3955, %v3957
    %v3959 = vxor.u32 %v3958, 2147483648
    %v3960 = vmul.f32 %v3959, 1.442695
    %v3961 = vpow.pop %v3960
    %v3962 = vadd.f32 %v3961, 1.0
    %v3963 = vrcp.pop %v3962
    %v3964 = vmul.f32 1.0, %v3963
    %vm3965 = vcmask 7168
    %3966 = vst.msk [vmem:[%s4] sm:$0xff] %vm3965, %v3964
    // Predicated region
    $region30: #{tpu_custom_call.1} parent=1 // pred_check
      _
    $region31: #{tpu_custom_call.1} parent=1 // pred_check_branch
      %3968 = sbr.rel (0) target = $region33
    $region32: #{tpu_custom_call.1} parent=1 // pred_region
      _
    $region33: #{tpu_custom_call.1} parent=1 // pred_fallthru
      _
    // Predicated region
    $region34: #{tpu_custom_call.1} parent=1 // pred_check
      _
    $region35: #{tpu_custom_call.1} parent=1 // pred_check_branch
      %3970 = sbr.rel (0) target = $region37
    $region36: #{tpu_custom_call.1} parent=1 // pred_region
      _
    $region37: #{tpu_custom_call.1} parent=1 // pred_fallthru
      _
    %3971 = vsyncpa [#allocation4], 1
    %3972 = vsyncpa [#allocation6], 1

</llo_original>
